<compile_context>
chip_gen: v6e
topology: v6e:2x2x1
jax: 0.10.0
libtpu: 0.0.40
codegen_flags: <defaults>
</compile_context>

<pallas_src>
import functools

import jax
import jax.numpy as jnp
from jax.experimental import pallas as pl
from jax.experimental.pallas import tpu as pltpu

BN_EPS = 1e-5


# ----------------------------------------------------------------------------
# Kernel 1: dilated 3x3 conv branch.  Taps formed in VMEM from the reflect-padded
# image tile; 9 accumulating MXU dots; per-image BN partial stats from the f32 acc.
# ----------------------------------------------------------------------------
def _branch_conv_kernel(xp_ref, w_ref, y_ref, sum_ref, ssq_ref, *, h, w, d):
    xp = xp_ref[0]                                   # (H+2d, W+2d, Cin) bf16
    cin = xp.shape[-1]
    cout = w_ref.shape[-1]
    acc = jnp.zeros((h * w, cout), jnp.float32)
    for ky in range(3):
        for kx in range(3):
            tap = xp[ky * d:ky * d + h, kx * d:kx * d + w, :].reshape(h * w, cin)
            acc = acc + jnp.dot(tap, w_ref[3 * ky + kx],
                                preferred_element_type=jnp.float32)
    y_ref[0] = acc.astype(y_ref.dtype)               # bf16 writeback (half the bytes)
    sum_ref[0] = jnp.sum(acc, axis=0, keepdims=True)       # per-image partial
    ssq_ref[0] = jnp.sum(acc * acc, axis=0, keepdims=True)  # per-image partial


def _branch_conv(xp, wk, h, w, d):
    n, hp, wp, cin = xp.shape
    cout = wk.shape[-1]
    kern = functools.partial(_branch_conv_kernel, h=h, w=w, d=d)
    return pl.pallas_call(
        kern,
        grid=(n,),
        in_specs=[
            pl.BlockSpec((1, hp, wp, cin), lambda i: (i, 0, 0, 0)),   # padded image tile
            pl.BlockSpec((9, cin, cout), lambda i: (0, 0, 0)),        # resident weights
        ],
        out_specs=(
            pl.BlockSpec((1, h * w, cout), lambda i: (i, 0, 0)),
            pl.BlockSpec((1, 1, cout), lambda i: (i, 0, 0)),
            pl.BlockSpec((1, 1, cout), lambda i: (i, 0, 0)),
        ),
        out_shape=(
            jax.ShapeDtypeStruct((n, h * w, cout), jnp.bfloat16),
            jax.ShapeDtypeStruct((n, 1, cout), jnp.float32),
            jax.ShapeDtypeStruct((n, 1, cout), jnp.float32),
        ),
        compiler_params=pltpu.CompilerParams(
            dimension_semantics=("parallel",),       # independent per image -> megacore
        ),
    )(xp, wk)


# ----------------------------------------------------------------------------
# Kernel 2: branch1x1 conv with BN1 + shared PReLU fused as a per-channel
# pre-activation on the halo'd tile (applied once, before tap formation).
# ----------------------------------------------------------------------------
def _conv1x1_kernel(hp_ref, w_ref, scale_ref, shift_ref, alpha_ref,
                    y_ref, sum_ref, ssq_ref, *, h, w):
    t = hp_ref[0].astype(jnp.float32)                # (H+2, W+2, C1), f32 elementwise
    t = t * scale_ref[...] + shift_ref[...]          # BN1 affine (per channel)
    t = jnp.where(t > 0, t, alpha_ref[0, 0] * t)     # shared PReLU
    t = t.astype(jnp.bfloat16)                       # bf16 only for the MXU
    c1 = t.shape[-1]
    cout = w_ref.shape[-1]
    acc = jnp.zeros((h * w, cout), jnp.float32)
    for ky in range(3):
        for kx in range(3):
            tap = t[ky:ky + h, kx:kx + w, :].reshape(h * w, c1)
            acc = acc + jnp.dot(tap, w_ref[3 * ky + kx],
                                preferred_element_type=jnp.float32)
    y_ref[0] = acc.astype(y_ref.dtype)
    sum_ref[0] = jnp.sum(acc, axis=0, keepdims=True)
    ssq_ref[0] = jnp.sum(acc * acc, axis=0, keepdims=True)


def _branch1x1_conv(h1p, wk, scale1, shift1, alpha, h, w):
    n, hp, wp, c1 = h1p.shape
    cout = wk.shape[-1]
    kern = functools.partial(_conv1x1_kernel, h=h, w=w)
    return pl.pallas_call(
        kern,
        grid=(n,),
        in_specs=[
            pl.BlockSpec((1, hp, wp, c1), lambda i: (i, 0, 0, 0)),
            pl.BlockSpec((9, c1, cout), lambda i: (0, 0, 0)),
            pl.BlockSpec((1, c1), lambda i: (0, 0)),
            pl.BlockSpec((1, c1), lambda i: (0, 0)),
            pl.BlockSpec((1, 1), lambda i: (0, 0)),
        ],
        out_specs=(
            pl.BlockSpec((1, h * w, cout), lambda i: (i, 0, 0)),
            pl.BlockSpec((1, 1, cout), lambda i: (i, 0, 0)),
            pl.BlockSpec((1, 1, cout), lambda i: (i, 0, 0)),
        ),
        out_shape=(
            jax.ShapeDtypeStruct((n, h * w, cout), jnp.bfloat16),
            jax.ShapeDtypeStruct((n, 1, cout), jnp.float32),
            jax.ShapeDtypeStruct((n, 1, cout), jnp.float32),
        ),
        compiler_params=pltpu.CompilerParams(
            dimension_semantics=("parallel",),
        ),
    )(h1p, wk, scale1, shift1, alpha)


# ----------------------------------------------------------------------------
# Kernel 3: BN2 apply + residual add + shared PReLU (elementwise, per image).
# ----------------------------------------------------------------------------
def _bn_res_prelu_kernel(y_ref, x_ref, scale_ref, shift_ref, alpha_ref, o_ref):
    y = y_ref[0].astype(jnp.float32) * scale_ref[...] + shift_ref[...] + x_ref[0]
    o_ref[0] = jnp.where(y > 0, y, alpha_ref[0, 0] * y)


def _bn_res_prelu(pre2, x_res, scale2, shift2, alpha):
    n, hw, cout = pre2.shape
    cin = x_res.shape[-1]
    return pl.pallas_call(
        _bn_res_prelu_kernel,
        grid=(n,),
        in_specs=[
            pl.BlockSpec((1, hw, cout), lambda i: (i, 0, 0)),
            pl.BlockSpec((1, hw, cin), lambda i: (i, 0, 0)),
            pl.BlockSpec((1, cout), lambda i: (0, 0)),
            pl.BlockSpec((1, cout), lambda i: (0, 0)),
            pl.BlockSpec((1, 1), lambda i: (0, 0)),
        ],
        out_specs=pl.BlockSpec((1, hw, cout), lambda i: (i, 0, 0)),
        out_shape=jax.ShapeDtypeStruct((n, hw, cout), jnp.float32),
        compiler_params=pltpu.CompilerParams(
            dimension_semantics=("parallel",),
        ),
    )(pre2, x_res, scale2, shift2, alpha)


# ----------------------------------------------------------------------------
# Wrapper: reflection padding + weight re-layout in XLA (cheap, ~1x tensor size),
# BN affine folding from the per-image partial statistics.
# ----------------------------------------------------------------------------
def _bn_affine(sum_nc, ssq_nc, count, gamma, beta):
    # Training-mode BatchNorm (biased batch variance) folded into scale/shift.
    s = jnp.sum(sum_nc, axis=(0, 1))                 # reduce per-image partials
    q = jnp.sum(ssq_nc, axis=(0, 1))
    mean = s / count
    var = jnp.maximum(q / count - mean * mean, 0.0)
    scale = gamma * jax.lax.rsqrt(var + BN_EPS)
    shift = beta - mean * scale
    return scale, shift


def inception_block(x_nchw, params, *, width=1):
    n, cin, h, w = x_nchw.shape
    cout = params["w_1x1"].shape[0]
    assert cin == cout, "residual (output + x) requires input_nc == output_nc"
    c1 = cout * width
    m = n * h * w

    x = jnp.transpose(x_nchw, (0, 2, 3, 1)).astype(jnp.float32)    # NCHW -> NHWC
    x_bf = x.astype(jnp.bfloat16)

    # ---- stage A: `width` dilated 3x3 branches, one pallas_call each ------------------
    ys, sums, ssqs = [], [], []
    for i in range(width):
        d = 2 * i + 1
        xp = jnp.pad(x_bf, ((0, 0), (d, d), (d, d), (0, 0)), mode="reflect")
        wk = jnp.transpose(params["w_branch"][i], (2, 3, 1, 0))    # (3,3,Cin,Cout)
        wk = wk.reshape(9, cin, cout).astype(jnp.bfloat16)
        y_i, s_i, q_i = _branch_conv(xp, wk, h, w, d)
        ys.append(y_i); sums.append(s_i); ssqs.append(q_i)
    pre1 = jnp.concatenate(ys, axis=-1)                            # (N, H*W, C1) bf16
    scale1, shift1 = _bn_affine(jnp.concatenate(sums, axis=-1),
                                jnp.concatenate(ssqs, axis=-1),
                                m, params["g1"], params["b1"])

    # ---- stage B: branch1x1 (ReflectionPad2d(1) + 3x3 conv) with fused BN1+PReLU ------
    h1p = jnp.pad(pre1.reshape(n, h, w, c1),
                  ((0, 0), (1, 1), (1, 1), (0, 0)), mode="reflect")
    w2 = jnp.transpose(params["w_1x1"], (2, 3, 1, 0)).reshape(9, c1, cout)
    pre2, s2, q2 = _branch1x1_conv(h1p, w2.astype(jnp.bfloat16),
                                   scale1.reshape(1, c1), shift1.reshape(1, c1),
                                   params["alpha"], h, w)
    scale2, shift2 = _bn_affine(s2, q2, m, params["g2"], params["b2"])

    # ---- final: BN2 + residual + shared PReLU ------------------------------------------
    # TODO(synk): drop_rate > 0 (F.dropout between BN2 and the residual) is not
    #             implemented; the module default drop_rate=0 is assumed.
    x_res = x.reshape(n, h * w, cin)                               # f32 residual, real C
    out = _bn_res_prelu(pre2, x_res, scale2.reshape(1, cout),
                        shift2.reshape(1, cout), params["alpha"])
    return jnp.transpose(out.reshape(n, h, w, cout), (0, 3, 1, 2))  # NHWC -> NCHW


# ----------------------------------------------------------------------------
# Pure-JAX f32 reference (correctness check only).
# ----------------------------------------------------------------------------
def _bn_ref(y, gamma, beta):
    mean = jnp.mean(y, axis=(0, 1, 2), keepdims=True)
    var = jnp.mean((y - mean) ** 2, axis=(0, 1, 2), keepdims=True)
    y = (y - mean) * jax.lax.rsqrt(var + BN_EPS)
    return y * gamma.reshape(1, 1, 1, -1) + beta.reshape(1, 1, 1, -1)


def inception_block_ref(x_nchw, params, *, width=1):
    x = jnp.transpose(x_nchw, (0, 2, 3, 1))
    alpha = params["alpha"][0, 0]
    outs = []
    for i in range(width):
        d = 2 * i + 1
        xp = jnp.pad(x, ((0, 0), (d, d), (d, d), (0, 0)), mode="reflect")
        wk = jnp.transpose(params["w_branch"][i], (2, 3, 1, 0))    # HWIO
        outs.append(jax.lax.conv_general_dilated(
            xp, wk, (1, 1), "VALID", rhs_dilation=(d, d),
            dimension_numbers=("NHWC", "HWIO", "NHWC")))
    y = jnp.concatenate(outs, axis=-1)
    y = _bn_ref(y, params["g1"], params["b1"])
    y = jnp.where(y > 0, y, alpha * y)
    yp = jnp.pad(y, ((0, 0), (1, 1), (1, 1), (0, 0)), mode="reflect")
    w2 = jnp.transpose(params["w_1x1"], (2, 3, 1, 0))
    y = jax.lax.conv_general_dilated(yp, w2, (1, 1), "VALID",
                                     dimension_numbers=("NHWC", "HWIO", "NHWC"))
    y = _bn_ref(y, params["g2"], params["b2"])
    y = y + x
    y = jnp.where(y > 0, y, alpha * y)
    return jnp.transpose(y, (0, 3, 1, 2))


# ----------------------------------------------------------------------------
# Deterministic parameter construction (shapes follow the PyTorch __init__).
# ----------------------------------------------------------------------------
def make_params(key, input_nc, output_nc, width):
    keys = jax.random.split(key, width + 5)
    c1 = output_nc * width
    w_branch = [0.1 * jax.random.normal(keys[i], (output_nc, input_nc, 3, 3), jnp.float32)
                for i in range(width)]
    w_1x1 = 0.1 * jax.random.normal(keys[width], (output_nc, c1, 3, 3), jnp.float32)
    return {
        "w_branch": w_branch,                                       # Conv2d, bias=False
        "w_1x1": w_1x1,                                             # branch1x1 Conv2d
        "g1": 1.0 + 0.1 * jax.random.normal(keys[width + 1], (c1,), jnp.float32),
        "b1": 0.1 * jax.random.normal(keys[width + 2], (c1,), jnp.float32),
        "g2": 1.0 + 0.1 * jax.random.normal(keys[width + 3], (output_nc,), jnp.float32),
        "b2": 0.1 * jax.random.normal(keys[width + 4], (output_nc,), jnp.float32),
        "alpha": jnp.full((1, 1), 0.25, jnp.float32),               # single shared PReLU
    }


if __name__ == "__main__":
    N, C, H, W = 2, 8, 16, 16
    WIDTH = 2                                                       # exercise concat/dilation

    key = jax.random.PRNGKey(0)
    kx, kp = jax.random.split(key)
    x = jax.random.normal(kx, (N, C, H, W), jnp.float32)            # NCHW like PyTorch
    params = make_params(kp, C, C, WIDTH)

    out = jax.block_until_ready(inception_block(x, params, width=WIDTH))
    assert out.shape == (N, C, H, W), out.shape

    ref = jax.block_until_ready(inception_block_ref(x, params, width=WIDTH))
    err = float(jnp.max(jnp.abs(out - ref)))
    # bf16 MXU operands + bf16 intermediate writebacks (f32 accumulation/statistics)
    # -> small numeric drift vs the pure-f32 reference.
    assert err < 1.5e-1, err

    print("KERNEL_OK")
</pallas_src>

<mosaic_0001>
module attributes {stable_mosaic.version = 11 : i64} {
  func.func @_branch_conv_kernel(%arg0: i32, %arg1: memref<1x18x18x8xbf16, #tpu.memory_space<vmem>>, %arg2: memref<9x8x8xbf16, #tpu.memory_space<vmem>>, %arg3: memref<1x256x8xbf16, #tpu.memory_space<vmem>>, %arg4: memref<1x1x8xf32, #tpu.memory_space<vmem>>, %arg5: memref<1x1x8xf32, #tpu.memory_space<vmem>>) attributes {dimension_semantics = [#tpu.dimension_semantics<parallel>], iteration_bounds = array<i64: 2>, scalar_prefetch = 0 : i64, scratch_operands = 0 : i64, tpu.core_type = #tpu.core_type<tc>, window_params = [{transform_indices = @transform_0, window_bounds = array<i64: 1, 18, 18, 8>}, {pipeline_mode = #tpu.pipeline_mode<synchronous>, transform_indices = @transform_1, window_bounds = array<i64: 9, 8, 8>}, {transform_indices = @transform_2, window_bounds = array<i64: 1, 256, 8>}, {transform_indices = @transform_3, window_bounds = array<i64: 1, 1, 8>}, {transform_indices = @transform_4, window_bounds = array<i64: 1, 1, 8>}]} {
    %c0 = arith.constant 0 : index
    %c0_0 = arith.constant 0 : index
    %c0_1 = arith.constant 0 : index
    %c0_2 = arith.constant 0 : index
    %0 = vector.load %arg1[%c0, %c0_0, %c0_1, %c0_2] : memref<1x18x18x8xbf16, #tpu.memory_space<vmem>>, vector<1x18x18x8xbf16>
    %1 = vector.shape_cast %0 : vector<1x18x18x8xbf16> to vector<18x18x8xbf16>
    %cst = arith.constant 0.000000e+00 : f32
    %2 = vector.broadcast %cst : f32 to vector<256x8xf32>
    %3 = vector.extract_strided_slice %1 {offsets = [0, 0, 0], sizes = [16, 16, 8], strides = [1, 1, 1]} : vector<18x18x8xbf16> to vector<16x16x8xbf16>
    %4 = vector.shape_cast %3 : vector<16x16x8xbf16> to vector<256x8xbf16>
    %c0_3 = arith.constant 0 : index
    %c0_4 = arith.constant 0 : index
    %c0_5 = arith.constant 0 : index
    %5 = vector.load %arg2[%c0_3, %c0_4, %c0_5] : memref<9x8x8xbf16, #tpu.memory_space<vmem>>, vector<1x8x8xbf16>
    %6 = vector.shape_cast %5 : vector<1x8x8xbf16> to vector<8x8xbf16>
    %cst_6 = arith.constant dense<0.000000e+00> : vector<256x8xf32>
    %7 = tpu.matmul %4, %6, %cst_6 {dimension_numbers = #tpu.dot_dimension_numbers<[1], [0], [0], [1], [0, 0, 1, 1], [], []>} : vector<256x8xbf16>, vector<8x8xbf16>, vector<256x8xf32> -> vector<256x8xf32>
    %8 = arith.addf %2, %7 : vector<256x8xf32>
    %9 = vector.extract_strided_slice %1 {offsets = [0, 1, 0], sizes = [16, 16, 8], strides = [1, 1, 1]} : vector<18x18x8xbf16> to vector<16x16x8xbf16>
    %10 = vector.shape_cast %9 : vector<16x16x8xbf16> to vector<256x8xbf16>
    %c1 = arith.constant 1 : index
    %c0_7 = arith.constant 0 : index
    %c0_8 = arith.constant 0 : index
    %11 = vector.load %arg2[%c1, %c0_7, %c0_8] : memref<9x8x8xbf16, #tpu.memory_space<vmem>>, vector<1x8x8xbf16>
    %12 = vector.shape_cast %11 : vector<1x8x8xbf16> to vector<8x8xbf16>
    %cst_9 = arith.constant dense<0.000000e+00> : vector<256x8xf32>
    %13 = tpu.matmul %10, %12, %cst_9 {dimension_numbers = #tpu.dot_dimension_numbers<[1], [0], [0], [1], [0, 0, 1, 1], [], []>} : vector<256x8xbf16>, vector<8x8xbf16>, vector<256x8xf32> -> vector<256x8xf32>
    %14 = arith.addf %8, %13 : vector<256x8xf32>
    %15 = vector.extract_strided_slice %1 {offsets = [0, 2, 0], sizes = [16, 16, 8], strides = [1, 1, 1]} : vector<18x18x8xbf16> to vector<16x16x8xbf16>
    %16 = vector.shape_cast %15 : vector<16x16x8xbf16> to vector<256x8xbf16>
    %c2 = arith.constant 2 : index
    %c0_10 = arith.constant 0 : index
    %c0_11 = arith.constant 0 : index
    %17 = vector.load %arg2[%c2, %c0_10, %c0_11] : memref<9x8x8xbf16, #tpu.memory_space<vmem>>, vector<1x8x8xbf16>
    %18 = vector.shape_cast %17 : vector<1x8x8xbf16> to vector<8x8xbf16>
    %cst_12 = arith.constant dense<0.000000e+00> : vector<256x8xf32>
    %19 = tpu.matmul %16, %18, %cst_12 {dimension_numbers = #tpu.dot_dimension_numbers<[1], [0], [0], [1], [0, 0, 1, 1], [], []>} : vector<256x8xbf16>, vector<8x8xbf16>, vector<256x8xf32> -> vector<256x8xf32>
    %20 = arith.addf %14, %19 : vector<256x8xf32>
    %21 = vector.extract_strided_slice %1 {offsets = [1, 0, 0], sizes = [16, 16, 8], strides = [1, 1, 1]} : vector<18x18x8xbf16> to vector<16x16x8xbf16>
    %22 = vector.shape_cast %21 : vector<16x16x8xbf16> to vector<256x8xbf16>
    %c3 = arith.constant 3 : index
    %c0_13 = arith.constant 0 : index
    %c0_14 = arith.constant 0 : index
    %23 = vector.load %arg2[%c3, %c0_13, %c0_14] : memref<9x8x8xbf16, #tpu.memory_space<vmem>>, vector<1x8x8xbf16>
    %24 = vector.shape_cast %23 : vector<1x8x8xbf16> to vector<8x8xbf16>
    %cst_15 = arith.constant dense<0.000000e+00> : vector<256x8xf32>
    %25 = tpu.matmul %22, %24, %cst_15 {dimension_numbers = #tpu.dot_dimension_numbers<[1], [0], [0], [1], [0, 0, 1, 1], [], []>} : vector<256x8xbf16>, vector<8x8xbf16>, vector<256x8xf32> -> vector<256x8xf32>
    %26 = arith.addf %20, %25 : vector<256x8xf32>
    %27 = vector.extract_strided_slice %1 {offsets = [1, 1, 0], sizes = [16, 16, 8], strides = [1, 1, 1]} : vector<18x18x8xbf16> to vector<16x16x8xbf16>
    %28 = vector.shape_cast %27 : vector<16x16x8xbf16> to vector<256x8xbf16>
    %c4 = arith.constant 4 : index
    %c0_16 = arith.constant 0 : index
    %c0_17 = arith.constant 0 : index
    %29 = vector.load %arg2[%c4, %c0_16, %c0_17] : memref<9x8x8xbf16, #tpu.memory_space<vmem>>, vector<1x8x8xbf16>
    %30 = vector.shape_cast %29 : vector<1x8x8xbf16> to vector<8x8xbf16>
    %cst_18 = arith.constant dense<0.000000e+00> : vector<256x8xf32>
    %31 = tpu.matmul %28, %30, %cst_18 {dimension_numbers = #tpu.dot_dimension_numbers<[1], [0], [0], [1], [0, 0, 1, 1], [], []>} : vector<256x8xbf16>, vector<8x8xbf16>, vector<256x8xf32> -> vector<256x8xf32>
    %32 = arith.addf %26, %31 : vector<256x8xf32>
    %33 = vector.extract_strided_slice %1 {offsets = [1, 2, 0], sizes = [16, 16, 8], strides = [1, 1, 1]} : vector<18x18x8xbf16> to vector<16x16x8xbf16>
    %34 = vector.shape_cast %33 : vector<16x16x8xbf16> to vector<256x8xbf16>
    %c5 = arith.constant 5 : index
    %c0_19 = arith.constant 0 : index
    %c0_20 = arith.constant 0 : index
    %35 = vector.load %arg2[%c5, %c0_19, %c0_20] : memref<9x8x8xbf16, #tpu.memory_space<vmem>>, vector<1x8x8xbf16>
    %36 = vector.shape_cast %35 : vector<1x8x8xbf16> to vector<8x8xbf16>
    %cst_21 = arith.constant dense<0.000000e+00> : vector<256x8xf32>
    %37 = tpu.matmul %34, %36, %cst_21 {dimension_numbers = #tpu.dot_dimension_numbers<[1], [0], [0], [1], [0, 0, 1, 1], [], []>} : vector<256x8xbf16>, vector<8x8xbf16>, vector<256x8xf32> -> vector<256x8xf32>
    %38 = arith.addf %32, %37 : vector<256x8xf32>
    %39 = vector.extract_strided_slice %1 {offsets = [2, 0, 0], sizes = [16, 16, 8], strides = [1, 1, 1]} : vector<18x18x8xbf16> to vector<16x16x8xbf16>
    %40 = vector.shape_cast %39 : vector<16x16x8xbf16> to vector<256x8xbf16>
    %c6 = arith.constant 6 : index
    %c0_22 = arith.constant 0 : index
    %c0_23 = arith.constant 0 : index
    %41 = vector.load %arg2[%c6, %c0_22, %c0_23] : memref<9x8x8xbf16, #tpu.memory_space<vmem>>, vector<1x8x8xbf16>
    %42 = vector.shape_cast %41 : vector<1x8x8xbf16> to vector<8x8xbf16>
    %cst_24 = arith.constant dense<0.000000e+00> : vector<256x8xf32>
    %43 = tpu.matmul %40, %42, %cst_24 {dimension_numbers = #tpu.dot_dimension_numbers<[1], [0], [0], [1], [0, 0, 1, 1], [], []>} : vector<256x8xbf16>, vector<8x8xbf16>, vector<256x8xf32> -> vector<256x8xf32>
    %44 = arith.addf %38, %43 : vector<256x8xf32>
    %45 = vector.extract_strided_slice %1 {offsets = [2, 1, 0], sizes = [16, 16, 8], strides = [1, 1, 1]} : vector<18x18x8xbf16> to vector<16x16x8xbf16>
    %46 = vector.shape_cast %45 : vector<16x16x8xbf16> to vector<256x8xbf16>
    %c7 = arith.constant 7 : index
    %c0_25 = arith.constant 0 : index
    %c0_26 = arith.constant 0 : index
    %47 = vector.load %arg2[%c7, %c0_25, %c0_26] : memref<9x8x8xbf16, #tpu.memory_space<vmem>>, vector<1x8x8xbf16>
    %48 = vector.shape_cast %47 : vector<1x8x8xbf16> to vector<8x8xbf16>
    %cst_27 = arith.constant dense<0.000000e+00> : vector<256x8xf32>
    %49 = tpu.matmul %46, %48, %cst_27 {dimension_numbers = #tpu.dot_dimension_numbers<[1], [0], [0], [1], [0, 0, 1, 1], [], []>} : vector<256x8xbf16>, vector<8x8xbf16>, vector<256x8xf32> -> vector<256x8xf32>
    %50 = arith.addf %44, %49 : vector<256x8xf32>
    %51 = vector.extract_strided_slice %1 {offsets = [2, 2, 0], sizes = [16, 16, 8], strides = [1, 1, 1]} : vector<18x18x8xbf16> to vector<16x16x8xbf16>
    %52 = vector.shape_cast %51 : vector<16x16x8xbf16> to vector<256x8xbf16>
    %c8 = arith.constant 8 : index
    %c0_28 = arith.constant 0 : index
    %c0_29 = arith.constant 0 : index
    %53 = vector.load %arg2[%c8, %c0_28, %c0_29] : memref<9x8x8xbf16, #tpu.memory_space<vmem>>, vector<1x8x8xbf16>
    %54 = vector.shape_cast %53 : vector<1x8x8xbf16> to vector<8x8xbf16>
    %cst_30 = arith.constant dense<0.000000e+00> : vector<256x8xf32>
    %55 = tpu.matmul %52, %54, %cst_30 {dimension_numbers = #tpu.dot_dimension_numbers<[1], [0], [0], [1], [0, 0, 1, 1], [], []>} : vector<256x8xbf16>, vector<8x8xbf16>, vector<256x8xf32> -> vector<256x8xf32>
    %56 = arith.addf %50, %55 : vector<256x8xf32>
    %57 = arith.truncf %56 : vector<256x8xf32> to vector<256x8xbf16>
    %c0_31 = arith.constant 0 : index
    %c0_32 = arith.constant 0 : index
    %c0_33 = arith.constant 0 : index
    %58 = vector.load %arg3[%c0_31, %c0_32, %c0_33] : memref<1x256x8xbf16, #tpu.memory_space<vmem>>, vector<1x256x8xbf16>
    %59 = vector.shape_cast %58 : vector<1x256x8xbf16> to vector<256x8xbf16>
    %60 = vector.shape_cast %57 : vector<256x8xbf16> to vector<1x256x8xbf16>
    tpu.vector_store %arg3[%c0_31, %c0_32, %c0_33], %60 {strides = array<i32>} : memref<1x256x8xbf16, #tpu.memory_space<vmem>>, vector<1x256x8xbf16>,
    %cst_34 = arith.constant dense<0.000000e+00> : vector<8xf32>
    %61 = vector.multi_reduction <add>, %56, %cst_34 [0] : vector<256x8xf32> to vector<8xf32>
    %62 = vector.shape_cast %61 : vector<8xf32> to vector<1x8xf32>
    %c0_35 = arith.constant 0 : index
    %c0_36 = arith.constant 0 : index
    %c0_37 = arith.constant 0 : index
    %63 = vector.load %arg4[%c0_35, %c0_36, %c0_37] : memref<1x1x8xf32, #tpu.memory_space<vmem>>, vector<1x1x8xf32>
    %64 = vector.shape_cast %63 : vector<1x1x8xf32> to vector<1x8xf32>
    %65 = vector.shape_cast %62 : vector<1x8xf32> to vector<1x1x8xf32>
    tpu.vector_store %arg4[%c0_35, %c0_36, %c0_37], %65 {strides = array<i32>} : memref<1x1x8xf32, #tpu.memory_space<vmem>>, vector<1x1x8xf32>,
    %66 = arith.mulf %56, %56 : vector<256x8xf32>
    %cst_38 = arith.constant dense<0.000000e+00> : vector<8xf32>
    %67 = vector.multi_reduction <add>, %66, %cst_38 [0] : vector<256x8xf32> to vector<8xf32>
    %68 = vector.shape_cast %67 : vector<8xf32> to vector<1x8xf32>
    %c0_39 = arith.constant 0 : index
    %c0_40 = arith.constant 0 : index
    %c0_41 = arith.constant 0 : index
    %69 = vector.load %arg5[%c0_39, %c0_40, %c0_41] : memref<1x1x8xf32, #tpu.memory_space<vmem>>, vector<1x1x8xf32>
    %70 = vector.shape_cast %69 : vector<1x1x8xf32> to vector<1x8xf32>
    %71 = vector.shape_cast %68 : vector<1x8xf32> to vector<1x1x8xf32>
    tpu.vector_store %arg5[%c0_39, %c0_40, %c0_41], %71 {strides = array<i32>} : memref<1x1x8xf32, #tpu.memory_space<vmem>>, vector<1x1x8xf32>,
    return
  }
  func.func @transform_0(%arg0: i32) -> (i32, i32, i32, i32) {
    %c0_i32 = arith.constant 0 : i32
    %c0_i32_0 = arith.constant 0 : i32
    %c0_i32_1 = arith.constant 0 : i32
    %c0_i32_2 = arith.constant 0 : i32
    return %arg0, %c0_i32, %c0_i32_0, %c0_i32_1 : i32, i32, i32, i32
  }
  func.func @transform_1(%arg0: i32) -> (i32, i32, i32) {
    %c0_i32 = arith.constant 0 : i32
    %c0_i32_0 = arith.constant 0 : i32
    %c0_i32_1 = arith.constant 0 : i32
    %c0_i32_2 = arith.constant 0 : i32
    return %c0_i32, %c0_i32_0, %c0_i32_1 : i32, i32, i32
  }
  func.func @transform_2(%arg0: i32) -> (i32, i32, i32) {
    %c0_i32 = arith.constant 0 : i32
    %c0_i32_0 = arith.constant 0 : i32
    %c0_i32_1 = arith.constant 0 : i32
    return %arg0, %c0_i32, %c0_i32_0 : i32, i32, i32
  }
  func.func @transform_3(%arg0: i32) -> (i32, i32, i32) {
    %c0_i32 = arith.constant 0 : i32
    %c0_i32_0 = arith.constant 0 : i32
    %c0_i32_1 = arith.constant 0 : i32
    return %arg0, %c0_i32, %c0_i32_0 : i32, i32, i32
  }
  func.func @transform_4(%arg0: i32) -> (i32, i32, i32) {
    %c0_i32 = arith.constant 0 : i32
    %c0_i32_0 = arith.constant 0 : i32
    %c0_i32_1 = arith.constant 0 : i32
    return %arg0, %c0_i32, %c0_i32_0 : i32, i32, i32
  }
}

</mosaic_0001>

<llo_original>
// kernel: tpu_custom_call.1
$region0: #{tpu_custom_call.1}
  #allocation0 [shape = 'u32[]', space=smem, size = 0x4, offset = 0x4, fixed_abs, tag = 'smem constant byte address 0x4 - core index']
  #allocation1 [shape = 'u32[144,128]{1,0:T(1,128)}', space=vmem, size = 0x12000, scoped, tag = 'internal scratch']
  %s0 = inlined_call_operand.vmem [shape: bf16[2,18,18,8], index: 0, kind: input, shape index: {}]
  %s1 = inlined_call_operand.vmem [shape: bf16[9,8,8], index: 1, kind: input, shape index: {}]
  %s2 = inlined_call_operand.vmem [shape: bf16[2,256,8], index: 2, kind: output, shape index: {0}]
  %s3 = inlined_call_operand.hbm [shape: f32[2,1,8], index: 3, kind: output, shape index: {1}]
  %s4 = inlined_call_operand.hbm [shape: f32[2,1,8], index: 4, kind: output, shape index: {2}]
  %5 = xla_tuple %s2, %s3, %s4
  %s6 = sld [smem:[#allocation0]]
  $region57: #{tpu_custom_call.1} parent=0
    _
  %s8 = ssub.s32 1, %s6
  %s9 = scalar_select 0, %s8, %s6
  $region1: #{tpu_custom_call.1} parent=0
    #allocation2 [shape = 'u8[1024]{0}', space=vmem, size = 0x400, scoped, tag = 'output window, operand 1']
    #allocation3 [shape = 's32[2]{0}', space=sflag, size = 0x8, scoped, tag = 'scoped memory for tpu_custom_call.1']
    #allocation4 [shape = 'u8[1024]{0}', space=vmem, size = 0x400, scoped, tag = 'output window, operand 2']
    #allocation5 [shape = 's32[2]{0}', space=sflag, size = 0x8, scoped, tag = 'scoped memory for tpu_custom_call.1']
    %10 = vsyncpa [#allocation3], 0
    %s11 = scalar_lea.sflag [#allocation3], 1
    %12 = vsyncpa %s11, 0
    %13 = vsyncpa [#allocation5], 0
    %s14 = scalar_lea.sflag [#allocation5], 1
    %15 = vsyncpa %s14, 0
    loop: start=0, step=1, limit=4
    $region2: #{tpu_custom_call.1} parent=1 // loop_pre_header
      _
    $region3: #{tpu_custom_call.1} parent=1 // loop_header
      %s17 = sphi 0, %s21
      %p18 = scmp.ge.s32.totalorder %s17, 4
      %s27 = sphi 0, %s29
      %s30 = sphi 0, %s27
      %s31 = sphi 0, %s30
      %s47 = sphi 0, %s31
      %s51 = sphi 0, %s51
      %s53 = sphi 0, %s51
      %s54 = sphi 0, %s53
      %s68 = sphi 0, %s54
      %s74 = sphi 0, %s76
      %s77 = sphi 0, %s74
      %s78 = sphi 0, %s77
      %s94 = sphi 0, %s78
      %s100 = sphi 0, %s102
      %s103 = sphi 0, %s100
      %s104 = sphi 0, %s103
      %s120 = sphi 0, %s104
      %s126 = sphi 0, %s128
      %s129 = sphi 0, %s126
      %s130 = sphi 0, %s129
      %s146 = sphi 0, %s130
    $region4: #{tpu_custom_call.1} parent=1 // loop_header_branch
      %20 = sbr.rel (%p18) target = $region8
    $region5: #{tpu_custom_call.1} parent=1 // loop_body
      %s22 = ssub.s32 %s17, 1
      %s23 = ssub.s32 %s17, 2
      %s24 = sadd.s32 %s17, 1
      %s25 = ssub.s32 %s17, %s24
      %p26 = scmp.eq.s32.totalorder %s25, 0
      %s28 = sadd.s32 %s27, 1
      %s29 = scalar_select %p26, %s27, %s28
      %p32 = pneg %p26
      %p33 = scmp.eq.s32.totalorder %s17, 1
      %p34 = por %p32, %p33
      %p35 = scmp.ne.s32.totalorder %s27, %s30
      %p36 = scmp.eq.s32.totalorder %s17, 0
      %p37 = por %p35, %p36
      %p38 = scmp.ne.s32.totalorder %s27, %s30
      %p39 = scmp.eq.s32.totalorder %s22, 1
      %p40 = por %p38, %p39
      %p41 = scmp.ne.s32.totalorder %s30, %s31
      %p42 = scmp.eq.s32.totalorder %s22, 0
      %p43 = por %p41, %p42
      %p44 = scmp.ne.s32.totalorder %s30, %s31
      %p45 = scmp.eq.s32.totalorder %s23, 1
      %p46 = por %p44, %p45
      %p48 = scmp.ne.s32.totalorder %s31, %s47
      %p49 = scmp.eq.s32.totalorder %s23, 0
      %p50 = por %p48, %p49
      %s52 = sadd.s32 %s51, 1
      %p55 = scmp.eq.s32.totalorder %s17, 1
      %p56 = scmp.ne.s32.totalorder %s51, %s53
      %p57 = scmp.eq.s32.totalorder %s17, 0
      %p58 = por %p56, %p57
      %p59 = scmp.ne.s32.totalorder %s51, %s53
      %p60 = scmp.eq.s32.totalorder %s22, 1
      %p61 = por %p59, %p60
      %p62 = scmp.ne.s32.totalorder %s53, %s54
      %p63 = scmp.eq.s32.totalorder %s22, 0
      %p64 = por %p62, %p63
      %p65 = scmp.ne.s32.totalorder %s53, %s54
      %p66 = scmp.eq.s32.totalorder %s23, 1
      %p67 = por %p65, %p66
      %p69 = scmp.ne.s32.totalorder %s54, %s68
      %p70 = scmp.eq.s32.totalorder %s23, 0
      %p71 = por %p69, %p70
      %s72 = ssub.s32 %s17, %s24
      %p73 = scmp.eq.s32.totalorder %s72, 0
      %s75 = sadd.s32 %s74, 1
      %s76 = scalar_select %p73, %s74, %s75
      %p79 = pneg %p73
      %p80 = scmp.eq.s32.totalorder %s17, 1
      %p81 = por %p79, %p80
      %p82 = scmp.ne.s32.totalorder %s74, %s77
      %p83 = scmp.eq.s32.totalorder %s17, 0
      %p84 = por %p82, %p83
      %p85 = scmp.ne.s32.totalorder %s74, %s77
      %p86 = scmp.eq.s32.totalorder %s22, 1
      %p87 = por %p85, %p86
      %p88 = scmp.ne.s32.totalorder %s77, %s78
      %p89 = scmp.eq.s32.totalorder %s22, 0
      %p90 = por %p88, %p89
      %p91 = scmp.ne.s32.totalorder %s77, %s78
      %p92 = scmp.eq.s32.totalorder %s23, 1
      %p93 = por %p91, %p92
      %p95 = scmp.ne.s32.totalorder %s78, %s94
      %p96 = scmp.eq.s32.totalorder %s23, 0
      %p97 = por %p95, %p96
      %s98 = ssub.s32 %s17, %s24
      %p99 = scmp.eq.s32.totalorder %s98, 0
      %s101 = sadd.s32 %s100, 1
      %s102 = scalar_select %p99, %s100, %s101
      %p105 = pneg %p99
      %p106 = scmp.eq.s32.totalorder %s17, 1
      %p107 = por %p105, %p106
      %p108 = scmp.ne.s32.totalorder %s100, %s103
      %p109 = scmp.eq.s32.totalorder %s17, 0
      %p110 = por %p108, %p109
      %p111 = scmp.ne.s32.totalorder %s100, %s103
      %p112 = scmp.eq.s32.totalorder %s22, 1
      %p113 = por %p111, %p112
      %p114 = scmp.ne.s32.totalorder %s103, %s104
      %p115 = scmp.eq.s32.totalorder %s22, 0
      %p116 = por %p114, %p115
      %p117 = scmp.ne.s32.totalorder %s103, %s104
      %p118 = scmp.eq.s32.totalorder %s23, 1
      %p119 = por %p117, %p118
      %p121 = scmp.ne.s32.totalorder %s104, %s120
      %p122 = scmp.eq.s32.totalorder %s23, 0
      %p123 = por %p121, %p122
      %s124 = ssub.s32 %s17, %s24
      %p125 = scmp.eq.s32.totalorder %s124, 0
      %s127 = sadd.s32 %s126, 1
      %s128 = scalar_select %p125, %s126, %s127
      %p131 = pneg %p125
      %p132 = scmp.eq.s32.totalorder %s17, 1
      %p133 = por %p131, %p132
      %p134 = scmp.ne.s32.totalorder %s126, %s129
      %p135 = scmp.eq.s32.totalorder %s17, 0
      %p136 = por %p134, %p135
      %p137 = scmp.ne.s32.totalorder %s126, %s129
      %p138 = scmp.eq.s32.totalorder %s22, 1
      %p139 = por %p137, %p138
      %p140 = scmp.ne.s32.totalorder %s129, %s130
      %p141 = scmp.eq.s32.totalorder %s22, 0
      %p142 = por %p140, %p141
      %p143 = scmp.ne.s32.totalorder %s129, %s130
      %p144 = scmp.eq.s32.totalorder %s23, 1
      %p145 = por %p143, %p144
      %p147 = scmp.ne.s32.totalorder %s130, %s146
      %p148 = scmp.eq.s32.totalorder %s23, 0
      %p149 = por %p147, %p148
      %p150 = scmp.le.s32.totalorder 1, %s17
      %p151 = scmp.lt.s32.totalorder %s17, 3
      %p152 = pnand %p150, %p151
      %p153 = pneg %p152
      // Predicated region
      $region9: #{tpu_custom_call.1} parent=5 // pred_check
        _
      $region10: #{tpu_custom_call.1} parent=5 // pred_check_branch
        %155 = sbr.rel (%p152) target = $region12
      $region11: #{tpu_custom_call.1} parent=5 // pred_region
        %s156 = ssub.s32 %s17, 1
        // Predicated region
        $region13: #{tpu_custom_call.1} parent=11 // pred_check
          %p157 = pneg %p64
        $region14: #{tpu_custom_call.1} parent=11 // pred_check_branch
          %159 = sbr.rel (%p157) target = $region16
        $region15: #{tpu_custom_call.1} parent=11 // pred_region
          _
        $region16: #{tpu_custom_call.1} parent=11 // pred_fallthru
          _
      $region12: #{tpu_custom_call.1} parent=5 // pred_fallthru
        _
      %p160 = scmp.lt.s32.totalorder %s17, 2
      // Predicated region
      $region17: #{tpu_custom_call.1} parent=5 // pred_check
        %p161 = pneg %p160
      $region18: #{tpu_custom_call.1} parent=5 // pred_check_branch
        %163 = sbr.rel (%p161) target = $region20
      $region19: #{tpu_custom_call.1} parent=5 // pred_region
        // Predicated region
        $region21: #{tpu_custom_call.1} parent=19 // pred_check
          %p164 = pneg %p37
        $region22: #{tpu_custom_call.1} parent=19 // pred_check_branch
          %166 = sbr.rel (%p164) target = $region24
        $region23: #{tpu_custom_call.1} parent=19 // pred_region
          %p167 = scmp.lt.s32.totalorder %s17, 1
          %s168 = scalar_select %p167, %s17, 1
          %s169 = smul.addr %s168, 54
          %s170 = smul.addr %s169, 4
          %s171 = scalar_lea.vmem %s0, %s170
        $region24: #{tpu_custom_call.1} parent=19 // pred_fallthru
          _
      $region20: #{tpu_custom_call.1} parent=5 // pred_fallthru
        _
      %p172 = scmp.le.s32.totalorder 1, %s17
      %p173 = scmp.lt.s32.totalorder %s17, 3
      %p174 = pnand %p172, %p173
      %p175 = pneg %p174
      // Predicated region
      $region25: #{tpu_custom_call.1} parent=5 // pred_check
        _
      $region26: #{tpu_custom_call.1} parent=5 // pred_check_branch
        %177 = sbr.rel (%p174) target = $region28
      $region27: #{tpu_custom_call.1} parent=5 // pred_region
        %s178 = ssub.s32 %s17, 1
        %p179 = scmp.lt.s32.totalorder %s22, 1
        %s180 = scalar_select %p179, %s22, 1
        %s181 = smul.addr %s180, 54
        %s182 = smul.addr %s181, 4
        %s183 = scalar_lea.vmem %s0, %s182
        %p184 = pneg %p43
        %p185 = pneg %p40
        %p186 = pneg %p64
        %p187 = pneg %p61
        %p188 = pneg %p90
        %p189 = pneg %p87
        %p190 = scmp.lt.s32.totalorder %s22, 1
        %s191 = scalar_select %p190, %s22, 1
        %s192 = smul.addr %s191, 32
        %s193 = smul.addr %s192, 4
        %s194 = scalar_lea.vmem %s2, %s193
        %p195 = pneg %p116
        %p196 = pneg %p113
        %s197 = sand.u32 %s103, 1
        %s198 = scalar_lea.sflag [#allocation3], %s197
        %s199 = sand.u32 %s103, 1
        %s200 = scalar_lea.vmem [#allocation2], %s199
        %p201 = pneg %p142
        %p202 = pneg %p139
        %s203 = sand.u32 %s129, 1
        %s204 = scalar_lea.sflag [#allocation5], %s203
        %s205 = sand.u32 %s129, 1
        %s206 = scalar_lea.vmem [#allocation4], %s205
        %p207 = scmp.lt.s32.totalorder %s22, 1
        %s208 = scalar_select %p207, %s22, 1
        %s209 = smul.addr %s208, 54
        %s210 = smul.addr %s209, 4
        %s211 = scalar_lea.vmem %s0, %s210
        %p212 = scmp.lt.s32.totalorder %s22, 1
        %s213 = scalar_select %p212, %s22, 1
        %s214 = smul.addr %s213, 32
        %s215 = smul.addr %s214, 4
        %s216 = scalar_lea.vmem %s2, %s215
        %v218 = vld [vmem:[%s211] sm:$0xf]
        %v219 = vld [vmem:[%s211 + $0x4] sm:$0xf]
        %v220 = vld [vmem:[%s211 + $0x8] sm:$0x1]
        %v221 = vld [vmem:[%s211 + $0xc] sm:$0xf]
        %v222 = vld [vmem:[%s211 + $0x10] sm:$0xf]
        %v223 = vld [vmem:[%s211 + $0x14] sm:$0x1]
        %v224 = vld [vmem:[%s211 + $0x18] sm:$0xf]
        %v225 = vld [vmem:[%s211 + $0x1c] sm:$0xf]
        %v226 = vld [vmem:[%s211 + $0x20] sm:$0x1]
        %v227 = vld [vmem:[%s211 + $0x24] sm:$0xf]
        %v228 = vld [vmem:[%s211 + $0x28] sm:$0xf]
        %v229 = vld [vmem:[%s211 + $0x2c] sm:$0x1]
        %v230 = vld [vmem:[%s211 + $0x30] sm:$0xf]
        %v231 = vld [vmem:[%s211 + $0x34] sm:$0xf]
        %v232 = vld [vmem:[%s211 + $0x38] sm:$0x1]
        %v233 = vld [vmem:[%s211 + $0x3c] sm:$0xf]
        %v234 = vld [vmem:[%s211 + $0x40] sm:$0xf]
        %v235 = vld [vmem:[%s211 + $0x44] sm:$0x1]
        %v236 = vld [vmem:[%s211 + $0x48] sm:$0xf]
        %v237 = vld [vmem:[%s211 + $0x4c] sm:$0xf]
        %v238 = vld [vmem:[%s211 + $0x50] sm:$0x1]
        %v239 = vld [vmem:[%s211 + $0x54] sm:$0xf]
        %v240 = vld [vmem:[%s211 + $0x58] sm:$0xf]
        %v241 = vld [vmem:[%s211 + $0x5c] sm:$0x1]
        %v242 = vld [vmem:[%s211 + $0x60] sm:$0xf]
        %v243 = vld [vmem:[%s211 + $0x64] sm:$0xf]
        %v244 = vld [vmem:[%s211 + $0x68] sm:$0x1]
        %v245 = vld [vmem:[%s211 + $0x6c] sm:$0xf]
        %v246 = vld [vmem:[%s211 + $0x70] sm:$0xf]
        %v247 = vld [vmem:[%s211 + $0x74] sm:$0x1]
        %v248 = vld [vmem:[%s211 + $0x78] sm:$0xf]
        %v249 = vld [vmem:[%s211 + $0x7c] sm:$0xf]
        %v250 = vld [vmem:[%s211 + $0x80] sm:$0x1]
        %v251 = vld [vmem:[%s211 + $0x84] sm:$0xf]
        %v252 = vld [vmem:[%s211 + $0x88] sm:$0xf]
        %v253 = vld [vmem:[%s211 + $0x8c] sm:$0x1]
        %v254 = vld [vmem:[%s211 + $0x90] sm:$0xf]
        %v255 = vld [vmem:[%s211 + $0x94] sm:$0xf]
        %v256 = vld [vmem:[%s211 + $0x98] sm:$0x1]
        %v257 = vld [vmem:[%s211 + $0x9c] sm:$0xf]
        %v258 = vld [vmem:[%s211 + $0xa0] sm:$0xf]
        %v259 = vld [vmem:[%s211 + $0xa4] sm:$0x1]
        %v260 = vld [vmem:[%s211 + $0xa8] sm:$0xf]
        %v261 = vld [vmem:[%s211 + $0xac] sm:$0xf]
        %v262 = vld [vmem:[%s211 + $0xb0] sm:$0x1]
        %v263 = vld [vmem:[%s211 + $0xb4] sm:$0xf]
        %v264 = vld [vmem:[%s211 + $0xb8] sm:$0xf]
        %v265 = vld [vmem:[%s211 + $0xbc] sm:$0x1]
        %v266 = vld [vmem:[%s211 + $0xc0] sm:$0xf]
        %v267 = vld [vmem:[%s211 + $0xc4] sm:$0xf]
        %v268 = vld [vmem:[%s211 + $0xc8] sm:$0x1]
        %v269 = vld [vmem:[%s211 + $0xcc] sm:$0xf]
        %v270 = vld [vmem:[%s211 + $0xd0] sm:$0xf]
        %v271 = vld [vmem:[%s211 + $0xd4] sm:$0x1]
        %v272 = vld [vmem:[%s1] sm:$0xf]
        %vm273 = vsmask.f32 3328
        %vm274 = vsmask.f32 7440
        %vm275 = vmor %vm273, %vm274
        %v277 = vshrl.u32 %v218, 16
        %v279 = vrot.slane %v277, 4
        %v280 = vshll.u32 %v218, 16
        %v282 = vrot.slane %v280, 5
        %v283 = vor.u32 %v279, %v282
        %v284 = vrot.slane %v283, 4
        %v286 = vshll.u32 %v219, 16
        %v288 = vrot.slane %v286, 5
        %v289 = vsel %vm275, %v284, %v288
        %v290 = vshrl.u32 %v219, 16
        %v292 = vrot.slane %v290, 4
        %v293 = vor.u32 %v292, %v288
        %v294 = vrot.slane %v293, 4
        %v296 = vshll.u32 %v220, 16
        %v298 = vrot.slane %v296, 5
        %v299 = vsel %vm275, %v294, %v298
        %v301 = vshrl.u32 %v221, 16
        %v303 = vrot.slane %v301, 4
        %v304 = vshll.u32 %v221, 16
        %v306 = vrot.slane %v304, 5
        %v307 = vor.u32 %v303, %v306
        %v308 = vrot.slane %v307, 4
        %v310 = vshll.u32 %v222, 16
        %v312 = vrot.slane %v310, 5
        %v313 = vsel %vm275, %v308, %v312
        %v314 = vshrl.u32 %v222, 16
        %v316 = vrot.slane %v314, 4
        %v317 = vor.u32 %v316, %v312
        %v318 = vrot.slane %v317, 4
        %v320 = vshll.u32 %v223, 16
        %v322 = vrot.slane %v320, 5
        %v323 = vsel %vm275, %v318, %v322
        %v325 = vshrl.u32 %v224, 16
        %v327 = vrot.slane %v325, 4
        %v328 = vshll.u32 %v224, 16
        %v330 = vrot.slane %v328, 5
        %v331 = vor.u32 %v327, %v330
        %v332 = vrot.slane %v331, 4
        %v334 = vshll.u32 %v225, 16
        %v336 = vrot.slane %v334, 5
        %v337 = vsel %vm275, %v332, %v336
        %v338 = vshrl.u32 %v225, 16
        %v340 = vrot.slane %v338, 4
        %v341 = vor.u32 %v340, %v336
        %v342 = vrot.slane %v341, 4
        %v344 = vshll.u32 %v226, 16
        %v346 = vrot.slane %v344, 5
        %v347 = vsel %vm275, %v342, %v346
        %v349 = vshrl.u32 %v227, 16
        %v351 = vrot.slane %v349, 4
        %v352 = vshll.u32 %v227, 16
        %v354 = vrot.slane %v352, 5
        %v355 = vor.u32 %v351, %v354
        %v356 = vrot.slane %v355, 4
        %v358 = vshll.u32 %v228, 16
        %v360 = vrot.slane %v358, 5
        %v361 = vsel %vm275, %v356, %v360
        %v362 = vshrl.u32 %v228, 16
        %v364 = vrot.slane %v362, 4
        %v365 = vor.u32 %v364, %v360
        %v366 = vrot.slane %v365, 4
        %v368 = vshll.u32 %v229, 16
        %v370 = vrot.slane %v368, 5
        %v371 = vsel %vm275, %v366, %v370
        %v373 = vshrl.u32 %v230, 16
        %v375 = vrot.slane %v373, 4
        %v376 = vshll.u32 %v230, 16
        %v378 = vrot.slane %v376, 5
        %v379 = vor.u32 %v375, %v378
        %v380 = vrot.slane %v379, 4
        %v382 = vshll.u32 %v231, 16
        %v384 = vrot.slane %v382, 5
        %v385 = vsel %vm275, %v380, %v384
        %v386 = vshrl.u32 %v231, 16
        %v388 = vrot.slane %v386, 4
        %v389 = vor.u32 %v388, %v384
        %v390 = vrot.slane %v389, 4
        %v392 = vshll.u32 %v232, 16
        %v394 = vrot.slane %v392, 5
        %v395 = vsel %vm275, %v390, %v394
        %v397 = vshrl.u32 %v233, 16
        %v399 = vrot.slane %v397, 4
        %v400 = vshll.u32 %v233, 16
        %v402 = vrot.slane %v400, 5
        %v403 = vor.u32 %v399, %v402
        %v404 = vrot.slane %v403, 4
        %v406 = vshll.u32 %v234, 16
        %v408 = vrot.slane %v406, 5
        %v409 = vsel %vm275, %v404, %v408
        %v410 = vshrl.u32 %v234, 16
        %v412 = vrot.slane %v410, 4
        %v413 = vor.u32 %v412, %v408
        %v414 = vrot.slane %v413, 4
        %v416 = vshll.u32 %v235, 16
        %v418 = vrot.slane %v416, 5
        %v419 = vsel %vm275, %v414, %v418
        %v421 = vshrl.u32 %v236, 16
        %v423 = vrot.slane %v421, 4
        %v424 = vshll.u32 %v236, 16
        %v426 = vrot.slane %v424, 5
        %v427 = vor.u32 %v423, %v426
        %v428 = vrot.slane %v427, 4
        %v430 = vshll.u32 %v237, 16
        %v432 = vrot.slane %v430, 5
        %v433 = vsel %vm275, %v428, %v432
        %v434 = vshrl.u32 %v237, 16
        %v436 = vrot.slane %v434, 4
        %v437 = vor.u32 %v436, %v432
        %v438 = vrot.slane %v437, 4
        %v440 = vshll.u32 %v238, 16
        %v442 = vrot.slane %v440, 5
        %v443 = vsel %vm275, %v438, %v442
        %v445 = vshrl.u32 %v239, 16
        %v447 = vrot.slane %v445, 4
        %v448 = vshll.u32 %v239, 16
        %v450 = vrot.slane %v448, 5
        %v451 = vor.u32 %v447, %v450
        %v452 = vrot.slane %v451, 4
        %v454 = vshll.u32 %v240, 16
        %v456 = vrot.slane %v454, 5
        %v457 = vsel %vm275, %v452, %v456
        %v458 = vshrl.u32 %v240, 16
        %v460 = vrot.slane %v458, 4
        %v461 = vor.u32 %v460, %v456
        %v462 = vrot.slane %v461, 4
        %v464 = vshll.u32 %v241, 16
        %v466 = vrot.slane %v464, 5
        %v467 = vsel %vm275, %v462, %v466
        %v469 = vshrl.u32 %v242, 16
        %v471 = vrot.slane %v469, 4
        %v472 = vshll.u32 %v242, 16
        %v474 = vrot.slane %v472, 5
        %v475 = vor.u32 %v471, %v474
        %v476 = vrot.slane %v475, 4
        %v478 = vshll.u32 %v243, 16
        %v480 = vrot.slane %v478, 5
        %v481 = vsel %vm275, %v476, %v480
        %v482 = vshrl.u32 %v243, 16
        %v484 = vrot.slane %v482, 4
        %v485 = vor.u32 %v484, %v480
        %v486 = vrot.slane %v485, 4
        %v488 = vshll.u32 %v244, 16
        %v490 = vrot.slane %v488, 5
        %v491 = vsel %vm275, %v486, %v490
        %v493 = vshrl.u32 %v245, 16
        %v495 = vrot.slane %v493, 4
        %v496 = vshll.u32 %v245, 16
        %v498 = vrot.slane %v496, 5
        %v499 = vor.u32 %v495, %v498
        %v500 = vrot.slane %v499, 4
        %v502 = vshll.u32 %v246, 16
        %v504 = vrot.slane %v502, 5
        %v505 = vsel %vm275, %v500, %v504
        %v506 = vshrl.u32 %v246, 16
        %v508 = vrot.slane %v506, 4
        %v509 = vor.u32 %v508, %v504
        %v510 = vrot.slane %v509, 4
        %v512 = vshll.u32 %v247, 16
        %v514 = vrot.slane %v512, 5
        %v515 = vsel %vm275, %v510, %v514
        %v517 = vshrl.u32 %v248, 16
        %v519 = vrot.slane %v517, 4
        %v520 = vshll.u32 %v248, 16
        %v522 = vrot.slane %v520, 5
        %v523 = vor.u32 %v519, %v522
        %v524 = vrot.slane %v523, 4
        %v526 = vshll.u32 %v249, 16
        %v528 = vrot.slane %v526, 5
        %v529 = vsel %vm275, %v524, %v528
        %v530 = vshrl.u32 %v249, 16
        %v532 = vrot.slane %v530, 4
        %v533 = vor.u32 %v532, %v528
        %v534 = vrot.slane %v533, 4
        %v536 = vshll.u32 %v250, 16
        %v538 = vrot.slane %v536, 5
        %v539 = vsel %vm275, %v534, %v538
        %v541 = vshrl.u32 %v251, 16
        %v543 = vrot.slane %v541, 4
        %v544 = vshll.u32 %v251, 16
        %v546 = vrot.slane %v544, 5
        %v547 = vor.u32 %v543, %v546
        %v548 = vrot.slane %v547, 4
        %v550 = vshll.u32 %v252, 16
        %v552 = vrot.slane %v550, 5
        %v553 = vsel %vm275, %v548, %v552
        %v554 = vshrl.u32 %v252, 16
        %v556 = vrot.slane %v554, 4
        %v557 = vor.u32 %v556, %v552
        %v558 = vrot.slane %v557, 4
        %v560 = vshll.u32 %v253, 16
        %v562 = vrot.slane %v560, 5
        %v563 = vsel %vm275, %v558, %v562
        %v565 = vshrl.u32 %v254, 16
        %v567 = vrot.slane %v565, 4
        %v568 = vshll.u32 %v254, 16
        %v570 = vrot.slane %v568, 5
        %v571 = vor.u32 %v567, %v570
        %v572 = vrot.slane %v571, 4
        %v574 = vshll.u32 %v255, 16
        %v576 = vrot.slane %v574, 5
        %v577 = vsel %vm275, %v572, %v576
        %v578 = vshrl.u32 %v255, 16
        %v580 = vrot.slane %v578, 4
        %v581 = vor.u32 %v580, %v576
        %v582 = vrot.slane %v581, 4
        %v584 = vshll.u32 %v256, 16
        %v586 = vrot.slane %v584, 5
        %v587 = vsel %vm275, %v582, %v586
        %v589 = vshrl.u32 %v257, 16
        %v591 = vrot.slane %v589, 4
        %v592 = vshll.u32 %v257, 16
        %v594 = vrot.slane %v592, 5
        %v595 = vor.u32 %v591, %v594
        %v596 = vrot.slane %v595, 4
        %v598 = vshll.u32 %v258, 16
        %v600 = vrot.slane %v598, 5
        %v601 = vsel %vm275, %v596, %v600
        %v602 = vshrl.u32 %v258, 16
        %v604 = vrot.slane %v602, 4
        %v605 = vor.u32 %v604, %v600
        %v606 = vrot.slane %v605, 4
        %v608 = vshll.u32 %v259, 16
        %v610 = vrot.slane %v608, 5
        %v611 = vsel %vm275, %v606, %v610
        %v613 = vshrl.u32 %v260, 16
        %v615 = vrot.slane %v613, 4
        %v616 = vshll.u32 %v260, 16
        %v618 = vrot.slane %v616, 5
        %v619 = vor.u32 %v615, %v618
        %v620 = vrot.slane %v619, 4
        %v622 = vshll.u32 %v261, 16
        %v624 = vrot.slane %v622, 5
        %v625 = vsel %vm275, %v620, %v624
        %v626 = vshrl.u32 %v261, 16
        %v628 = vrot.slane %v626, 4
        %v629 = vor.u32 %v628, %v624
        %v630 = vrot.slane %v629, 4
        %v632 = vshll.u32 %v262, 16
        %v634 = vrot.slane %v632, 5
        %v635 = vsel %vm275, %v630, %v634
        %v637 = vshrl.u32 %v263, 16
        %v639 = vrot.slane %v637, 4
        %v640 = vshll.u32 %v263, 16
        %v642 = vrot.slane %v640, 5
        %v643 = vor.u32 %v639, %v642
        %v644 = vrot.slane %v643, 4
        %v646 = vshll.u32 %v264, 16
        %v648 = vrot.slane %v646, 5
        %v649 = vsel %vm275, %v644, %v648
        %v650 = vshrl.u32 %v264, 16
        %v652 = vrot.slane %v650, 4
        %v653 = vor.u32 %v652, %v648
        %v654 = vrot.slane %v653, 4
        %v656 = vshll.u32 %v265, 16
        %v658 = vrot.slane %v656, 5
        %v659 = vsel %vm275, %v654, %v658
        %s660 = scalar_lea.vmem %s1, 4
        %v661 = vld [vmem:[%s660] sm:$0xf]
        %v662 = vunpack.c.l.b16 %v289
        %v663 = vunpack.c.l.b16 %v299
        %v664 = vunpack.c.l.b16 %v313
        %v665 = vunpack.c.l.b16 %v323
        %v666 = vunpack.c.l.b16 %v337
        %v667 = vunpack.c.l.b16 %v347
        %v668 = vunpack.c.l.b16 %v361
        %v669 = vunpack.c.l.b16 %v371
        %v670 = vunpack.c.l.b16 %v385
        %v671 = vunpack.c.l.b16 %v395
        %v672 = vunpack.c.l.b16 %v409
        %v673 = vunpack.c.l.b16 %v419
        %v674 = vunpack.c.l.b16 %v433
        %v675 = vunpack.c.l.b16 %v443
        %v676 = vunpack.c.l.b16 %v457
        %v677 = vunpack.c.l.b16 %v467
        %v678 = vunpack.c.l.b16 %v481
        %v679 = vunpack.c.l.b16 %v491
        %v680 = vunpack.c.l.b16 %v505
        %v681 = vunpack.c.l.b16 %v515
        %v682 = vunpack.c.l.b16 %v529
        %v683 = vunpack.c.l.b16 %v539
        %v684 = vunpack.c.l.b16 %v553
        %v685 = vunpack.c.l.b16 %v563
        %v686 = vunpack.c.l.b16 %v577
        %v687 = vunpack.c.l.b16 %v587
        %v688 = vunpack.c.l.b16 %v601
        %v689 = vunpack.c.l.b16 %v611
        %v690 = vunpack.c.l.b16 %v625
        %v691 = vunpack.c.l.b16 %v635
        %v692 = vunpack.c.l.b16 %v649
        %v693 = vunpack.c.l.b16 %v659
        %v694 = vpack.c.b16 %v663, %v662
        %v695 = vpack.c.b16 %v665, %v664
        %v696 = vpack.c.b16 %v667, %v666
        %v697 = vpack.c.b16 %v669, %v668
        %v698 = vpack.c.b16 %v671, %v670
        %v699 = vpack.c.b16 %v673, %v672
        %v700 = vpack.c.b16 %v675, %v674
        %v701 = vpack.c.b16 %v677, %v676
        %v702 = vpack.c.b16 %v679, %v678
        %v703 = vpack.c.b16 %v681, %v680
        %v704 = vpack.c.b16 %v683, %v682
        %v705 = vpack.c.b16 %v685, %v684
        %v706 = vpack.c.b16 %v687, %v686
        %v707 = vpack.c.b16 %v689, %v688
        %v708 = vpack.c.b16 %v691, %v690
        %v709 = vpack.c.b16 %v693, %v692
        %vm710 = vcmask 64512
        %v712 = vsel %vm710, %v694, 0
        %v715 = vsel %vm710, %v695, 0
        %v718 = vsel %vm710, %v696, 0
        %v721 = vsel %vm710, %v697, 0
        %v724 = vsel %vm710, %v698, 0
        %v727 = vsel %vm710, %v699, 0
        %v730 = vsel %vm710, %v700, 0
        %v733 = vsel %vm710, %v701, 0
        %v736 = vsel %vm710, %v702, 0
        %v739 = vsel %vm710, %v703, 0
        %v742 = vsel %vm710, %v704, 0
        %v745 = vsel %vm710, %v705, 0
        %v748 = vsel %vm710, %v706, 0
        %v751 = vsel %vm710, %v707, 0
        %v754 = vsel %vm710, %v708, 0
        %v757 = vsel %vm710, %v709, 0
        %vm759 = vcmask 1043456
        %v761 = vsel %vm759, %v661, 0
        %763 = vmatprep.subr.bf16.mxu0 0
        %764 = vmatpush1.bf16.msra.mxu0 0
        %765 = vmatprep.subr.bf16.mxu0 0
        %766 = vmatpush1.bf16.msra.mxu0 0
        %767 = vmatprep.subr.bf16.mxu0 0
        %768 = vmatpush1.bf16.msra.mxu0 0
        %769 = vmatprep.subr.bf16.mxu0 0
        %770 = vmatpush1.bf16.msra.mxu0 0
        %771 = vmatprep.subr.bf16.mxu0 0
        %772 = vmatpush1.bf16.msra.mxu0 0
        %773 = vmatprep.subr.bf16.mxu0 0
        %774 = vmatpush1.bf16.msra.mxu0 0
        %775 = vmatprep.subr.bf16.mxu0 0
        %776 = vmatpush1.bf16.msra.mxu0 0
        %777 = vmatprep.subr.bf16.mxu0 0
        %778 = vmatpush1.bf16.msra.mxu0 %v761
        %779 = vmatprep.subr.bf16.mxu0 0
        %780 = vmatpush2.bf16.msra.mxu0 0
        %781 = vmatprep.subr.bf16.mxu0 0
        %782 = vmatpush2.bf16.msra.mxu0 0
        %783 = vmatprep.subr.bf16.mxu0 0
        %784 = vmatpush2.bf16.msra.mxu0 0
        %785 = vmatprep.subr.bf16.mxu0 0
        %786 = vmatpush2.bf16.msra.mxu0 0
        %787 = vmatprep.subr.bf16.mxu0 0
        %788 = vmatpush2.bf16.msra.mxu0 0
        %789 = vmatprep.subr.bf16.mxu0 0
        %790 = vmatpush2.bf16.msra.mxu0 0
        %791 = vmatprep.subr.bf16.mxu0 0
        %792 = vmatpush2.bf16.msra.mxu0 0
        %793 = vmatprep.subr.bf16.mxu0 0
        %794 = vmatpush2.bf16.msra.mxu0 0
        %795 = vmatprep.mubr.bf16.mxu0 0
        %796 = vmatmul.mubr.bf16.gmra.mxu0 %v712
        %v797 = vpop.f32.mrf.mxu0
        %v798 = vadd.f32 0.0, %v797
        %v799 = vpop.f32.mrf.mxu0
        %v800 = vpop.f32.mrf.mxu0
        %v801 = vadd.f32 0.0, %v800
        %v802 = vpop.f32.mrf.mxu0
        %803 = vmatprep.mubr.bf16.mxu0 0
        %804 = vmatmul.mubr.bf16.gmra.mxu0 %v715
        %v805 = vpop.f32.mrf.mxu0
        %v806 = vadd.f32 0.0, %v805
        %v807 = vpop.f32.mrf.mxu0
        %v808 = vpop.f32.mrf.mxu0
        %v809 = vadd.f32 0.0, %v808
        %v810 = vpop.f32.mrf.mxu0
        %811 = vmatprep.mubr.bf16.mxu0 0
        %812 = vmatmul.mubr.bf16.gmra.mxu0 %v718
        %v813 = vpop.f32.mrf.mxu0
        %v814 = vadd.f32 0.0, %v813
        %v815 = vpop.f32.mrf.mxu0
        %v816 = vpop.f32.mrf.mxu0
        %v817 = vadd.f32 0.0, %v816
        %v818 = vpop.f32.mrf.mxu0
        %819 = vmatprep.mubr.bf16.mxu0 0
        %820 = vmatmul.mubr.bf16.gmra.mxu0 %v721
        %v821 = vpop.f32.mrf.mxu0
        %v822 = vadd.f32 0.0, %v821
        %v823 = vpop.f32.mrf.mxu0
        %v824 = vpop.f32.mrf.mxu0
        %v825 = vadd.f32 0.0, %v824
        %v826 = vpop.f32.mrf.mxu0
        %827 = vmatprep.mubr.bf16.mxu0 0
        %828 = vmatmul.mubr.bf16.gmra.mxu0 %v724
        %v829 = vpop.f32.mrf.mxu0
        %v830 = vadd.f32 0.0, %v829
        %v831 = vpop.f32.mrf.mxu0
        %v832 = vpop.f32.mrf.mxu0
        %v833 = vadd.f32 0.0, %v832
        %v834 = vpop.f32.mrf.mxu0
        %835 = vmatprep.mubr.bf16.mxu0 0
        %836 = vmatmul.mubr.bf16.gmra.mxu0 %v727
        %v837 = vpop.f32.mrf.mxu0
        %v838 = vadd.f32 0.0, %v837
        %v839 = vpop.f32.mrf.mxu0
        %v840 = vpop.f32.mrf.mxu0
        %v841 = vadd.f32 0.0, %v840
        %v842 = vpop.f32.mrf.mxu0
        %843 = vmatprep.mubr.bf16.mxu0 0
        %844 = vmatmul.mubr.bf16.gmra.mxu0 %v730
        %v845 = vpop.f32.mrf.mxu0
        %v846 = vadd.f32 0.0, %v845
        %v847 = vpop.f32.mrf.mxu0
        %v848 = vpop.f32.mrf.mxu0
        %v849 = vadd.f32 0.0, %v848
        %v850 = vpop.f32.mrf.mxu0
        %851 = vmatprep.mubr.bf16.mxu0 0
        %852 = vmatmul.mubr.bf16.gmra.mxu0 %v733
        %v853 = vpop.f32.mrf.mxu0
        %v854 = vadd.f32 0.0, %v853
        %v855 = vpop.f32.mrf.mxu0
        %v856 = vpop.f32.mrf.mxu0
        %v857 = vadd.f32 0.0, %v856
        %v858 = vpop.f32.mrf.mxu0
        %859 = vmatprep.mubr.bf16.mxu0 0
        %860 = vmatmul.mubr.bf16.gmra.mxu0 %v736
        %v861 = vpop.f32.mrf.mxu0
        %v862 = vadd.f32 0.0, %v861
        %v863 = vpop.f32.mrf.mxu0
        %v864 = vpop.f32.mrf.mxu0
        %v865 = vadd.f32 0.0, %v864
        %v866 = vpop.f32.mrf.mxu0
        %867 = vmatprep.mubr.bf16.mxu0 0
        %868 = vmatmul.mubr.bf16.gmra.mxu0 %v739
        %v869 = vpop.f32.mrf.mxu0
        %v870 = vadd.f32 0.0, %v869
        %v871 = vpop.f32.mrf.mxu0
        %v872 = vpop.f32.mrf.mxu0
        %v873 = vadd.f32 0.0, %v872
        %v874 = vpop.f32.mrf.mxu0
        %875 = vmatprep.mubr.bf16.mxu0 0
        %876 = vmatmul.mubr.bf16.gmra.mxu0 %v742
        %v877 = vpop.f32.mrf.mxu0
        %v878 = vadd.f32 0.0, %v877
        %v879 = vpop.f32.mrf.mxu0
        %v880 = vpop.f32.mrf.mxu0
        %v881 = vadd.f32 0.0, %v880
        %v882 = vpop.f32.mrf.mxu0
        %883 = vmatprep.mubr.bf16.mxu0 0
        %884 = vmatmul.mubr.bf16.gmra.mxu0 %v745
        %v885 = vpop.f32.mrf.mxu0
        %v886 = vadd.f32 0.0, %v885
        %v887 = vpop.f32.mrf.mxu0
        %v888 = vpop.f32.mrf.mxu0
        %v889 = vadd.f32 0.0, %v888
        %v890 = vpop.f32.mrf.mxu0
        %891 = vmatprep.mubr.bf16.mxu0 0
        %892 = vmatmul.mubr.bf16.gmra.mxu0 %v748
        %v893 = vpop.f32.mrf.mxu0
        %v894 = vadd.f32 0.0, %v893
        %v895 = vpop.f32.mrf.mxu0
        %v896 = vpop.f32.mrf.mxu0
        %v897 = vadd.f32 0.0, %v896
        %v898 = vpop.f32.mrf.mxu0
        %899 = vmatprep.mubr.bf16.mxu0 0
        %900 = vmatmul.mubr.bf16.gmra.mxu0 %v751
        %v901 = vpop.f32.mrf.mxu0
        %v902 = vadd.f32 0.0, %v901
        %v903 = vpop.f32.mrf.mxu0
        %v904 = vpop.f32.mrf.mxu0
        %v905 = vadd.f32 0.0, %v904
        %v906 = vpop.f32.mrf.mxu0
        %907 = vmatprep.mubr.bf16.mxu0 0
        %908 = vmatmul.mubr.bf16.gmra.mxu0 %v754
        %v909 = vpop.f32.mrf.mxu0
        %v910 = vadd.f32 0.0, %v909
        %v911 = vpop.f32.mrf.mxu0
        %v912 = vpop.f32.mrf.mxu0
        %v913 = vadd.f32 0.0, %v912
        %v914 = vpop.f32.mrf.mxu0
        %915 = vmatprep.mubr.bf16.mxu0 0
        %916 = vmatmul.mubr.bf16.gmra.mxu0 %v757
        %v917 = vpop.f32.mrf.mxu0
        %v918 = vadd.f32 0.0, %v917
        %v919 = vpop.f32.mrf.mxu0
        %v920 = vpop.f32.mrf.mxu0
        %v921 = vadd.f32 0.0, %v920
        %v922 = vpop.f32.mrf.mxu0
        %923 = vdwg.mxu0
        %v956 = vunpack.c.l.b16 %v218
        %v957 = vunpack.c.l.b16 %v219
        %v958 = vunpack.c.l.b16 %v221
        %v959 = vunpack.c.l.b16 %v222
        %v960 = vunpack.c.l.b16 %v224
        %v961 = vunpack.c.l.b16 %v225
        %v962 = vunpack.c.l.b16 %v227
        %v963 = vunpack.c.l.b16 %v228
        %v964 = vunpack.c.l.b16 %v230
        %v965 = vunpack.c.l.b16 %v231
        %v966 = vunpack.c.l.b16 %v233
        %v967 = vunpack.c.l.b16 %v234
        %v968 = vunpack.c.l.b16 %v236
        %v969 = vunpack.c.l.b16 %v237
        %v970 = vunpack.c.l.b16 %v239
        %v971 = vunpack.c.l.b16 %v240
        %v972 = vunpack.c.l.b16 %v242
        %v973 = vunpack.c.l.b16 %v243
        %v974 = vunpack.c.l.b16 %v245
        %v975 = vunpack.c.l.b16 %v246
        %v976 = vunpack.c.l.b16 %v248
        %v977 = vunpack.c.l.b16 %v249
        %v978 = vunpack.c.l.b16 %v251
        %v979 = vunpack.c.l.b16 %v252
        %v980 = vunpack.c.l.b16 %v254
        %v981 = vunpack.c.l.b16 %v255
        %v982 = vunpack.c.l.b16 %v257
        %v983 = vunpack.c.l.b16 %v258
        %v984 = vunpack.c.l.b16 %v260
        %v985 = vunpack.c.l.b16 %v261
        %v986 = vunpack.c.l.b16 %v263
        %v987 = vunpack.c.l.b16 %v264
        %v988 = vpack.c.b16 %v957, %v956
        %v989 = vpack.c.b16 %v959, %v958
        %v990 = vpack.c.b16 %v961, %v960
        %v991 = vpack.c.b16 %v963, %v962
        %v992 = vpack.c.b16 %v965, %v964
        %v993 = vpack.c.b16 %v967, %v966
        %v994 = vpack.c.b16 %v969, %v968
        %v995 = vpack.c.b16 %v971, %v970
        %v996 = vpack.c.b16 %v973, %v972
        %v997 = vpack.c.b16 %v975, %v974
        %v998 = vpack.c.b16 %v977, %v976
        %v999 = vpack.c.b16 %v979, %v978
        %v1000 = vpack.c.b16 %v981, %v980
        %v1001 = vpack.c.b16 %v983, %v982
        %v1002 = vpack.c.b16 %v985, %v984
        %v1003 = vpack.c.b16 %v987, %v986
        %v1005 = vsel %vm710, %v988, 0
        %v1008 = vsel %vm710, %v989, 0
        %v1011 = vsel %vm710, %v990, 0
        %v1014 = vsel %vm710, %v991, 0
        %v1017 = vsel %vm710, %v992, 0
        %v1020 = vsel %vm710, %v993, 0
        %v1023 = vsel %vm710, %v994, 0
        %v1026 = vsel %vm710, %v995, 0
        %v1029 = vsel %vm710, %v996, 0
        %v1032 = vsel %vm710, %v997, 0
        %v1035 = vsel %vm710, %v998, 0
        %v1038 = vsel %vm710, %v999, 0
        %v1041 = vsel %vm710, %v1000, 0
        %v1044 = vsel %vm710, %v1001, 0
        %v1047 = vsel %vm710, %v1002, 0
        %v1050 = vsel %vm710, %v1003, 0
        %v1053 = vsel %vm759, %v272, 0
        %1055 = vmatprep.subr.bf16.mxu0 0
        %1056 = vmatpush1.bf16.msra.mxu0 0
        %1057 = vmatprep.subr.bf16.mxu0 0
        %1058 = vmatpush1.bf16.msra.mxu0 0
        %1059 = vmatprep.subr.bf16.mxu0 0
        %1060 = vmatpush1.bf16.msra.mxu0 0
        %1061 = vmatprep.subr.bf16.mxu0 0
        %1062 = vmatpush1.bf16.msra.mxu0 0
        %1063 = vmatprep.subr.bf16.mxu0 0
        %1064 = vmatpush1.bf16.msra.mxu0 0
        %1065 = vmatprep.subr.bf16.mxu0 0
        %1066 = vmatpush1.bf16.msra.mxu0 0
        %1067 = vmatprep.subr.bf16.mxu0 0
        %1068 = vmatpush1.bf16.msra.mxu0 0
        %1069 = vmatprep.subr.bf16.mxu0 0
        %1070 = vmatpush1.bf16.msra.mxu0 %v1053
        %1071 = vmatprep.subr.bf16.mxu0 0
        %1072 = vmatpush2.bf16.msra.mxu0 0
        %1073 = vmatprep.subr.bf16.mxu0 0
        %1074 = vmatpush2.bf16.msra.mxu0 0
        %1075 = vmatprep.subr.bf16.mxu0 0
        %1076 = vmatpush2.bf16.msra.mxu0 0
        %1077 = vmatprep.subr.bf16.mxu0 0
        %1078 = vmatpush2.bf16.msra.mxu0 0
        %1079 = vmatprep.subr.bf16.mxu0 0
        %1080 = vmatpush2.bf16.msra.mxu0 0
        %1081 = vmatprep.subr.bf16.mxu0 0
        %1082 = vmatpush2.bf16.msra.mxu0 0
        %1083 = vmatprep.subr.bf16.mxu0 0
        %1084 = vmatpush2.bf16.msra.mxu0 0
        %1085 = vmatprep.subr.bf16.mxu0 0
        %1086 = vmatpush2.bf16.msra.mxu0 0
        %1087 = vmatprep.mubr.bf16.mxu0 0
        %1088 = vmatmul.mubr.bf16.gmra.mxu0 %v1005
        %v1089 = vpop.f32.mrf.mxu0
        %v1090 = vadd.f32 %v798, %v1089
        %v1091 = vpop.f32.mrf.mxu0
        %v1092 = vpop.f32.mrf.mxu0
        %v1093 = vadd.f32 %v801, %v1092
        %v1094 = vpop.f32.mrf.mxu0
        %1095 = vmatprep.mubr.bf16.mxu0 0
        %1096 = vmatmul.mubr.bf16.gmra.mxu0 %v1008
        %v1097 = vpop.f32.mrf.mxu0
        %v1098 = vadd.f32 %v806, %v1097
        %v1099 = vpop.f32.mrf.mxu0
        %v1100 = vpop.f32.mrf.mxu0
        %v1101 = vadd.f32 %v809, %v1100
        %v1102 = vpop.f32.mrf.mxu0
        %1103 = vmatprep.mubr.bf16.mxu0 0
        %1104 = vmatmul.mubr.bf16.gmra.mxu0 %v1011
        %v1105 = vpop.f32.mrf.mxu0
        %v1106 = vadd.f32 %v814, %v1105
        %v1107 = vpop.f32.mrf.mxu0
        %v1108 = vpop.f32.mrf.mxu0
        %v1109 = vadd.f32 %v817, %v1108
        %v1110 = vpop.f32.mrf.mxu0
        %1111 = vmatprep.mubr.bf16.mxu0 0
        %1112 = vmatmul.mubr.bf16.gmra.mxu0 %v1014
        %v1113 = vpop.f32.mrf.mxu0
        %v1114 = vadd.f32 %v822, %v1113
        %v1115 = vpop.f32.mrf.mxu0
        %v1116 = vpop.f32.mrf.mxu0
        %v1117 = vadd.f32 %v825, %v1116
        %v1118 = vpop.f32.mrf.mxu0
        %1119 = vmatprep.mubr.bf16.mxu0 0
        %1120 = vmatmul.mubr.bf16.gmra.mxu0 %v1017
        %v1121 = vpop.f32.mrf.mxu0
        %v1122 = vadd.f32 %v830, %v1121
        %v1123 = vpop.f32.mrf.mxu0
        %v1124 = vpop.f32.mrf.mxu0
        %v1125 = vadd.f32 %v833, %v1124
        %v1126 = vpop.f32.mrf.mxu0
        %1127 = vmatprep.mubr.bf16.mxu0 0
        %1128 = vmatmul.mubr.bf16.gmra.mxu0 %v1020
        %v1129 = vpop.f32.mrf.mxu0
        %v1130 = vadd.f32 %v838, %v1129
        %v1131 = vpop.f32.mrf.mxu0
        %v1132 = vpop.f32.mrf.mxu0
        %v1133 = vadd.f32 %v841, %v1132
        %v1134 = vpop.f32.mrf.mxu0
        %1135 = vmatprep.mubr.bf16.mxu0 0
        %1136 = vmatmul.mubr.bf16.gmra.mxu0 %v1023
        %v1137 = vpop.f32.mrf.mxu0
        %v1138 = vadd.f32 %v846, %v1137
        %v1139 = vpop.f32.mrf.mxu0
        %v1140 = vpop.f32.mrf.mxu0
        %v1141 = vadd.f32 %v849, %v1140
        %v1142 = vpop.f32.mrf.mxu0
        %1143 = vmatprep.mubr.bf16.mxu0 0
        %1144 = vmatmul.mubr.bf16.gmra.mxu0 %v1026
        %v1145 = vpop.f32.mrf.mxu0
        %v1146 = vadd.f32 %v854, %v1145
        %v1147 = vpop.f32.mrf.mxu0
        %v1148 = vpop.f32.mrf.mxu0
        %v1149 = vadd.f32 %v857, %v1148
        %v1150 = vpop.f32.mrf.mxu0
        %1151 = vmatprep.mubr.bf16.mxu0 0
        %1152 = vmatmul.mubr.bf16.gmra.mxu0 %v1029
        %v1153 = vpop.f32.mrf.mxu0
        %v1154 = vadd.f32 %v862, %v1153
        %v1155 = vpop.f32.mrf.mxu0
        %v1156 = vpop.f32.mrf.mxu0
        %v1157 = vadd.f32 %v865, %v1156
        %v1158 = vpop.f32.mrf.mxu0
        %1159 = vmatprep.mubr.bf16.mxu0 0
        %1160 = vmatmul.mubr.bf16.gmra.mxu0 %v1032
        %v1161 = vpop.f32.mrf.mxu0
        %v1162 = vadd.f32 %v870, %v1161
        %v1163 = vpop.f32.mrf.mxu0
        %v1164 = vpop.f32.mrf.mxu0
        %v1165 = vadd.f32 %v873, %v1164
        %v1166 = vpop.f32.mrf.mxu0
        %1167 = vmatprep.mubr.bf16.mxu0 0
        %1168 = vmatmul.mubr.bf16.gmra.mxu0 %v1035
        %v1169 = vpop.f32.mrf.mxu0
        %v1170 = vadd.f32 %v878, %v1169
        %v1171 = vpop.f32.mrf.mxu0
        %v1172 = vpop.f32.mrf.mxu0
        %v1173 = vadd.f32 %v881, %v1172
        %v1174 = vpop.f32.mrf.mxu0
        %1175 = vmatprep.mubr.bf16.mxu0 0
        %1176 = vmatmul.mubr.bf16.gmra.mxu0 %v1038
        %v1177 = vpop.f32.mrf.mxu0
        %v1178 = vadd.f32 %v886, %v1177
        %v1179 = vpop.f32.mrf.mxu0
        %v1180 = vpop.f32.mrf.mxu0
        %v1181 = vadd.f32 %v889, %v1180
        %v1182 = vpop.f32.mrf.mxu0
        %1183 = vmatprep.mubr.bf16.mxu0 0
        %1184 = vmatmul.mubr.bf16.gmra.mxu0 %v1041
        %v1185 = vpop.f32.mrf.mxu0
        %v1186 = vadd.f32 %v894, %v1185
        %v1187 = vpop.f32.mrf.mxu0
        %v1188 = vpop.f32.mrf.mxu0
        %v1189 = vadd.f32 %v897, %v1188
        %v1190 = vpop.f32.mrf.mxu0
        %1191 = vmatprep.mubr.bf16.mxu0 0
        %1192 = vmatmul.mubr.bf16.gmra.mxu0 %v1044
        %v1193 = vpop.f32.mrf.mxu0
        %v1194 = vadd.f32 %v902, %v1193
        %v1195 = vpop.f32.mrf.mxu0
        %v1196 = vpop.f32.mrf.mxu0
        %v1197 = vadd.f32 %v905, %v1196
        %v1198 = vpop.f32.mrf.mxu0
        %1199 = vmatprep.mubr.bf16.mxu0 0
        %1200 = vmatmul.mubr.bf16.gmra.mxu0 %v1047
        %v1201 = vpop.f32.mrf.mxu0
        %v1202 = vadd.f32 %v910, %v1201
        %v1203 = vpop.f32.mrf.mxu0
        %v1204 = vpop.f32.mrf.mxu0
        %v1205 = vadd.f32 %v913, %v1204
        %v1206 = vpop.f32.mrf.mxu0
        %1207 = vmatprep.mubr.bf16.mxu0 0
        %1208 = vmatmul.mubr.bf16.gmra.mxu0 %v1050
        %v1209 = vpop.f32.mrf.mxu0
        %v1210 = vadd.f32 %v918, %v1209
        %v1211 = vpop.f32.mrf.mxu0
        %v1212 = vpop.f32.mrf.mxu0
        %v1213 = vadd.f32 %v921, %v1212
        %v1214 = vpop.f32.mrf.mxu0
        %1215 = vdwg.mxu0
        %vm1232 = vcmask 1042432
        %vm1233 = vcmask 1046532
        %vm1234 = vmor %vm1232, %vm1233
        %v1235 = vrot.slane %v218, 5
        %v1236 = vrot.slane %v1235, 4
        %v1237 = vrot.slane %v219, 5
        %v1238 = vsel %vm1234, %v1236, %v1237
        %v1239 = vrot.slane %v1237, 4
        %v1240 = vrot.slane %v220, 5
        %v1241 = vsel %vm1234, %v1239, %v1240
        %v1242 = vrot.slane %v221, 5
        %v1243 = vrot.slane %v1242, 4
        %v1244 = vrot.slane %v222, 5
        %v1245 = vsel %vm1234, %v1243, %v1244
        %v1246 = vrot.slane %v1244, 4
        %v1247 = vrot.slane %v223, 5
        %v1248 = vsel %vm1234, %v1246, %v1247
        %v1249 = vrot.slane %v224, 5
        %v1250 = vrot.slane %v1249, 4
        %v1251 = vrot.slane %v225, 5
        %v1252 = vsel %vm1234, %v1250, %v1251
        %v1253 = vrot.slane %v1251, 4
        %v1254 = vrot.slane %v226, 5
        %v1255 = vsel %vm1234, %v1253, %v1254
        %v1256 = vrot.slane %v227, 5
        %v1257 = vrot.slane %v1256, 4
        %v1258 = vrot.slane %v228, 5
        %v1259 = vsel %vm1234, %v1257, %v1258
        %v1260 = vrot.slane %v1258, 4
        %v1261 = vrot.slane %v229, 5
        %v1262 = vsel %vm1234, %v1260, %v1261
        %v1263 = vrot.slane %v230, 5
        %v1264 = vrot.slane %v1263, 4
        %v1265 = vrot.slane %v231, 5
        %v1266 = vsel %vm1234, %v1264, %v1265
        %v1267 = vrot.slane %v1265, 4
        %v1268 = vrot.slane %v232, 5
        %v1269 = vsel %vm1234, %v1267, %v1268
        %v1270 = vrot.slane %v233, 5
        %v1271 = vrot.slane %v1270, 4
        %v1272 = vrot.slane %v234, 5
        %v1273 = vsel %vm1234, %v1271, %v1272
        %v1274 = vrot.slane %v1272, 4
        %v1275 = vrot.slane %v235, 5
        %v1276 = vsel %vm1234, %v1274, %v1275
        %v1277 = vrot.slane %v236, 5
        %v1278 = vrot.slane %v1277, 4
        %v1279 = vrot.slane %v237, 5
        %v1280 = vsel %vm1234, %v1278, %v1279
        %v1281 = vrot.slane %v1279, 4
        %v1282 = vrot.slane %v238, 5
        %v1283 = vsel %vm1234, %v1281, %v1282
        %v1284 = vrot.slane %v239, 5
        %v1285 = vrot.slane %v1284, 4
        %v1286 = vrot.slane %v240, 5
        %v1287 = vsel %vm1234, %v1285, %v1286
        %v1288 = vrot.slane %v1286, 4
        %v1289 = vrot.slane %v241, 5
        %v1290 = vsel %vm1234, %v1288, %v1289
        %v1291 = vrot.slane %v242, 5
        %v1292 = vrot.slane %v1291, 4
        %v1293 = vrot.slane %v243, 5
        %v1294 = vsel %vm1234, %v1292, %v1293
        %v1295 = vrot.slane %v1293, 4
        %v1296 = vrot.slane %v244, 5
        %v1297 = vsel %vm1234, %v1295, %v1296
        %v1298 = vrot.slane %v245, 5
        %v1299 = vrot.slane %v1298, 4
        %v1300 = vrot.slane %v246, 5
        %v1301 = vsel %vm1234, %v1299, %v1300
        %v1302 = vrot.slane %v1300, 4
        %v1303 = vrot.slane %v247, 5
        %v1304 = vsel %vm1234, %v1302, %v1303
        %v1305 = vrot.slane %v248, 5
        %v1306 = vrot.slane %v1305, 4
        %v1307 = vrot.slane %v249, 5
        %v1308 = vsel %vm1234, %v1306, %v1307
        %v1309 = vrot.slane %v1307, 4
        %v1310 = vrot.slane %v250, 5
        %v1311 = vsel %vm1234, %v1309, %v1310
        %v1312 = vrot.slane %v251, 5
        %v1313 = vrot.slane %v1312, 4
        %v1314 = vrot.slane %v252, 5
        %v1315 = vsel %vm1234, %v1313, %v1314
        %v1316 = vrot.slane %v1314, 4
        %v1317 = vrot.slane %v253, 5
        %v1318 = vsel %vm1234, %v1316, %v1317
        %v1319 = vrot.slane %v254, 5
        %v1320 = vrot.slane %v1319, 4
        %v1321 = vrot.slane %v255, 5
        %v1322 = vsel %vm1234, %v1320, %v1321
        %v1323 = vrot.slane %v1321, 4
        %v1324 = vrot.slane %v256, 5
        %v1325 = vsel %vm1234, %v1323, %v1324
        %v1326 = vrot.slane %v257, 5
        %v1327 = vrot.slane %v1326, 4
        %v1328 = vrot.slane %v258, 5
        %v1329 = vsel %vm1234, %v1327, %v1328
        %v1330 = vrot.slane %v1328, 4
        %v1331 = vrot.slane %v259, 5
        %v1332 = vsel %vm1234, %v1330, %v1331
        %v1333 = vrot.slane %v260, 5
        %v1334 = vrot.slane %v1333, 4
        %v1335 = vrot.slane %v261, 5
        %v1336 = vsel %vm1234, %v1334, %v1335
        %v1337 = vrot.slane %v1335, 4
        %v1338 = vrot.slane %v262, 5
        %v1339 = vsel %vm1234, %v1337, %v1338
        %v1340 = vrot.slane %v263, 5
        %v1341 = vrot.slane %v1340, 4
        %v1342 = vrot.slane %v264, 5
        %v1343 = vsel %vm1234, %v1341, %v1342
        %v1344 = vrot.slane %v1342, 4
        %v1345 = vrot.slane %v265, 5
        %v1346 = vsel %vm1234, %v1344, %v1345
        %s1347 = scalar_lea.vmem %s1, 8
        %v1348 = vld [vmem:[%s1347] sm:$0xf]
        %v1349 = vunpack.c.l.b16 %v1238
        %v1350 = vunpack.c.l.b16 %v1241
        %v1351 = vunpack.c.l.b16 %v1245
        %v1352 = vunpack.c.l.b16 %v1248
        %v1353 = vunpack.c.l.b16 %v1252
        %v1354 = vunpack.c.l.b16 %v1255
        %v1355 = vunpack.c.l.b16 %v1259
        %v1356 = vunpack.c.l.b16 %v1262
        %v1357 = vunpack.c.l.b16 %v1266
        %v1358 = vunpack.c.l.b16 %v1269
        %v1359 = vunpack.c.l.b16 %v1273
        %v1360 = vunpack.c.l.b16 %v1276
        %v1361 = vunpack.c.l.b16 %v1280
        %v1362 = vunpack.c.l.b16 %v1283
        %v1363 = vunpack.c.l.b16 %v1287
        %v1364 = vunpack.c.l.b16 %v1290
        %v1365 = vunpack.c.l.b16 %v1294
        %v1366 = vunpack.c.l.b16 %v1297
        %v1367 = vunpack.c.l.b16 %v1301
        %v1368 = vunpack.c.l.b16 %v1304
        %v1369 = vunpack.c.l.b16 %v1308
        %v1370 = vunpack.c.l.b16 %v1311
        %v1371 = vunpack.c.l.b16 %v1315
        %v1372 = vunpack.c.l.b16 %v1318
        %v1373 = vunpack.c.l.b16 %v1322
        %v1374 = vunpack.c.l.b16 %v1325
        %v1375 = vunpack.c.l.b16 %v1329
        %v1376 = vunpack.c.l.b16 %v1332
        %v1377 = vunpack.c.l.b16 %v1336
        %v1378 = vunpack.c.l.b16 %v1339
        %v1379 = vunpack.c.l.b16 %v1343
        %v1380 = vunpack.c.l.b16 %v1346
        %v1381 = vpack.c.b16 %v1350, %v1349
        %v1382 = vpack.c.b16 %v1352, %v1351
        %v1383 = vpack.c.b16 %v1354, %v1353
        %v1384 = vpack.c.b16 %v1356, %v1355
        %v1385 = vpack.c.b16 %v1358, %v1357
        %v1386 = vpack.c.b16 %v1360, %v1359
        %v1387 = vpack.c.b16 %v1362, %v1361
        %v1388 = vpack.c.b16 %v1364, %v1363
        %v1389 = vpack.c.b16 %v1366, %v1365
        %v1390 = vpack.c.b16 %v1368, %v1367
        %v1391 = vpack.c.b16 %v1370, %v1369
        %v1392 = vpack.c.b16 %v1372, %v1371
        %v1393 = vpack.c.b16 %v1374, %v1373
        %v1394 = vpack.c.b16 %v1376, %v1375
        %v1395 = vpack.c.b16 %v1378, %v1377
        %v1396 = vpack.c.b16 %v1380, %v1379
        %v1398 = vsel %vm710, %v1381, 0
        %v1401 = vsel %vm710, %v1382, 0
        %v1404 = vsel %vm710, %v1383, 0
        %v1407 = vsel %vm710, %v1384, 0
        %v1410 = vsel %vm710, %v1385, 0
        %v1413 = vsel %vm710, %v1386, 0
        %v1416 = vsel %vm710, %v1387, 0
        %v1419 = vsel %vm710, %v1388, 0
        %v1422 = vsel %vm710, %v1389, 0
        %v1425 = vsel %vm710, %v1390, 0
        %v1428 = vsel %vm710, %v1391, 0
        %v1431 = vsel %vm710, %v1392, 0
        %v1434 = vsel %vm710, %v1393, 0
        %v1437 = vsel %vm710, %v1394, 0
        %v1440 = vsel %vm710, %v1395, 0
        %v1443 = vsel %vm710, %v1396, 0
        %v1446 = vsel %vm759, %v1348, 0
        %1448 = vmatprep.subr.bf16.mxu0 0
        %1449 = vmatpush1.bf16.msra.mxu0 0
        %1450 = vmatprep.subr.bf16.mxu0 0
        %1451 = vmatpush1.bf16.msra.mxu0 0
        %1452 = vmatprep.subr.bf16.mxu0 0
        %1453 = vmatpush1.bf16.msra.mxu0 0
        %1454 = vmatprep.subr.bf16.mxu0 0
        %1455 = vmatpush1.bf16.msra.mxu0 0
        %1456 = vmatprep.subr.bf16.mxu0 0
        %1457 = vmatpush1.bf16.msra.mxu0 0
        %1458 = vmatprep.subr.bf16.mxu0 0
        %1459 = vmatpush1.bf16.msra.mxu0 0
        %1460 = vmatprep.subr.bf16.mxu0 0
        %1461 = vmatpush1.bf16.msra.mxu0 0
        %1462 = vmatprep.subr.bf16.mxu0 0
        %1463 = vmatpush1.bf16.msra.mxu0 %v1446
        %1464 = vmatprep.subr.bf16.mxu0 0
        %1465 = vmatpush2.bf16.msra.mxu0 0
        %1466 = vmatprep.subr.bf16.mxu0 0
        %1467 = vmatpush2.bf16.msra.mxu0 0
        %1468 = vmatprep.subr.bf16.mxu0 0
        %1469 = vmatpush2.bf16.msra.mxu0 0
        %1470 = vmatprep.subr.bf16.mxu0 0
        %1471 = vmatpush2.bf16.msra.mxu0 0
        %1472 = vmatprep.subr.bf16.mxu0 0
        %1473 = vmatpush2.bf16.msra.mxu0 0
        %1474 = vmatprep.subr.bf16.mxu0 0
        %1475 = vmatpush2.bf16.msra.mxu0 0
        %1476 = vmatprep.subr.bf16.mxu0 0
        %1477 = vmatpush2.bf16.msra.mxu0 0
        %1478 = vmatprep.subr.bf16.mxu0 0
        %1479 = vmatpush2.bf16.msra.mxu0 0
        %1480 = vmatprep.mubr.bf16.mxu0 0
        %1481 = vmatmul.mubr.bf16.gmra.mxu0 %v1398
        %v1482 = vpop.f32.mrf.mxu0
        %v1483 = vadd.f32 0.0, %v1482
        %v1484 = vpop.f32.mrf.mxu0
        %v1485 = vpop.f32.mrf.mxu0
        %v1486 = vadd.f32 0.0, %v1485
        %v1487 = vpop.f32.mrf.mxu0
        %1488 = vmatprep.mubr.bf16.mxu0 0
        %1489 = vmatmul.mubr.bf16.gmra.mxu0 %v1401
        %v1490 = vpop.f32.mrf.mxu0
        %v1491 = vadd.f32 0.0, %v1490
        %v1492 = vpop.f32.mrf.mxu0
        %v1493 = vpop.f32.mrf.mxu0
        %v1494 = vadd.f32 0.0, %v1493
        %v1495 = vpop.f32.mrf.mxu0
        %1496 = vmatprep.mubr.bf16.mxu0 0
        %1497 = vmatmul.mubr.bf16.gmra.mxu0 %v1404
        %v1498 = vpop.f32.mrf.mxu0
        %v1499 = vadd.f32 0.0, %v1498
        %v1500 = vpop.f32.mrf.mxu0
        %v1501 = vpop.f32.mrf.mxu0
        %v1502 = vadd.f32 0.0, %v1501
        %v1503 = vpop.f32.mrf.mxu0
        %1504 = vmatprep.mubr.bf16.mxu0 0
        %1505 = vmatmul.mubr.bf16.gmra.mxu0 %v1407
        %v1506 = vpop.f32.mrf.mxu0
        %v1507 = vadd.f32 0.0, %v1506
        %v1508 = vpop.f32.mrf.mxu0
        %v1509 = vpop.f32.mrf.mxu0
        %v1510 = vadd.f32 0.0, %v1509
        %v1511 = vpop.f32.mrf.mxu0
        %1512 = vmatprep.mubr.bf16.mxu0 0
        %1513 = vmatmul.mubr.bf16.gmra.mxu0 %v1410
        %v1514 = vpop.f32.mrf.mxu0
        %v1515 = vadd.f32 0.0, %v1514
        %v1516 = vpop.f32.mrf.mxu0
        %v1517 = vpop.f32.mrf.mxu0
        %v1518 = vadd.f32 0.0, %v1517
        %v1519 = vpop.f32.mrf.mxu0
        %1520 = vmatprep.mubr.bf16.mxu0 0
        %1521 = vmatmul.mubr.bf16.gmra.mxu0 %v1413
        %v1522 = vpop.f32.mrf.mxu0
        %v1523 = vadd.f32 0.0, %v1522
        %v1524 = vpop.f32.mrf.mxu0
        %v1525 = vpop.f32.mrf.mxu0
        %v1526 = vadd.f32 0.0, %v1525
        %v1527 = vpop.f32.mrf.mxu0
        %1528 = vmatprep.mubr.bf16.mxu0 0
        %1529 = vmatmul.mubr.bf16.gmra.mxu0 %v1416
        %v1530 = vpop.f32.mrf.mxu0
        %v1531 = vadd.f32 0.0, %v1530
        %v1532 = vpop.f32.mrf.mxu0
        %v1533 = vpop.f32.mrf.mxu0
        %v1534 = vadd.f32 0.0, %v1533
        %v1535 = vpop.f32.mrf.mxu0
        %1536 = vmatprep.mubr.bf16.mxu0 0
        %1537 = vmatmul.mubr.bf16.gmra.mxu0 %v1419
        %v1538 = vpop.f32.mrf.mxu0
        %v1539 = vadd.f32 0.0, %v1538
        %v1540 = vpop.f32.mrf.mxu0
        %v1541 = vpop.f32.mrf.mxu0
        %v1542 = vadd.f32 0.0, %v1541
        %v1543 = vpop.f32.mrf.mxu0
        %1544 = vmatprep.mubr.bf16.mxu0 0
        %1545 = vmatmul.mubr.bf16.gmra.mxu0 %v1422
        %v1546 = vpop.f32.mrf.mxu0
        %v1547 = vadd.f32 0.0, %v1546
        %v1548 = vpop.f32.mrf.mxu0
        %v1549 = vpop.f32.mrf.mxu0
        %v1550 = vadd.f32 0.0, %v1549
        %v1551 = vpop.f32.mrf.mxu0
        %1552 = vmatprep.mubr.bf16.mxu0 0
        %1553 = vmatmul.mubr.bf16.gmra.mxu0 %v1425
        %v1554 = vpop.f32.mrf.mxu0
        %v1555 = vadd.f32 0.0, %v1554
        %v1556 = vpop.f32.mrf.mxu0
        %v1557 = vpop.f32.mrf.mxu0
        %v1558 = vadd.f32 0.0, %v1557
        %v1559 = vpop.f32.mrf.mxu0
        %1560 = vmatprep.mubr.bf16.mxu0 0
        %1561 = vmatmul.mubr.bf16.gmra.mxu0 %v1428
        %v1562 = vpop.f32.mrf.mxu0
        %v1563 = vadd.f32 0.0, %v1562
        %v1564 = vpop.f32.mrf.mxu0
        %v1565 = vpop.f32.mrf.mxu0
        %v1566 = vadd.f32 0.0, %v1565
        %v1567 = vpop.f32.mrf.mxu0
        %1568 = vmatprep.mubr.bf16.mxu0 0
        %1569 = vmatmul.mubr.bf16.gmra.mxu0 %v1431
        %v1570 = vpop.f32.mrf.mxu0
        %v1571 = vadd.f32 0.0, %v1570
        %v1572 = vpop.f32.mrf.mxu0
        %v1573 = vpop.f32.mrf.mxu0
        %v1574 = vadd.f32 0.0, %v1573
        %v1575 = vpop.f32.mrf.mxu0
        %1576 = vmatprep.mubr.bf16.mxu0 0
        %1577 = vmatmul.mubr.bf16.gmra.mxu0 %v1434
        %v1578 = vpop.f32.mrf.mxu0
        %v1579 = vadd.f32 0.0, %v1578
        %v1580 = vpop.f32.mrf.mxu0
        %v1581 = vpop.f32.mrf.mxu0
        %v1582 = vadd.f32 0.0, %v1581
        %v1583 = vpop.f32.mrf.mxu0
        %1584 = vmatprep.mubr.bf16.mxu0 0
        %1585 = vmatmul.mubr.bf16.gmra.mxu0 %v1437
        %v1586 = vpop.f32.mrf.mxu0
        %v1587 = vadd.f32 0.0, %v1586
        %v1588 = vpop.f32.mrf.mxu0
        %v1589 = vpop.f32.mrf.mxu0
        %v1590 = vadd.f32 0.0, %v1589
        %v1591 = vpop.f32.mrf.mxu0
        %1592 = vmatprep.mubr.bf16.mxu0 0
        %1593 = vmatmul.mubr.bf16.gmra.mxu0 %v1440
        %v1594 = vpop.f32.mrf.mxu0
        %v1595 = vadd.f32 0.0, %v1594
        %v1596 = vpop.f32.mrf.mxu0
        %v1597 = vpop.f32.mrf.mxu0
        %v1598 = vadd.f32 0.0, %v1597
        %v1599 = vpop.f32.mrf.mxu0
        %1600 = vmatprep.mubr.bf16.mxu0 0
        %1601 = vmatmul.mubr.bf16.gmra.mxu0 %v1443
        %v1602 = vpop.f32.mrf.mxu0
        %v1603 = vadd.f32 0.0, %v1602
        %v1604 = vpop.f32.mrf.mxu0
        %v1605 = vpop.f32.mrf.mxu0
        %v1606 = vadd.f32 0.0, %v1605
        %v1607 = vpop.f32.mrf.mxu0
        %1608 = vdwg.mxu0
        %v1609 = vadd.f32 %v1090, %v1483
        %v1610 = vadd.f32 %v1093, %v1486
        %v1611 = vadd.f32 %v1098, %v1491
        %v1612 = vadd.f32 %v1101, %v1494
        %v1613 = vadd.f32 %v1106, %v1499
        %v1614 = vadd.f32 %v1109, %v1502
        %v1615 = vadd.f32 %v1114, %v1507
        %v1616 = vadd.f32 %v1117, %v1510
        %v1617 = vadd.f32 %v1122, %v1515
        %v1618 = vadd.f32 %v1125, %v1518
        %v1619 = vadd.f32 %v1130, %v1523
        %v1620 = vadd.f32 %v1133, %v1526
        %v1621 = vadd.f32 %v1138, %v1531
        %v1622 = vadd.f32 %v1141, %v1534
        %v1623 = vadd.f32 %v1146, %v1539
        %v1624 = vadd.f32 %v1149, %v1542
        %v1625 = vadd.f32 %v1154, %v1547
        %v1626 = vadd.f32 %v1157, %v1550
        %v1627 = vadd.f32 %v1162, %v1555
        %v1628 = vadd.f32 %v1165, %v1558
        %v1629 = vadd.f32 %v1170, %v1563
        %v1630 = vadd.f32 %v1173, %v1566
        %v1631 = vadd.f32 %v1178, %v1571
        %v1632 = vadd.f32 %v1181, %v1574
        %v1633 = vadd.f32 %v1186, %v1579
        %v1634 = vadd.f32 %v1189, %v1582
        %v1635 = vadd.f32 %v1194, %v1587
        %v1636 = vadd.f32 %v1197, %v1590
        %v1637 = vadd.f32 %v1202, %v1595
        %v1638 = vadd.f32 %v1205, %v1598
        %v1639 = vadd.f32 %v1210, %v1603
        %v1640 = vadd.f32 %v1213, %v1606
        %s1641 = scalar_lea.vmem %s1, 12
        %v1642 = vld [vmem:[%s1641] sm:$0xf]
        %v1645 = vunpack.c.l.b16 %v266
        %v1646 = vunpack.c.l.b16 %v267
        %v1647 = vpack.c.b16 %v1646, %v1645
        %v1649 = vsel %vm710, %v1647, 0
        %v1652 = vsel %vm759, %v1642, 0
        %1654 = vmatprep.subr.bf16.mxu0 0
        %1655 = vmatpush1.bf16.msra.mxu0 0
        %1656 = vmatprep.subr.bf16.mxu0 0
        %1657 = vmatpush1.bf16.msra.mxu0 0
        %1658 = vmatprep.subr.bf16.mxu0 0
        %1659 = vmatpush1.bf16.msra.mxu0 0
        %1660 = vmatprep.subr.bf16.mxu0 0
        %1661 = vmatpush1.bf16.msra.mxu0 0
        %1662 = vmatprep.subr.bf16.mxu0 0
        %1663 = vmatpush1.bf16.msra.mxu0 0
        %1664 = vmatprep.subr.bf16.mxu0 0
        %1665 = vmatpush1.bf16.msra.mxu0 0
        %1666 = vmatprep.subr.bf16.mxu0 0
        %1667 = vmatpush1.bf16.msra.mxu0 0
        %1668 = vmatprep.subr.bf16.mxu0 0
        %1669 = vmatpush1.bf16.msra.mxu0 %v1652
        %1670 = vmatprep.subr.bf16.mxu0 0
        %1671 = vmatpush2.bf16.msra.mxu0 0
        %1672 = vmatprep.subr.bf16.mxu0 0
        %1673 = vmatpush2.bf16.msra.mxu0 0
        %1674 = vmatprep.subr.bf16.mxu0 0
        %1675 = vmatpush2.bf16.msra.mxu0 0
        %1676 = vmatprep.subr.bf16.mxu0 0
        %1677 = vmatpush2.bf16.msra.mxu0 0
        %1678 = vmatprep.subr.bf16.mxu0 0
        %1679 = vmatpush2.bf16.msra.mxu0 0
        %1680 = vmatprep.subr.bf16.mxu0 0
        %1681 = vmatpush2.bf16.msra.mxu0 0
        %1682 = vmatprep.subr.bf16.mxu0 0
        %1683 = vmatpush2.bf16.msra.mxu0 0
        %1684 = vmatprep.subr.bf16.mxu0 0
        %1685 = vmatpush2.bf16.msra.mxu0 0
        %1686 = vmatprep.mubr.bf16.mxu0 0
        %1687 = vmatmul.mubr.bf16.gmra.mxu0 %v1008
        %v1688 = vpop.f32.mrf.mxu0
        %v1689 = vadd.f32 0.0, %v1688
        %v1690 = vpop.f32.mrf.mxu0
        %v1691 = vpop.f32.mrf.mxu0
        %v1692 = vadd.f32 0.0, %v1691
        %v1693 = vpop.f32.mrf.mxu0
        %1694 = vmatprep.mubr.bf16.mxu0 0
        %1695 = vmatmul.mubr.bf16.gmra.mxu0 %v1011
        %v1696 = vpop.f32.mrf.mxu0
        %v1697 = vadd.f32 0.0, %v1696
        %v1698 = vpop.f32.mrf.mxu0
        %v1699 = vpop.f32.mrf.mxu0
        %v1700 = vadd.f32 0.0, %v1699
        %v1701 = vpop.f32.mrf.mxu0
        %1702 = vmatprep.mubr.bf16.mxu0 0
        %1703 = vmatmul.mubr.bf16.gmra.mxu0 %v1014
        %v1704 = vpop.f32.mrf.mxu0
        %v1705 = vadd.f32 0.0, %v1704
        %v1706 = vpop.f32.mrf.mxu0
        %v1707 = vpop.f32.mrf.mxu0
        %v1708 = vadd.f32 0.0, %v1707
        %v1709 = vpop.f32.mrf.mxu0
        %1710 = vmatprep.mubr.bf16.mxu0 0
        %1711 = vmatmul.mubr.bf16.gmra.mxu0 %v1017
        %v1712 = vpop.f32.mrf.mxu0
        %v1713 = vadd.f32 0.0, %v1712
        %v1714 = vpop.f32.mrf.mxu0
        %v1715 = vpop.f32.mrf.mxu0
        %v1716 = vadd.f32 0.0, %v1715
        %v1717 = vpop.f32.mrf.mxu0
        %1718 = vmatprep.mubr.bf16.mxu0 0
        %1719 = vmatmul.mubr.bf16.gmra.mxu0 %v1020
        %v1720 = vpop.f32.mrf.mxu0
        %v1721 = vadd.f32 0.0, %v1720
        %v1722 = vpop.f32.mrf.mxu0
        %v1723 = vpop.f32.mrf.mxu0
        %v1724 = vadd.f32 0.0, %v1723
        %v1725 = vpop.f32.mrf.mxu0
        %1726 = vmatprep.mubr.bf16.mxu0 0
        %1727 = vmatmul.mubr.bf16.gmra.mxu0 %v1023
        %v1728 = vpop.f32.mrf.mxu0
        %v1729 = vadd.f32 0.0, %v1728
        %v1730 = vpop.f32.mrf.mxu0
        %v1731 = vpop.f32.mrf.mxu0
        %v1732 = vadd.f32 0.0, %v1731
        %v1733 = vpop.f32.mrf.mxu0
        %1734 = vmatprep.mubr.bf16.mxu0 0
        %1735 = vmatmul.mubr.bf16.gmra.mxu0 %v1026
        %v1736 = vpop.f32.mrf.mxu0
        %v1737 = vadd.f32 0.0, %v1736
        %v1738 = vpop.f32.mrf.mxu0
        %v1739 = vpop.f32.mrf.mxu0
        %v1740 = vadd.f32 0.0, %v1739
        %v1741 = vpop.f32.mrf.mxu0
        %1742 = vmatprep.mubr.bf16.mxu0 0
        %1743 = vmatmul.mubr.bf16.gmra.mxu0 %v1029
        %v1744 = vpop.f32.mrf.mxu0
        %v1745 = vadd.f32 0.0, %v1744
        %v1746 = vpop.f32.mrf.mxu0
        %v1747 = vpop.f32.mrf.mxu0
        %v1748 = vadd.f32 0.0, %v1747
        %v1749 = vpop.f32.mrf.mxu0
        %1750 = vmatprep.mubr.bf16.mxu0 0
        %1751 = vmatmul.mubr.bf16.gmra.mxu0 %v1032
        %v1752 = vpop.f32.mrf.mxu0
        %v1753 = vadd.f32 0.0, %v1752
        %v1754 = vpop.f32.mrf.mxu0
        %v1755 = vpop.f32.mrf.mxu0
        %v1756 = vadd.f32 0.0, %v1755
        %v1757 = vpop.f32.mrf.mxu0
        %1758 = vmatprep.mubr.bf16.mxu0 0
        %1759 = vmatmul.mubr.bf16.gmra.mxu0 %v1035
        %v1760 = vpop.f32.mrf.mxu0
        %v1761 = vadd.f32 0.0, %v1760
        %v1762 = vpop.f32.mrf.mxu0
        %v1763 = vpop.f32.mrf.mxu0
        %v1764 = vadd.f32 0.0, %v1763
        %v1765 = vpop.f32.mrf.mxu0
        %1766 = vmatprep.mubr.bf16.mxu0 0
        %1767 = vmatmul.mubr.bf16.gmra.mxu0 %v1038
        %v1768 = vpop.f32.mrf.mxu0
        %v1769 = vadd.f32 0.0, %v1768
        %v1770 = vpop.f32.mrf.mxu0
        %v1771 = vpop.f32.mrf.mxu0
        %v1772 = vadd.f32 0.0, %v1771
        %v1773 = vpop.f32.mrf.mxu0
        %1774 = vmatprep.mubr.bf16.mxu0 0
        %1775 = vmatmul.mubr.bf16.gmra.mxu0 %v1041
        %v1776 = vpop.f32.mrf.mxu0
        %v1777 = vadd.f32 0.0, %v1776
        %v1778 = vpop.f32.mrf.mxu0
        %v1779 = vpop.f32.mrf.mxu0
        %v1780 = vadd.f32 0.0, %v1779
        %v1781 = vpop.f32.mrf.mxu0
        %1782 = vmatprep.mubr.bf16.mxu0 0
        %1783 = vmatmul.mubr.bf16.gmra.mxu0 %v1044
        %v1784 = vpop.f32.mrf.mxu0
        %v1785 = vadd.f32 0.0, %v1784
        %v1786 = vpop.f32.mrf.mxu0
        %v1787 = vpop.f32.mrf.mxu0
        %v1788 = vadd.f32 0.0, %v1787
        %v1789 = vpop.f32.mrf.mxu0
        %1790 = vmatprep.mubr.bf16.mxu0 0
        %1791 = vmatmul.mubr.bf16.gmra.mxu0 %v1047
        %v1792 = vpop.f32.mrf.mxu0
        %v1793 = vadd.f32 0.0, %v1792
        %v1794 = vpop.f32.mrf.mxu0
        %v1795 = vpop.f32.mrf.mxu0
        %v1796 = vadd.f32 0.0, %v1795
        %v1797 = vpop.f32.mrf.mxu0
        %1798 = vmatprep.mubr.bf16.mxu0 0
        %1799 = vmatmul.mubr.bf16.gmra.mxu0 %v1050
        %v1800 = vpop.f32.mrf.mxu0
        %v1801 = vadd.f32 0.0, %v1800
        %v1802 = vpop.f32.mrf.mxu0
        %v1803 = vpop.f32.mrf.mxu0
        %v1804 = vadd.f32 0.0, %v1803
        %v1805 = vpop.f32.mrf.mxu0
        %1806 = vmatprep.mubr.bf16.mxu0 0
        %1807 = vmatmul.mubr.bf16.gmra.mxu0 %v1649
        %v1808 = vpop.f32.mrf.mxu0
        %v1809 = vadd.f32 0.0, %v1808
        %v1810 = vpop.f32.mrf.mxu0
        %v1811 = vpop.f32.mrf.mxu0
        %v1812 = vadd.f32 0.0, %v1811
        %v1813 = vpop.f32.mrf.mxu0
        %1814 = vdwg.mxu0
        %v1815 = vadd.f32 %v1609, %v1689
        %v1816 = vadd.f32 %v1610, %v1692
        %v1817 = vadd.f32 %v1611, %v1697
        %v1818 = vadd.f32 %v1612, %v1700
        %v1819 = vadd.f32 %v1613, %v1705
        %v1820 = vadd.f32 %v1614, %v1708
        %v1821 = vadd.f32 %v1615, %v1713
        %v1822 = vadd.f32 %v1616, %v1716
        %v1823 = vadd.f32 %v1617, %v1721
        %v1824 = vadd.f32 %v1618, %v1724
        %v1825 = vadd.f32 %v1619, %v1729
        %v1826 = vadd.f32 %v1620, %v1732
        %v1827 = vadd.f32 %v1621, %v1737
        %v1828 = vadd.f32 %v1622, %v1740
        %v1829 = vadd.f32 %v1623, %v1745
        %v1830 = vadd.f32 %v1624, %v1748
        %v1831 = vadd.f32 %v1625, %v1753
        %v1832 = vadd.f32 %v1626, %v1756
        %v1833 = vadd.f32 %v1627, %v1761
        %v1834 = vadd.f32 %v1628, %v1764
        %v1835 = vadd.f32 %v1629, %v1769
        %v1836 = vadd.f32 %v1630, %v1772
        %v1837 = vadd.f32 %v1631, %v1777
        %v1838 = vadd.f32 %v1632, %v1780
        %v1839 = vadd.f32 %v1633, %v1785
        %v1840 = vadd.f32 %v1634, %v1788
        %v1841 = vadd.f32 %v1635, %v1793
        %v1842 = vadd.f32 %v1636, %v1796
        %v1843 = vadd.f32 %v1637, %v1801
        %v1844 = vadd.f32 %v1638, %v1804
        %v1845 = vadd.f32 %v1639, %v1809
        %v1846 = vadd.f32 %v1640, %v1812
        %v1848 = vshrl.u32 %v266, 16
        %v1850 = vrot.slane %v1848, 4
        %v1851 = vshll.u32 %v266, 16
        %v1853 = vrot.slane %v1851, 5
        %v1854 = vor.u32 %v1850, %v1853
        %v1855 = vrot.slane %v1854, 4
        %v1857 = vshll.u32 %v267, 16
        %v1859 = vrot.slane %v1857, 5
        %v1860 = vsel %vm275, %v1855, %v1859
        %v1861 = vshrl.u32 %v267, 16
        %v1863 = vrot.slane %v1861, 4
        %v1864 = vor.u32 %v1863, %v1859
        %v1865 = vrot.slane %v1864, 4
        %v1867 = vshll.u32 %v268, 16
        %v1869 = vrot.slane %v1867, 5
        %v1870 = vsel %vm275, %v1865, %v1869
        %s1871 = scalar_lea.vmem %s1, 16
        %v1872 = vld [vmem:[%s1871] sm:$0xf]
        %v1873 = vunpack.c.l.b16 %v1860
        %v1874 = vunpack.c.l.b16 %v1870
        %v1875 = vpack.c.b16 %v1874, %v1873
        %v1877 = vsel %vm710, %v1875, 0
        %v1880 = vsel %vm759, %v1872, 0
        %1882 = vmatprep.subr.bf16.mxu0 0
        %1883 = vmatpush1.bf16.msra.mxu0 0
        %1884 = vmatprep.subr.bf16.mxu0 0
        %1885 = vmatpush1.bf16.msra.mxu0 0
        %1886 = vmatprep.subr.bf16.mxu0 0
        %1887 = vmatpush1.bf16.msra.mxu0 0
        %1888 = vmatprep.subr.bf16.mxu0 0
        %1889 = vmatpush1.bf16.msra.mxu0 0
        %1890 = vmatprep.subr.bf16.mxu0 0
        %1891 = vmatpush1.bf16.msra.mxu0 0
        %1892 = vmatprep.subr.bf16.mxu0 0
        %1893 = vmatpush1.bf16.msra.mxu0 0
        %1894 = vmatprep.subr.bf16.mxu0 0
        %1895 = vmatpush1.bf16.msra.mxu0 0
        %1896 = vmatprep.subr.bf16.mxu0 0
        %1897 = vmatpush1.bf16.msra.mxu0 %v1880
        %1898 = vmatprep.subr.bf16.mxu0 0
        %1899 = vmatpush2.bf16.msra.mxu0 0
        %1900 = vmatprep.subr.bf16.mxu0 0
        %1901 = vmatpush2.bf16.msra.mxu0 0
        %1902 = vmatprep.subr.bf16.mxu0 0
        %1903 = vmatpush2.bf16.msra.mxu0 0
        %1904 = vmatprep.subr.bf16.mxu0 0
        %1905 = vmatpush2.bf16.msra.mxu0 0
        %1906 = vmatprep.subr.bf16.mxu0 0
        %1907 = vmatpush2.bf16.msra.mxu0 0
        %1908 = vmatprep.subr.bf16.mxu0 0
        %1909 = vmatpush2.bf16.msra.mxu0 0
        %1910 = vmatprep.subr.bf16.mxu0 0
        %1911 = vmatpush2.bf16.msra.mxu0 0
        %1912 = vmatprep.subr.bf16.mxu0 0
        %1913 = vmatpush2.bf16.msra.mxu0 0
        %1914 = vmatprep.mubr.bf16.mxu0 0
        %1915 = vmatmul.mubr.bf16.gmra.mxu0 %v715
        %v1916 = vpop.f32.mrf.mxu0
        %v1917 = vadd.f32 0.0, %v1916
        %v1918 = vpop.f32.mrf.mxu0
        %v1919 = vpop.f32.mrf.mxu0
        %v1920 = vadd.f32 0.0, %v1919
        %v1921 = vpop.f32.mrf.mxu0
        %1922 = vmatprep.mubr.bf16.mxu0 0
        %1923 = vmatmul.mubr.bf16.gmra.mxu0 %v718
        %v1924 = vpop.f32.mrf.mxu0
        %v1925 = vadd.f32 0.0, %v1924
        %v1926 = vpop.f32.mrf.mxu0
        %v1927 = vpop.f32.mrf.mxu0
        %v1928 = vadd.f32 0.0, %v1927
        %v1929 = vpop.f32.mrf.mxu0
        %1930 = vmatprep.mubr.bf16.mxu0 0
        %1931 = vmatmul.mubr.bf16.gmra.mxu0 %v721
        %v1932 = vpop.f32.mrf.mxu0
        %v1933 = vadd.f32 0.0, %v1932
        %v1934 = vpop.f32.mrf.mxu0
        %v1935 = vpop.f32.mrf.mxu0
        %v1936 = vadd.f32 0.0, %v1935
        %v1937 = vpop.f32.mrf.mxu0
        %1938 = vmatprep.mubr.bf16.mxu0 0
        %1939 = vmatmul.mubr.bf16.gmra.mxu0 %v724
        %v1940 = vpop.f32.mrf.mxu0
        %v1941 = vadd.f32 0.0, %v1940
        %v1942 = vpop.f32.mrf.mxu0
        %v1943 = vpop.f32.mrf.mxu0
        %v1944 = vadd.f32 0.0, %v1943
        %v1945 = vpop.f32.mrf.mxu0
        %1946 = vmatprep.mubr.bf16.mxu0 0
        %1947 = vmatmul.mubr.bf16.gmra.mxu0 %v727
        %v1948 = vpop.f32.mrf.mxu0
        %v1949 = vadd.f32 0.0, %v1948
        %v1950 = vpop.f32.mrf.mxu0
        %v1951 = vpop.f32.mrf.mxu0
        %v1952 = vadd.f32 0.0, %v1951
        %v1953 = vpop.f32.mrf.mxu0
        %1954 = vmatprep.mubr.bf16.mxu0 0
        %1955 = vmatmul.mubr.bf16.gmra.mxu0 %v730
        %v1956 = vpop.f32.mrf.mxu0
        %v1957 = vadd.f32 0.0, %v1956
        %v1958 = vpop.f32.mrf.mxu0
        %v1959 = vpop.f32.mrf.mxu0
        %v1960 = vadd.f32 0.0, %v1959
        %v1961 = vpop.f32.mrf.mxu0
        %1962 = vmatprep.mubr.bf16.mxu0 0
        %1963 = vmatmul.mubr.bf16.gmra.mxu0 %v733
        %v1964 = vpop.f32.mrf.mxu0
        %v1965 = vadd.f32 0.0, %v1964
        %v1966 = vpop.f32.mrf.mxu0
        %v1967 = vpop.f32.mrf.mxu0
        %v1968 = vadd.f32 0.0, %v1967
        %v1969 = vpop.f32.mrf.mxu0
        %1970 = vmatprep.mubr.bf16.mxu0 0
        %1971 = vmatmul.mubr.bf16.gmra.mxu0 %v736
        %v1972 = vpop.f32.mrf.mxu0
        %v1973 = vadd.f32 0.0, %v1972
        %v1974 = vpop.f32.mrf.mxu0
        %v1975 = vpop.f32.mrf.mxu0
        %v1976 = vadd.f32 0.0, %v1975
        %v1977 = vpop.f32.mrf.mxu0
        %1978 = vmatprep.mubr.bf16.mxu0 0
        %1979 = vmatmul.mubr.bf16.gmra.mxu0 %v739
        %v1980 = vpop.f32.mrf.mxu0
        %v1981 = vadd.f32 0.0, %v1980
        %v1982 = vpop.f32.mrf.mxu0
        %v1983 = vpop.f32.mrf.mxu0
        %v1984 = vadd.f32 0.0, %v1983
        %v1985 = vpop.f32.mrf.mxu0
        %1986 = vmatprep.mubr.bf16.mxu0 0
        %1987 = vmatmul.mubr.bf16.gmra.mxu0 %v742
        %v1988 = vpop.f32.mrf.mxu0
        %v1989 = vadd.f32 0.0, %v1988
        %v1990 = vpop.f32.mrf.mxu0
        %v1991 = vpop.f32.mrf.mxu0
        %v1992 = vadd.f32 0.0, %v1991
        %v1993 = vpop.f32.mrf.mxu0
        %1994 = vmatprep.mubr.bf16.mxu0 0
        %1995 = vmatmul.mubr.bf16.gmra.mxu0 %v745
        %v1996 = vpop.f32.mrf.mxu0
        %v1997 = vadd.f32 0.0, %v1996
        %v1998 = vpop.f32.mrf.mxu0
        %v1999 = vpop.f32.mrf.mxu0
        %v2000 = vadd.f32 0.0, %v1999
        %v2001 = vpop.f32.mrf.mxu0
        %2002 = vmatprep.mubr.bf16.mxu0 0
        %2003 = vmatmul.mubr.bf16.gmra.mxu0 %v748
        %v2004 = vpop.f32.mrf.mxu0
        %v2005 = vadd.f32 0.0, %v2004
        %v2006 = vpop.f32.mrf.mxu0
        %v2007 = vpop.f32.mrf.mxu0
        %v2008 = vadd.f32 0.0, %v2007
        %v2009 = vpop.f32.mrf.mxu0
        %2010 = vmatprep.mubr.bf16.mxu0 0
        %2011 = vmatmul.mubr.bf16.gmra.mxu0 %v751
        %v2012 = vpop.f32.mrf.mxu0
        %v2013 = vadd.f32 0.0, %v2012
        %v2014 = vpop.f32.mrf.mxu0
        %v2015 = vpop.f32.mrf.mxu0
        %v2016 = vadd.f32 0.0, %v2015
        %v2017 = vpop.f32.mrf.mxu0
        %2018 = vmatprep.mubr.bf16.mxu0 0
        %2019 = vmatmul.mubr.bf16.gmra.mxu0 %v754
        %v2020 = vpop.f32.mrf.mxu0
        %v2021 = vadd.f32 0.0, %v2020
        %v2022 = vpop.f32.mrf.mxu0
        %v2023 = vpop.f32.mrf.mxu0
        %v2024 = vadd.f32 0.0, %v2023
        %v2025 = vpop.f32.mrf.mxu0
        %2026 = vmatprep.mubr.bf16.mxu0 0
        %2027 = vmatmul.mubr.bf16.gmra.mxu0 %v757
        %v2028 = vpop.f32.mrf.mxu0
        %v2029 = vadd.f32 0.0, %v2028
        %v2030 = vpop.f32.mrf.mxu0
        %v2031 = vpop.f32.mrf.mxu0
        %v2032 = vadd.f32 0.0, %v2031
        %v2033 = vpop.f32.mrf.mxu0
        %2034 = vmatprep.mubr.bf16.mxu0 0
        %2035 = vmatmul.mubr.bf16.gmra.mxu0 %v1877
        %v2036 = vpop.f32.mrf.mxu0
        %v2037 = vadd.f32 0.0, %v2036
        %v2038 = vpop.f32.mrf.mxu0
        %v2039 = vpop.f32.mrf.mxu0
        %v2040 = vadd.f32 0.0, %v2039
        %v2041 = vpop.f32.mrf.mxu0
        %2042 = vdwg.mxu0
        %v2043 = vadd.f32 %v1815, %v1917
        %v2044 = vadd.f32 %v1816, %v1920
        %v2045 = vadd.f32 %v1817, %v1925
        %v2046 = vadd.f32 %v1818, %v1928
        %v2047 = vadd.f32 %v1819, %v1933
        %v2048 = vadd.f32 %v1820, %v1936
        %v2049 = vadd.f32 %v1821, %v1941
        %v2050 = vadd.f32 %v1822, %v1944
        %v2051 = vadd.f32 %v1823, %v1949
        %v2052 = vadd.f32 %v1824, %v1952
        %v2053 = vadd.f32 %v1825, %v1957
        %v2054 = vadd.f32 %v1826, %v1960
        %v2055 = vadd.f32 %v1827, %v1965
        %v2056 = vadd.f32 %v1828, %v1968
        %v2057 = vadd.f32 %v1829, %v1973
        %v2058 = vadd.f32 %v1830, %v1976
        %v2059 = vadd.f32 %v1831, %v1981
        %v2060 = vadd.f32 %v1832, %v1984
        %v2061 = vadd.f32 %v1833, %v1989
        %v2062 = vadd.f32 %v1834, %v1992
        %v2063 = vadd.f32 %v1835, %v1997
        %v2064 = vadd.f32 %v1836, %v2000
        %v2065 = vadd.f32 %v1837, %v2005
        %v2066 = vadd.f32 %v1838, %v2008
        %v2067 = vadd.f32 %v1839, %v2013
        %v2068 = vadd.f32 %v1840, %v2016
        %v2069 = vadd.f32 %v1841, %v2021
        %v2070 = vadd.f32 %v1842, %v2024
        %v2071 = vadd.f32 %v1843, %v2029
        %v2072 = vadd.f32 %v1844, %v2032
        %v2073 = vadd.f32 %v1845, %v2037
        %v2074 = vadd.f32 %v1846, %v2040
        %v2076 = vrot.slane %v266, 5
        %v2077 = vrot.slane %v2076, 4
        %v2078 = vrot.slane %v267, 5
        %v2079 = vsel %vm1234, %v2077, %v2078
        %v2080 = vrot.slane %v2078, 4
        %v2081 = vrot.slane %v268, 5
        %v2082 = vsel %vm1234, %v2080, %v2081
        %s2083 = scalar_lea.vmem %s1, 20
        %v2084 = vld [vmem:[%s2083] sm:$0xf]
        %v2085 = vunpack.c.l.b16 %v2079
        %v2086 = vunpack.c.l.b16 %v2082
        %v2087 = vpack.c.b16 %v2086, %v2085
        %v2089 = vsel %vm710, %v2087, 0
        %v2092 = vsel %vm759, %v2084, 0
        %2094 = vmatprep.subr.bf16.mxu0 0
        %2095 = vmatpush1.bf16.msra.mxu0 0
        %2096 = vmatprep.subr.bf16.mxu0 0
        %2097 = vmatpush1.bf16.msra.mxu0 0
        %2098 = vmatprep.subr.bf16.mxu0 0
        %2099 = vmatpush1.bf16.msra.mxu0 0
        %2100 = vmatprep.subr.bf16.mxu0 0
        %2101 = vmatpush1.bf16.msra.mxu0 0
        %2102 = vmatprep.subr.bf16.mxu0 0
        %2103 = vmatpush1.bf16.msra.mxu0 0
        %2104 = vmatprep.subr.bf16.mxu0 0
        %2105 = vmatpush1.bf16.msra.mxu0 0
        %2106 = vmatprep.subr.bf16.mxu0 0
        %2107 = vmatpush1.bf16.msra.mxu0 0
        %2108 = vmatprep.subr.bf16.mxu0 0
        %2109 = vmatpush1.bf16.msra.mxu0 %v2092
        %2110 = vmatprep.subr.bf16.mxu0 0
        %2111 = vmatpush2.bf16.msra.mxu0 0
        %2112 = vmatprep.subr.bf16.mxu0 0
        %2113 = vmatpush2.bf16.msra.mxu0 0
        %2114 = vmatprep.subr.bf16.mxu0 0
        %2115 = vmatpush2.bf16.msra.mxu0 0
        %2116 = vmatprep.subr.bf16.mxu0 0
        %2117 = vmatpush2.bf16.msra.mxu0 0
        %2118 = vmatprep.subr.bf16.mxu0 0
        %2119 = vmatpush2.bf16.msra.mxu0 0
        %2120 = vmatprep.subr.bf16.mxu0 0
        %2121 = vmatpush2.bf16.msra.mxu0 0
        %2122 = vmatprep.subr.bf16.mxu0 0
        %2123 = vmatpush2.bf16.msra.mxu0 0
        %2124 = vmatprep.subr.bf16.mxu0 0
        %2125 = vmatpush2.bf16.msra.mxu0 0
        %2126 = vmatprep.mubr.bf16.mxu0 0
        %2127 = vmatmul.mubr.bf16.gmra.mxu0 %v1401
        %v2128 = vpop.f32.mrf.mxu0
        %v2129 = vadd.f32 0.0, %v2128
        %v2130 = vpop.f32.mrf.mxu0
        %v2131 = vpop.f32.mrf.mxu0
        %v2132 = vadd.f32 0.0, %v2131
        %v2133 = vpop.f32.mrf.mxu0
        %2134 = vmatprep.mubr.bf16.mxu0 0
        %2135 = vmatmul.mubr.bf16.gmra.mxu0 %v1404
        %v2136 = vpop.f32.mrf.mxu0
        %v2137 = vadd.f32 0.0, %v2136
        %v2138 = vpop.f32.mrf.mxu0
        %v2139 = vpop.f32.mrf.mxu0
        %v2140 = vadd.f32 0.0, %v2139
        %v2141 = vpop.f32.mrf.mxu0
        %2142 = vmatprep.mubr.bf16.mxu0 0
        %2143 = vmatmul.mubr.bf16.gmra.mxu0 %v1407
        %v2144 = vpop.f32.mrf.mxu0
        %v2145 = vadd.f32 0.0, %v2144
        %v2146 = vpop.f32.mrf.mxu0
        %v2147 = vpop.f32.mrf.mxu0
        %v2148 = vadd.f32 0.0, %v2147
        %v2149 = vpop.f32.mrf.mxu0
        %2150 = vmatprep.mubr.bf16.mxu0 0
        %2151 = vmatmul.mubr.bf16.gmra.mxu0 %v1410
        %v2152 = vpop.f32.mrf.mxu0
        %v2153 = vadd.f32 0.0, %v2152
        %v2154 = vpop.f32.mrf.mxu0
        %v2155 = vpop.f32.mrf.mxu0
        %v2156 = vadd.f32 0.0, %v2155
        %v2157 = vpop.f32.mrf.mxu0
        %2158 = vmatprep.mubr.bf16.mxu0 0
        %2159 = vmatmul.mubr.bf16.gmra.mxu0 %v1413
        %v2160 = vpop.f32.mrf.mxu0
        %v2161 = vadd.f32 0.0, %v2160
        %v2162 = vpop.f32.mrf.mxu0
        %v2163 = vpop.f32.mrf.mxu0
        %v2164 = vadd.f32 0.0, %v2163
        %v2165 = vpop.f32.mrf.mxu0
        %2166 = vmatprep.mubr.bf16.mxu0 0
        %2167 = vmatmul.mubr.bf16.gmra.mxu0 %v1416
        %v2168 = vpop.f32.mrf.mxu0
        %v2169 = vadd.f32 0.0, %v2168
        %v2170 = vpop.f32.mrf.mxu0
        %v2171 = vpop.f32.mrf.mxu0
        %v2172 = vadd.f32 0.0, %v2171
        %v2173 = vpop.f32.mrf.mxu0
        %2174 = vmatprep.mubr.bf16.mxu0 0
        %2175 = vmatmul.mubr.bf16.gmra.mxu0 %v1419
        %v2176 = vpop.f32.mrf.mxu0
        %v2177 = vadd.f32 0.0, %v2176
        %v2178 = vpop.f32.mrf.mxu0
        %v2179 = vpop.f32.mrf.mxu0
        %v2180 = vadd.f32 0.0, %v2179
        %v2181 = vpop.f32.mrf.mxu0
        %2182 = vmatprep.mubr.bf16.mxu0 0
        %2183 = vmatmul.mubr.bf16.gmra.mxu0 %v1422
        %v2184 = vpop.f32.mrf.mxu0
        %v2185 = vadd.f32 0.0, %v2184
        %v2186 = vpop.f32.mrf.mxu0
        %v2187 = vpop.f32.mrf.mxu0
        %v2188 = vadd.f32 0.0, %v2187
        %v2189 = vpop.f32.mrf.mxu0
        %2190 = vmatprep.mubr.bf16.mxu0 0
        %2191 = vmatmul.mubr.bf16.gmra.mxu0 %v1425
        %v2192 = vpop.f32.mrf.mxu0
        %v2193 = vadd.f32 0.0, %v2192
        %v2194 = vpop.f32.mrf.mxu0
        %v2195 = vpop.f32.mrf.mxu0
        %v2196 = vadd.f32 0.0, %v2195
        %v2197 = vpop.f32.mrf.mxu0
        %2198 = vmatprep.mubr.bf16.mxu0 0
        %2199 = vmatmul.mubr.bf16.gmra.mxu0 %v1428
        %v2200 = vpop.f32.mrf.mxu0
        %v2201 = vadd.f32 0.0, %v2200
        %v2202 = vpop.f32.mrf.mxu0
        %v2203 = vpop.f32.mrf.mxu0
        %v2204 = vadd.f32 0.0, %v2203
        %v2205 = vpop.f32.mrf.mxu0
        %2206 = vmatprep.mubr.bf16.mxu0 0
        %2207 = vmatmul.mubr.bf16.gmra.mxu0 %v1431
        %v2208 = vpop.f32.mrf.mxu0
        %v2209 = vadd.f32 0.0, %v2208
        %v2210 = vpop.f32.mrf.mxu0
        %v2211 = vpop.f32.mrf.mxu0
        %v2212 = vadd.f32 0.0, %v2211
        %v2213 = vpop.f32.mrf.mxu0
        %2214 = vmatprep.mubr.bf16.mxu0 0
        %2215 = vmatmul.mubr.bf16.gmra.mxu0 %v1434
        %v2216 = vpop.f32.mrf.mxu0
        %v2217 = vadd.f32 0.0, %v2216
        %v2218 = vpop.f32.mrf.mxu0
        %v2219 = vpop.f32.mrf.mxu0
        %v2220 = vadd.f32 0.0, %v2219
        %v2221 = vpop.f32.mrf.mxu0
        %2222 = vmatprep.mubr.bf16.mxu0 0
        %2223 = vmatmul.mubr.bf16.gmra.mxu0 %v1437
        %v2224 = vpop.f32.mrf.mxu0
        %v2225 = vadd.f32 0.0, %v2224
        %v2226 = vpop.f32.mrf.mxu0
        %v2227 = vpop.f32.mrf.mxu0
        %v2228 = vadd.f32 0.0, %v2227
        %v2229 = vpop.f32.mrf.mxu0
        %2230 = vmatprep.mubr.bf16.mxu0 0
        %2231 = vmatmul.mubr.bf16.gmra.mxu0 %v1440
        %v2232 = vpop.f32.mrf.mxu0
        %v2233 = vadd.f32 0.0, %v2232
        %v2234 = vpop.f32.mrf.mxu0
        %v2235 = vpop.f32.mrf.mxu0
        %v2236 = vadd.f32 0.0, %v2235
        %v2237 = vpop.f32.mrf.mxu0
        %2238 = vmatprep.mubr.bf16.mxu0 0
        %2239 = vmatmul.mubr.bf16.gmra.mxu0 %v1443
        %v2240 = vpop.f32.mrf.mxu0
        %v2241 = vadd.f32 0.0, %v2240
        %v2242 = vpop.f32.mrf.mxu0
        %v2243 = vpop.f32.mrf.mxu0
        %v2244 = vadd.f32 0.0, %v2243
        %v2245 = vpop.f32.mrf.mxu0
        %2246 = vmatprep.mubr.bf16.mxu0 0
        %2247 = vmatmul.mubr.bf16.gmra.mxu0 %v2089
        %v2248 = vpop.f32.mrf.mxu0
        %v2249 = vadd.f32 0.0, %v2248
        %v2250 = vpop.f32.mrf.mxu0
        %v2251 = vpop.f32.mrf.mxu0
        %v2252 = vadd.f32 0.0, %v2251
        %v2253 = vpop.f32.mrf.mxu0
        %2254 = vdwg.mxu0
        %v2255 = vadd.f32 %v2043, %v2129
        %v2256 = vadd.f32 %v2044, %v2132
        %v2257 = vadd.f32 %v2045, %v2137
        %v2258 = vadd.f32 %v2046, %v2140
        %v2259 = vadd.f32 %v2047, %v2145
        %v2260 = vadd.f32 %v2048, %v2148
        %v2261 = vadd.f32 %v2049, %v2153
        %v2262 = vadd.f32 %v2050, %v2156
        %v2263 = vadd.f32 %v2051, %v2161
        %v2264 = vadd.f32 %v2052, %v2164
        %v2265 = vadd.f32 %v2053, %v2169
        %v2266 = vadd.f32 %v2054, %v2172
        %v2267 = vadd.f32 %v2055, %v2177
        %v2268 = vadd.f32 %v2056, %v2180
        %v2269 = vadd.f32 %v2057, %v2185
        %v2270 = vadd.f32 %v2058, %v2188
        %v2271 = vadd.f32 %v2059, %v2193
        %v2272 = vadd.f32 %v2060, %v2196
        %v2273 = vadd.f32 %v2061, %v2201
        %v2274 = vadd.f32 %v2062, %v2204
        %v2275 = vadd.f32 %v2063, %v2209
        %v2276 = vadd.f32 %v2064, %v2212
        %v2277 = vadd.f32 %v2065, %v2217
        %v2278 = vadd.f32 %v2066, %v2220
        %v2279 = vadd.f32 %v2067, %v2225
        %v2280 = vadd.f32 %v2068, %v2228
        %v2281 = vadd.f32 %v2069, %v2233
        %v2282 = vadd.f32 %v2070, %v2236
        %v2283 = vadd.f32 %v2071, %v2241
        %v2284 = vadd.f32 %v2072, %v2244
        %v2285 = vadd.f32 %v2073, %v2249
        %v2286 = vadd.f32 %v2074, %v2252
        %s2287 = scalar_lea.vmem %s1, 24
        %v2288 = vld [vmem:[%s2287] sm:$0xf]
        %v2291 = vunpack.c.l.b16 %v269
        %v2292 = vunpack.c.l.b16 %v270
        %v2293 = vpack.c.b16 %v2292, %v2291
        %v2295 = vsel %vm710, %v2293, 0
        %v2298 = vsel %vm759, %v2288, 0
        %2300 = vmatprep.subr.bf16.mxu0 0
        %2301 = vmatpush1.bf16.msra.mxu0 0
        %2302 = vmatprep.subr.bf16.mxu0 0
        %2303 = vmatpush1.bf16.msra.mxu0 0
        %2304 = vmatprep.subr.bf16.mxu0 0
        %2305 = vmatpush1.bf16.msra.mxu0 0
        %2306 = vmatprep.subr.bf16.mxu0 0
        %2307 = vmatpush1.bf16.msra.mxu0 0
        %2308 = vmatprep.subr.bf16.mxu0 0
        %2309 = vmatpush1.bf16.msra.mxu0 0
        %2310 = vmatprep.subr.bf16.mxu0 0
        %2311 = vmatpush1.bf16.msra.mxu0 0
        %2312 = vmatprep.subr.bf16.mxu0 0
        %2313 = vmatpush1.bf16.msra.mxu0 0
        %2314 = vmatprep.subr.bf16.mxu0 0
        %2315 = vmatpush1.bf16.msra.mxu0 %v2298
        %2316 = vmatprep.subr.bf16.mxu0 0
        %2317 = vmatpush2.bf16.msra.mxu0 0
        %2318 = vmatprep.subr.bf16.mxu0 0
        %2319 = vmatpush2.bf16.msra.mxu0 0
        %2320 = vmatprep.subr.bf16.mxu0 0
        %2321 = vmatpush2.bf16.msra.mxu0 0
        %2322 = vmatprep.subr.bf16.mxu0 0
        %2323 = vmatpush2.bf16.msra.mxu0 0
        %2324 = vmatprep.subr.bf16.mxu0 0
        %2325 = vmatpush2.bf16.msra.mxu0 0
        %2326 = vmatprep.subr.bf16.mxu0 0
        %2327 = vmatpush2.bf16.msra.mxu0 0
        %2328 = vmatprep.subr.bf16.mxu0 0
        %2329 = vmatpush2.bf16.msra.mxu0 0
        %2330 = vmatprep.subr.bf16.mxu0 0
        %2331 = vmatpush2.bf16.msra.mxu0 0
        %2332 = vmatprep.mubr.bf16.mxu0 0
        %2333 = vmatmul.mubr.bf16.gmra.mxu0 %v1011
        %v2334 = vpop.f32.mrf.mxu0
        %v2335 = vadd.f32 0.0, %v2334
        %v2336 = vpop.f32.mrf.mxu0
        %v2337 = vpop.f32.mrf.mxu0
        %v2338 = vadd.f32 0.0, %v2337
        %v2339 = vpop.f32.mrf.mxu0
        %2340 = vmatprep.mubr.bf16.mxu0 0
        %2341 = vmatmul.mubr.bf16.gmra.mxu0 %v1014
        %v2342 = vpop.f32.mrf.mxu0
        %v2343 = vadd.f32 0.0, %v2342
        %v2344 = vpop.f32.mrf.mxu0
        %v2345 = vpop.f32.mrf.mxu0
        %v2346 = vadd.f32 0.0, %v2345
        %v2347 = vpop.f32.mrf.mxu0
        %2348 = vmatprep.mubr.bf16.mxu0 0
        %2349 = vmatmul.mubr.bf16.gmra.mxu0 %v1017
        %v2350 = vpop.f32.mrf.mxu0
        %v2351 = vadd.f32 0.0, %v2350
        %v2352 = vpop.f32.mrf.mxu0
        %v2353 = vpop.f32.mrf.mxu0
        %v2354 = vadd.f32 0.0, %v2353
        %v2355 = vpop.f32.mrf.mxu0
        %2356 = vmatprep.mubr.bf16.mxu0 0
        %2357 = vmatmul.mubr.bf16.gmra.mxu0 %v1020
        %v2358 = vpop.f32.mrf.mxu0
        %v2359 = vadd.f32 0.0, %v2358
        %v2360 = vpop.f32.mrf.mxu0
        %v2361 = vpop.f32.mrf.mxu0
        %v2362 = vadd.f32 0.0, %v2361
        %v2363 = vpop.f32.mrf.mxu0
        %2364 = vmatprep.mubr.bf16.mxu0 0
        %2365 = vmatmul.mubr.bf16.gmra.mxu0 %v1023
        %v2366 = vpop.f32.mrf.mxu0
        %v2367 = vadd.f32 0.0, %v2366
        %v2368 = vpop.f32.mrf.mxu0
        %v2369 = vpop.f32.mrf.mxu0
        %v2370 = vadd.f32 0.0, %v2369
        %v2371 = vpop.f32.mrf.mxu0
        %2372 = vmatprep.mubr.bf16.mxu0 0
        %2373 = vmatmul.mubr.bf16.gmra.mxu0 %v1026
        %v2374 = vpop.f32.mrf.mxu0
        %v2375 = vadd.f32 0.0, %v2374
        %v2376 = vpop.f32.mrf.mxu0
        %v2377 = vpop.f32.mrf.mxu0
        %v2378 = vadd.f32 0.0, %v2377
        %v2379 = vpop.f32.mrf.mxu0
        %2380 = vmatprep.mubr.bf16.mxu0 0
        %2381 = vmatmul.mubr.bf16.gmra.mxu0 %v1029
        %v2382 = vpop.f32.mrf.mxu0
        %v2383 = vadd.f32 0.0, %v2382
        %v2384 = vpop.f32.mrf.mxu0
        %v2385 = vpop.f32.mrf.mxu0
        %v2386 = vadd.f32 0.0, %v2385
        %v2387 = vpop.f32.mrf.mxu0
        %2388 = vmatprep.mubr.bf16.mxu0 0
        %2389 = vmatmul.mubr.bf16.gmra.mxu0 %v1032
        %v2390 = vpop.f32.mrf.mxu0
        %v2391 = vadd.f32 0.0, %v2390
        %v2392 = vpop.f32.mrf.mxu0
        %v2393 = vpop.f32.mrf.mxu0
        %v2394 = vadd.f32 0.0, %v2393
        %v2395 = vpop.f32.mrf.mxu0
        %2396 = vmatprep.mubr.bf16.mxu0 0
        %2397 = vmatmul.mubr.bf16.gmra.mxu0 %v1035
        %v2398 = vpop.f32.mrf.mxu0
        %v2399 = vadd.f32 0.0, %v2398
        %v2400 = vpop.f32.mrf.mxu0
        %v2401 = vpop.f32.mrf.mxu0
        %v2402 = vadd.f32 0.0, %v2401
        %v2403 = vpop.f32.mrf.mxu0
        %2404 = vmatprep.mubr.bf16.mxu0 0
        %2405 = vmatmul.mubr.bf16.gmra.mxu0 %v1038
        %v2406 = vpop.f32.mrf.mxu0
        %v2407 = vadd.f32 0.0, %v2406
        %v2408 = vpop.f32.mrf.mxu0
        %v2409 = vpop.f32.mrf.mxu0
        %v2410 = vadd.f32 0.0, %v2409
        %v2411 = vpop.f32.mrf.mxu0
        %2412 = vmatprep.mubr.bf16.mxu0 0
        %2413 = vmatmul.mubr.bf16.gmra.mxu0 %v1041
        %v2414 = vpop.f32.mrf.mxu0
        %v2415 = vadd.f32 0.0, %v2414
        %v2416 = vpop.f32.mrf.mxu0
        %v2417 = vpop.f32.mrf.mxu0
        %v2418 = vadd.f32 0.0, %v2417
        %v2419 = vpop.f32.mrf.mxu0
        %2420 = vmatprep.mubr.bf16.mxu0 0
        %2421 = vmatmul.mubr.bf16.gmra.mxu0 %v1044
        %v2422 = vpop.f32.mrf.mxu0
        %v2423 = vadd.f32 0.0, %v2422
        %v2424 = vpop.f32.mrf.mxu0
        %v2425 = vpop.f32.mrf.mxu0
        %v2426 = vadd.f32 0.0, %v2425
        %v2427 = vpop.f32.mrf.mxu0
        %2428 = vmatprep.mubr.bf16.mxu0 0
        %2429 = vmatmul.mubr.bf16.gmra.mxu0 %v1047
        %v2430 = vpop.f32.mrf.mxu0
        %v2431 = vadd.f32 0.0, %v2430
        %v2432 = vpop.f32.mrf.mxu0
        %v2433 = vpop.f32.mrf.mxu0
        %v2434 = vadd.f32 0.0, %v2433
        %v2435 = vpop.f32.mrf.mxu0
        %2436 = vmatprep.mubr.bf16.mxu0 0
        %2437 = vmatmul.mubr.bf16.gmra.mxu0 %v1050
        %v2438 = vpop.f32.mrf.mxu0
        %v2439 = vadd.f32 0.0, %v2438
        %v2440 = vpop.f32.mrf.mxu0
        %v2441 = vpop.f32.mrf.mxu0
        %v2442 = vadd.f32 0.0, %v2441
        %v2443 = vpop.f32.mrf.mxu0
        %2444 = vmatprep.mubr.bf16.mxu0 0
        %2445 = vmatmul.mubr.bf16.gmra.mxu0 %v1649
        %v2446 = vpop.f32.mrf.mxu0
        %v2447 = vadd.f32 0.0, %v2446
        %v2448 = vpop.f32.mrf.mxu0
        %v2449 = vpop.f32.mrf.mxu0
        %v2450 = vadd.f32 0.0, %v2449
        %v2451 = vpop.f32.mrf.mxu0
        %2452 = vmatprep.mubr.bf16.mxu0 0
        %2453 = vmatmul.mubr.bf16.gmra.mxu0 %v2295
        %v2454 = vpop.f32.mrf.mxu0
        %v2455 = vadd.f32 0.0, %v2454
        %v2456 = vpop.f32.mrf.mxu0
        %v2457 = vpop.f32.mrf.mxu0
        %v2458 = vadd.f32 0.0, %v2457
        %v2459 = vpop.f32.mrf.mxu0
        %2460 = vdwg.mxu0
        %v2461 = vadd.f32 %v2255, %v2335
        %v2462 = vadd.f32 %v2256, %v2338
        %v2463 = vadd.f32 %v2257, %v2343
        %v2464 = vadd.f32 %v2258, %v2346
        %v2465 = vadd.f32 %v2259, %v2351
        %v2466 = vadd.f32 %v2260, %v2354
        %v2467 = vadd.f32 %v2261, %v2359
        %v2468 = vadd.f32 %v2262, %v2362
        %v2469 = vadd.f32 %v2263, %v2367
        %v2470 = vadd.f32 %v2264, %v2370
        %v2471 = vadd.f32 %v2265, %v2375
        %v2472 = vadd.f32 %v2266, %v2378
        %v2473 = vadd.f32 %v2267, %v2383
        %v2474 = vadd.f32 %v2268, %v2386
        %v2475 = vadd.f32 %v2269, %v2391
        %v2476 = vadd.f32 %v2270, %v2394
        %v2477 = vadd.f32 %v2271, %v2399
        %v2478 = vadd.f32 %v2272, %v2402
        %v2479 = vadd.f32 %v2273, %v2407
        %v2480 = vadd.f32 %v2274, %v2410
        %v2481 = vadd.f32 %v2275, %v2415
        %v2482 = vadd.f32 %v2276, %v2418
        %v2483 = vadd.f32 %v2277, %v2423
        %v2484 = vadd.f32 %v2278, %v2426
        %v2485 = vadd.f32 %v2279, %v2431
        %v2486 = vadd.f32 %v2280, %v2434
        %v2487 = vadd.f32 %v2281, %v2439
        %v2488 = vadd.f32 %v2282, %v2442
        %v2489 = vadd.f32 %v2283, %v2447
        %v2490 = vadd.f32 %v2284, %v2450
        %v2491 = vadd.f32 %v2285, %v2455
        %v2492 = vadd.f32 %v2286, %v2458
        %v2494 = vshrl.u32 %v269, 16
        %v2496 = vrot.slane %v2494, 4
        %v2497 = vshll.u32 %v269, 16
        %v2499 = vrot.slane %v2497, 5
        %v2500 = vor.u32 %v2496, %v2499
        %v2501 = vrot.slane %v2500, 4
        %v2503 = vshll.u32 %v270, 16
        %v2505 = vrot.slane %v2503, 5
        %v2506 = vsel %vm275, %v2501, %v2505
        %v2507 = vshrl.u32 %v270, 16
        %v2509 = vrot.slane %v2507, 4
        %v2510 = vor.u32 %v2509, %v2505
        %v2511 = vrot.slane %v2510, 4
        %v2513 = vshll.u32 %v271, 16
        %v2515 = vrot.slane %v2513, 5
        %v2516 = vsel %vm275, %v2511, %v2515
        %s2517 = scalar_lea.vmem %s1, 28
        %v2518 = vld [vmem:[%s2517] sm:$0xf]
        %v2519 = vunpack.c.l.b16 %v2506
        %v2520 = vunpack.c.l.b16 %v2516
        %v2521 = vpack.c.b16 %v2520, %v2519
        %v2523 = vsel %vm710, %v2521, 0
        %v2526 = vsel %vm759, %v2518, 0
        %2528 = vmatprep.subr.bf16.mxu0 0
        %2529 = vmatpush1.bf16.msra.mxu0 0
        %2530 = vmatprep.subr.bf16.mxu0 0
        %2531 = vmatpush1.bf16.msra.mxu0 0
        %2532 = vmatprep.subr.bf16.mxu0 0
        %2533 = vmatpush1.bf16.msra.mxu0 0
        %2534 = vmatprep.subr.bf16.mxu0 0
        %2535 = vmatpush1.bf16.msra.mxu0 0
        %2536 = vmatprep.subr.bf16.mxu0 0
        %2537 = vmatpush1.bf16.msra.mxu0 0
        %2538 = vmatprep.subr.bf16.mxu0 0
        %2539 = vmatpush1.bf16.msra.mxu0 0
        %2540 = vmatprep.subr.bf16.mxu0 0
        %2541 = vmatpush1.bf16.msra.mxu0 0
        %2542 = vmatprep.subr.bf16.mxu0 0
        %2543 = vmatpush1.bf16.msra.mxu0 %v2526
        %2544 = vmatprep.subr.bf16.mxu0 0
        %2545 = vmatpush2.bf16.msra.mxu0 0
        %2546 = vmatprep.subr.bf16.mxu0 0
        %2547 = vmatpush2.bf16.msra.mxu0 0
        %2548 = vmatprep.subr.bf16.mxu0 0
        %2549 = vmatpush2.bf16.msra.mxu0 0
        %2550 = vmatprep.subr.bf16.mxu0 0
        %2551 = vmatpush2.bf16.msra.mxu0 0
        %2552 = vmatprep.subr.bf16.mxu0 0
        %2553 = vmatpush2.bf16.msra.mxu0 0
        %2554 = vmatprep.subr.bf16.mxu0 0
        %2555 = vmatpush2.bf16.msra.mxu0 0
        %2556 = vmatprep.subr.bf16.mxu0 0
        %2557 = vmatpush2.bf16.msra.mxu0 0
        %2558 = vmatprep.subr.bf16.mxu0 0
        %2559 = vmatpush2.bf16.msra.mxu0 0
        %2560 = vmatprep.mubr.bf16.mxu0 0
        %2561 = vmatmul.mubr.bf16.gmra.mxu0 %v718
        %v2562 = vpop.f32.mrf.mxu0
        %v2563 = vadd.f32 0.0, %v2562
        %v2564 = vpop.f32.mrf.mxu0
        %v2565 = vpop.f32.mrf.mxu0
        %v2566 = vadd.f32 0.0, %v2565
        %v2567 = vpop.f32.mrf.mxu0
        %2568 = vmatprep.mubr.bf16.mxu0 0
        %2569 = vmatmul.mubr.bf16.gmra.mxu0 %v721
        %v2570 = vpop.f32.mrf.mxu0
        %v2571 = vadd.f32 0.0, %v2570
        %v2572 = vpop.f32.mrf.mxu0
        %v2573 = vpop.f32.mrf.mxu0
        %v2574 = vadd.f32 0.0, %v2573
        %v2575 = vpop.f32.mrf.mxu0
        %2576 = vmatprep.mubr.bf16.mxu0 0
        %2577 = vmatmul.mubr.bf16.gmra.mxu0 %v724
        %v2578 = vpop.f32.mrf.mxu0
        %v2579 = vadd.f32 0.0, %v2578
        %v2580 = vpop.f32.mrf.mxu0
        %v2581 = vpop.f32.mrf.mxu0
        %v2582 = vadd.f32 0.0, %v2581
        %v2583 = vpop.f32.mrf.mxu0
        %2584 = vmatprep.mubr.bf16.mxu0 0
        %2585 = vmatmul.mubr.bf16.gmra.mxu0 %v727
        %v2586 = vpop.f32.mrf.mxu0
        %v2587 = vadd.f32 0.0, %v2586
        %v2588 = vpop.f32.mrf.mxu0
        %v2589 = vpop.f32.mrf.mxu0
        %v2590 = vadd.f32 0.0, %v2589
        %v2591 = vpop.f32.mrf.mxu0
        %2592 = vmatprep.mubr.bf16.mxu0 0
        %2593 = vmatmul.mubr.bf16.gmra.mxu0 %v730
        %v2594 = vpop.f32.mrf.mxu0
        %v2595 = vadd.f32 0.0, %v2594
        %v2596 = vpop.f32.mrf.mxu0
        %v2597 = vpop.f32.mrf.mxu0
        %v2598 = vadd.f32 0.0, %v2597
        %v2599 = vpop.f32.mrf.mxu0
        %2600 = vmatprep.mubr.bf16.mxu0 0
        %2601 = vmatmul.mubr.bf16.gmra.mxu0 %v733
        %v2602 = vpop.f32.mrf.mxu0
        %v2603 = vadd.f32 0.0, %v2602
        %v2604 = vpop.f32.mrf.mxu0
        %v2605 = vpop.f32.mrf.mxu0
        %v2606 = vadd.f32 0.0, %v2605
        %v2607 = vpop.f32.mrf.mxu0
        %2608 = vmatprep.mubr.bf16.mxu0 0
        %2609 = vmatmul.mubr.bf16.gmra.mxu0 %v736
        %v2610 = vpop.f32.mrf.mxu0
        %v2611 = vadd.f32 0.0, %v2610
        %v2612 = vpop.f32.mrf.mxu0
        %v2613 = vpop.f32.mrf.mxu0
        %v2614 = vadd.f32 0.0, %v2613
        %v2615 = vpop.f32.mrf.mxu0
        %2616 = vmatprep.mubr.bf16.mxu0 0
        %2617 = vmatmul.mubr.bf16.gmra.mxu0 %v739
        %v2618 = vpop.f32.mrf.mxu0
        %v2619 = vadd.f32 0.0, %v2618
        %v2620 = vpop.f32.mrf.mxu0
        %v2621 = vpop.f32.mrf.mxu0
        %v2622 = vadd.f32 0.0, %v2621
        %v2623 = vpop.f32.mrf.mxu0
        %2624 = vmatprep.mubr.bf16.mxu0 0
        %2625 = vmatmul.mubr.bf16.gmra.mxu0 %v742
        %v2626 = vpop.f32.mrf.mxu0
        %v2627 = vadd.f32 0.0, %v2626
        %v2628 = vpop.f32.mrf.mxu0
        %v2629 = vpop.f32.mrf.mxu0
        %v2630 = vadd.f32 0.0, %v2629
        %v2631 = vpop.f32.mrf.mxu0
        %2632 = vmatprep.mubr.bf16.mxu0 0
        %2633 = vmatmul.mubr.bf16.gmra.mxu0 %v745
        %v2634 = vpop.f32.mrf.mxu0
        %v2635 = vadd.f32 0.0, %v2634
        %v2636 = vpop.f32.mrf.mxu0
        %v2637 = vpop.f32.mrf.mxu0
        %v2638 = vadd.f32 0.0, %v2637
        %v2639 = vpop.f32.mrf.mxu0
        %2640 = vmatprep.mubr.bf16.mxu0 0
        %2641 = vmatmul.mubr.bf16.gmra.mxu0 %v748
        %v2642 = vpop.f32.mrf.mxu0
        %v2643 = vadd.f32 0.0, %v2642
        %v2644 = vpop.f32.mrf.mxu0
        %v2645 = vpop.f32.mrf.mxu0
        %v2646 = vadd.f32 0.0, %v2645
        %v2647 = vpop.f32.mrf.mxu0
        %2648 = vmatprep.mubr.bf16.mxu0 0
        %2649 = vmatmul.mubr.bf16.gmra.mxu0 %v751
        %v2650 = vpop.f32.mrf.mxu0
        %v2651 = vadd.f32 0.0, %v2650
        %v2652 = vpop.f32.mrf.mxu0
        %v2653 = vpop.f32.mrf.mxu0
        %v2654 = vadd.f32 0.0, %v2653
        %v2655 = vpop.f32.mrf.mxu0
        %2656 = vmatprep.mubr.bf16.mxu0 0
        %2657 = vmatmul.mubr.bf16.gmra.mxu0 %v754
        %v2658 = vpop.f32.mrf.mxu0
        %v2659 = vadd.f32 0.0, %v2658
        %v2660 = vpop.f32.mrf.mxu0
        %v2661 = vpop.f32.mrf.mxu0
        %v2662 = vadd.f32 0.0, %v2661
        %v2663 = vpop.f32.mrf.mxu0
        %2664 = vmatprep.mubr.bf16.mxu0 0
        %2665 = vmatmul.mubr.bf16.gmra.mxu0 %v757
        %v2666 = vpop.f32.mrf.mxu0
        %v2667 = vadd.f32 0.0, %v2666
        %v2668 = vpop.f32.mrf.mxu0
        %v2669 = vpop.f32.mrf.mxu0
        %v2670 = vadd.f32 0.0, %v2669
        %v2671 = vpop.f32.mrf.mxu0
        %2672 = vmatprep.mubr.bf16.mxu0 0
        %2673 = vmatmul.mubr.bf16.gmra.mxu0 %v1877
        %v2674 = vpop.f32.mrf.mxu0
        %v2675 = vadd.f32 0.0, %v2674
        %v2676 = vpop.f32.mrf.mxu0
        %v2677 = vpop.f32.mrf.mxu0
        %v2678 = vadd.f32 0.0, %v2677
        %v2679 = vpop.f32.mrf.mxu0
        %2680 = vmatprep.mubr.bf16.mxu0 0
        %2681 = vmatmul.mubr.bf16.gmra.mxu0 %v2523
        %v2682 = vpop.f32.mrf.mxu0
        %v2683 = vadd.f32 0.0, %v2682
        %v2684 = vpop.f32.mrf.mxu0
        %v2685 = vpop.f32.mrf.mxu0
        %v2686 = vadd.f32 0.0, %v2685
        %v2687 = vpop.f32.mrf.mxu0
        %2688 = vdwg.mxu0
        %v2689 = vadd.f32 %v2461, %v2563
        %v2690 = vadd.f32 %v2462, %v2566
        %v2691 = vadd.f32 %v2463, %v2571
        %v2692 = vadd.f32 %v2464, %v2574
        %v2693 = vadd.f32 %v2465, %v2579
        %v2694 = vadd.f32 %v2466, %v2582
        %v2695 = vadd.f32 %v2467, %v2587
        %v2696 = vadd.f32 %v2468, %v2590
        %v2697 = vadd.f32 %v2469, %v2595
        %v2698 = vadd.f32 %v2470, %v2598
        %v2699 = vadd.f32 %v2471, %v2603
        %v2700 = vadd.f32 %v2472, %v2606
        %v2701 = vadd.f32 %v2473, %v2611
        %v2702 = vadd.f32 %v2474, %v2614
        %v2703 = vadd.f32 %v2475, %v2619
        %v2704 = vadd.f32 %v2476, %v2622
        %v2705 = vadd.f32 %v2477, %v2627
        %v2706 = vadd.f32 %v2478, %v2630
        %v2707 = vadd.f32 %v2479, %v2635
        %v2708 = vadd.f32 %v2480, %v2638
        %v2709 = vadd.f32 %v2481, %v2643
        %v2710 = vadd.f32 %v2482, %v2646
        %v2711 = vadd.f32 %v2483, %v2651
        %v2712 = vadd.f32 %v2484, %v2654
        %v2713 = vadd.f32 %v2485, %v2659
        %v2714 = vadd.f32 %v2486, %v2662
        %v2715 = vadd.f32 %v2487, %v2667
        %v2716 = vadd.f32 %v2488, %v2670
        %v2717 = vadd.f32 %v2489, %v2675
        %v2718 = vadd.f32 %v2490, %v2678
        %v2719 = vadd.f32 %v2491, %v2683
        %v2720 = vadd.f32 %v2492, %v2686
        %v2722 = vrot.slane %v269, 5
        %v2723 = vrot.slane %v2722, 4
        %v2724 = vrot.slane %v270, 5
        %v2725 = vsel %vm1234, %v2723, %v2724
        %v2726 = vrot.slane %v2724, 4
        %v2727 = vrot.slane %v271, 5
        %v2728 = vsel %vm1234, %v2726, %v2727
        %s2729 = scalar_lea.vmem %s1, 32
        %v2730 = vld [vmem:[%s2729] sm:$0xf]
        %v2731 = vunpack.c.l.b16 %v2725
        %v2732 = vunpack.c.l.b16 %v2728
        %v2733 = vpack.c.b16 %v2732, %v2731
        %v2735 = vsel %vm710, %v2733, 0
        %v2738 = vsel %vm759, %v2730, 0
        %2740 = vmatprep.subr.bf16.mxu0 0
        %2741 = vmatpush1.bf16.msra.mxu0 0
        %2742 = vmatprep.subr.bf16.mxu0 0
        %2743 = vmatpush1.bf16.msra.mxu0 0
        %2744 = vmatprep.subr.bf16.mxu0 0
        %2745 = vmatpush1.bf16.msra.mxu0 0
        %2746 = vmatprep.subr.bf16.mxu0 0
        %2747 = vmatpush1.bf16.msra.mxu0 0
        %2748 = vmatprep.subr.bf16.mxu0 0
        %2749 = vmatpush1.bf16.msra.mxu0 0
        %2750 = vmatprep.subr.bf16.mxu0 0
        %2751 = vmatpush1.bf16.msra.mxu0 0
        %2752 = vmatprep.subr.bf16.mxu0 0
        %2753 = vmatpush1.bf16.msra.mxu0 0
        %2754 = vmatprep.subr.bf16.mxu0 0
        %2755 = vmatpush1.bf16.msra.mxu0 %v2738
        %2756 = vmatprep.subr.bf16.mxu0 0
        %2757 = vmatpush2.bf16.msra.mxu0 0
        %2758 = vmatprep.subr.bf16.mxu0 0
        %2759 = vmatpush2.bf16.msra.mxu0 0
        %2760 = vmatprep.subr.bf16.mxu0 0
        %2761 = vmatpush2.bf16.msra.mxu0 0
        %2762 = vmatprep.subr.bf16.mxu0 0
        %2763 = vmatpush2.bf16.msra.mxu0 0
        %2764 = vmatprep.subr.bf16.mxu0 0
        %2765 = vmatpush2.bf16.msra.mxu0 0
        %2766 = vmatprep.subr.bf16.mxu0 0
        %2767 = vmatpush2.bf16.msra.mxu0 0
        %2768 = vmatprep.subr.bf16.mxu0 0
        %2769 = vmatpush2.bf16.msra.mxu0 0
        %2770 = vmatprep.subr.bf16.mxu0 0
        %2771 = vmatpush2.bf16.msra.mxu0 0
        %2772 = vmatprep.mubr.bf16.mxu0 0
        %2773 = vmatmul.mubr.bf16.gmra.mxu0 %v1404
        %v2774 = vpop.f32.mrf.mxu0
        %v2775 = vadd.f32 0.0, %v2774
        %v2776 = vpop.f32.mrf.mxu0
        %v2777 = vpop.f32.mrf.mxu0
        %v2778 = vadd.f32 0.0, %v2777
        %v2779 = vpop.f32.mrf.mxu0
        %2780 = vmatprep.mubr.bf16.mxu0 0
        %2781 = vmatmul.mubr.bf16.gmra.mxu0 %v1407
        %v2782 = vpop.f32.mrf.mxu0
        %v2783 = vadd.f32 0.0, %v2782
        %v2784 = vpop.f32.mrf.mxu0
        %v2785 = vpop.f32.mrf.mxu0
        %v2786 = vadd.f32 0.0, %v2785
        %v2787 = vpop.f32.mrf.mxu0
        %2788 = vmatprep.mubr.bf16.mxu0 0
        %2789 = vmatmul.mubr.bf16.gmra.mxu0 %v1410
        %v2790 = vpop.f32.mrf.mxu0
        %v2791 = vadd.f32 0.0, %v2790
        %v2792 = vpop.f32.mrf.mxu0
        %v2793 = vpop.f32.mrf.mxu0
        %v2794 = vadd.f32 0.0, %v2793
        %v2795 = vpop.f32.mrf.mxu0
        %2796 = vmatprep.mubr.bf16.mxu0 0
        %2797 = vmatmul.mubr.bf16.gmra.mxu0 %v1413
        %v2798 = vpop.f32.mrf.mxu0
        %v2799 = vadd.f32 0.0, %v2798
        %v2800 = vpop.f32.mrf.mxu0
        %v2801 = vpop.f32.mrf.mxu0
        %v2802 = vadd.f32 0.0, %v2801
        %v2803 = vpop.f32.mrf.mxu0
        %2804 = vmatprep.mubr.bf16.mxu0 0
        %2805 = vmatmul.mubr.bf16.gmra.mxu0 %v1416
        %v2806 = vpop.f32.mrf.mxu0
        %v2807 = vadd.f32 0.0, %v2806
        %v2808 = vpop.f32.mrf.mxu0
        %v2809 = vpop.f32.mrf.mxu0
        %v2810 = vadd.f32 0.0, %v2809
        %v2811 = vpop.f32.mrf.mxu0
        %2812 = vmatprep.mubr.bf16.mxu0 0
        %2813 = vmatmul.mubr.bf16.gmra.mxu0 %v1419
        %v2814 = vpop.f32.mrf.mxu0
        %v2815 = vadd.f32 0.0, %v2814
        %v2816 = vpop.f32.mrf.mxu0
        %v2817 = vpop.f32.mrf.mxu0
        %v2818 = vadd.f32 0.0, %v2817
        %v2819 = vpop.f32.mrf.mxu0
        %2820 = vmatprep.mubr.bf16.mxu0 0
        %2821 = vmatmul.mubr.bf16.gmra.mxu0 %v1422
        %v2822 = vpop.f32.mrf.mxu0
        %v2823 = vadd.f32 0.0, %v2822
        %v2824 = vpop.f32.mrf.mxu0
        %v2825 = vpop.f32.mrf.mxu0
        %v2826 = vadd.f32 0.0, %v2825
        %v2827 = vpop.f32.mrf.mxu0
        %2828 = vmatprep.mubr.bf16.mxu0 0
        %2829 = vmatmul.mubr.bf16.gmra.mxu0 %v1425
        %v2830 = vpop.f32.mrf.mxu0
        %v2831 = vadd.f32 0.0, %v2830
        %v2832 = vpop.f32.mrf.mxu0
        %v2833 = vpop.f32.mrf.mxu0
        %v2834 = vadd.f32 0.0, %v2833
        %v2835 = vpop.f32.mrf.mxu0
        %2836 = vmatprep.mubr.bf16.mxu0 0
        %2837 = vmatmul.mubr.bf16.gmra.mxu0 %v1428
        %v2838 = vpop.f32.mrf.mxu0
        %v2839 = vadd.f32 0.0, %v2838
        %v2840 = vpop.f32.mrf.mxu0
        %v2841 = vpop.f32.mrf.mxu0
        %v2842 = vadd.f32 0.0, %v2841
        %v2843 = vpop.f32.mrf.mxu0
        %2844 = vmatprep.mubr.bf16.mxu0 0
        %2845 = vmatmul.mubr.bf16.gmra.mxu0 %v1431
        %v2846 = vpop.f32.mrf.mxu0
        %v2847 = vadd.f32 0.0, %v2846
        %v2848 = vpop.f32.mrf.mxu0
        %v2849 = vpop.f32.mrf.mxu0
        %v2850 = vadd.f32 0.0, %v2849
        %v2851 = vpop.f32.mrf.mxu0
        %2852 = vmatprep.mubr.bf16.mxu0 0
        %2853 = vmatmul.mubr.bf16.gmra.mxu0 %v1434
        %v2854 = vpop.f32.mrf.mxu0
        %v2855 = vadd.f32 0.0, %v2854
        %v2856 = vpop.f32.mrf.mxu0
        %v2857 = vpop.f32.mrf.mxu0
        %v2858 = vadd.f32 0.0, %v2857
        %v2859 = vpop.f32.mrf.mxu0
        %2860 = vmatprep.mubr.bf16.mxu0 0
        %2861 = vmatmul.mubr.bf16.gmra.mxu0 %v1437
        %v2862 = vpop.f32.mrf.mxu0
        %v2863 = vadd.f32 0.0, %v2862
        %v2864 = vpop.f32.mrf.mxu0
        %v2865 = vpop.f32.mrf.mxu0
        %v2866 = vadd.f32 0.0, %v2865
        %v2867 = vpop.f32.mrf.mxu0
        %2868 = vmatprep.mubr.bf16.mxu0 0
        %2869 = vmatmul.mubr.bf16.gmra.mxu0 %v1440
        %v2870 = vpop.f32.mrf.mxu0
        %v2871 = vadd.f32 0.0, %v2870
        %v2872 = vpop.f32.mrf.mxu0
        %v2873 = vpop.f32.mrf.mxu0
        %v2874 = vadd.f32 0.0, %v2873
        %v2875 = vpop.f32.mrf.mxu0
        %2876 = vmatprep.mubr.bf16.mxu0 0
        %2877 = vmatmul.mubr.bf16.gmra.mxu0 %v1443
        %v2878 = vpop.f32.mrf.mxu0
        %v2879 = vadd.f32 0.0, %v2878
        %v2880 = vpop.f32.mrf.mxu0
        %v2881 = vpop.f32.mrf.mxu0
        %v2882 = vadd.f32 0.0, %v2881
        %v2883 = vpop.f32.mrf.mxu0
        %2884 = vmatprep.mubr.bf16.mxu0 0
        %2885 = vmatmul.mubr.bf16.gmra.mxu0 %v2089
        %v2886 = vpop.f32.mrf.mxu0
        %v2887 = vadd.f32 0.0, %v2886
        %v2888 = vpop.f32.mrf.mxu0
        %v2889 = vpop.f32.mrf.mxu0
        %v2890 = vadd.f32 0.0, %v2889
        %v2891 = vpop.f32.mrf.mxu0
        %2892 = vmatprep.mubr.bf16.mxu0 0
        %2893 = vmatmul.mubr.bf16.gmra.mxu0 %v2735
        %v2894 = vpop.f32.mrf.mxu0
        %v2895 = vadd.f32 0.0, %v2894
        %v2896 = vpop.f32.mrf.mxu0
        %v2897 = vpop.f32.mrf.mxu0
        %v2898 = vadd.f32 0.0, %v2897
        %v2899 = vpop.f32.mrf.mxu0
        %2900 = vdwg.mxu0
        %v2901 = vadd.f32 %v2689, %v2775
        %v2902 = vadd.f32 %v2690, %v2778
        %v2903 = vadd.f32 %v2691, %v2783
        %v2904 = vadd.f32 %v2692, %v2786
        %v2905 = vadd.f32 %v2693, %v2791
        %v2906 = vadd.f32 %v2694, %v2794
        %v2907 = vadd.f32 %v2695, %v2799
        %v2908 = vadd.f32 %v2696, %v2802
        %v2909 = vadd.f32 %v2697, %v2807
        %v2910 = vadd.f32 %v2698, %v2810
        %v2911 = vadd.f32 %v2699, %v2815
        %v2912 = vadd.f32 %v2700, %v2818
        %v2913 = vadd.f32 %v2701, %v2823
        %v2914 = vadd.f32 %v2702, %v2826
        %v2915 = vadd.f32 %v2703, %v2831
        %v2916 = vadd.f32 %v2704, %v2834
        %v2917 = vadd.f32 %v2705, %v2839
        %v2918 = vadd.f32 %v2706, %v2842
        %v2919 = vadd.f32 %v2707, %v2847
        %v2920 = vadd.f32 %v2708, %v2850
        %v2921 = vadd.f32 %v2709, %v2855
        %v2922 = vadd.f32 %v2710, %v2858
        %v2923 = vadd.f32 %v2711, %v2863
        %v2924 = vadd.f32 %v2712, %v2866
        %v2925 = vadd.f32 %v2713, %v2871
        %v2926 = vadd.f32 %v2714, %v2874
        %v2927 = vadd.f32 %v2715, %v2879
        %v2928 = vadd.f32 %v2716, %v2882
        %v2929 = vadd.f32 %v2717, %v2887
        %v2930 = vadd.f32 %v2718, %v2890
        %v2931 = vadd.f32 %v2719, %v2895
        %v2932 = vadd.f32 %v2720, %v2898
        %v2933 = vpack.c.bf16 %v2902, %v2901
        %v2934 = vpack.c.bf16 %v2904, %v2903
        %v2935 = vpack.c.bf16 %v2906, %v2905
        %v2936 = vpack.c.bf16 %v2908, %v2907
        %v2937 = vpack.c.bf16 %v2910, %v2909
        %v2938 = vpack.c.bf16 %v2912, %v2911
        %v2939 = vpack.c.bf16 %v2914, %v2913
        %v2940 = vpack.c.bf16 %v2916, %v2915
        %v2941 = vpack.c.bf16 %v2918, %v2917
        %v2942 = vpack.c.bf16 %v2920, %v2919
        %v2943 = vpack.c.bf16 %v2922, %v2921
        %v2944 = vpack.c.bf16 %v2924, %v2923
        %v2945 = vpack.c.bf16 %v2926, %v2925
        %v2946 = vpack.c.bf16 %v2928, %v2927
        %v2947 = vpack.c.bf16 %v2930, %v2929
        %v2948 = vpack.c.bf16 %v2932, %v2931
        %v2965 = vunpack.c.l.b16 %v2933
        %v2966 = vunpack.c.h.b16 %v2933
        %v2967 = vunpack.c.l.b16 %v2934
        %v2968 = vunpack.c.h.b16 %v2934
        %v2969 = vunpack.c.l.b16 %v2935
        %v2970 = vunpack.c.h.b16 %v2935
        %v2971 = vunpack.c.l.b16 %v2936
        %v2972 = vunpack.c.h.b16 %v2936
        %v2973 = vunpack.c.l.b16 %v2937
        %v2974 = vunpack.c.h.b16 %v2937
        %v2975 = vunpack.c.l.b16 %v2938
        %v2976 = vunpack.c.h.b16 %v2938
        %v2977 = vunpack.c.l.b16 %v2939
        %v2978 = vunpack.c.h.b16 %v2939
        %v2979 = vunpack.c.l.b16 %v2940
        %v2980 = vunpack.c.h.b16 %v2940
        %v2981 = vunpack.c.l.b16 %v2941
        %v2982 = vunpack.c.h.b16 %v2941
        %v2983 = vunpack.c.l.b16 %v2942
        %v2984 = vunpack.c.h.b16 %v2942
        %v2985 = vunpack.c.l.b16 %v2943
        %v2986 = vunpack.c.h.b16 %v2943
        %v2987 = vunpack.c.l.b16 %v2944
        %v2988 = vunpack.c.h.b16 %v2944
        %v2989 = vunpack.c.l.b16 %v2945
        %v2990 = vunpack.c.h.b16 %v2945
        %v2991 = vunpack.c.l.b16 %v2946
        %v2992 = vunpack.c.h.b16 %v2946
        %v2993 = vunpack.c.l.b16 %v2947
        %v2994 = vunpack.c.h.b16 %v2947
        %v2995 = vunpack.c.l.b16 %v2948
        %v2996 = vunpack.c.h.b16 %v2948
        %v2997 = vpack.c.b16 %v2965, %v2965
        %v2998 = vpack.c.b16 %v2966, %v2966
        %v2999 = vpack.c.b16 %v2967, %v2967
        %v3000 = vpack.c.b16 %v2968, %v2968
        %v3001 = vpack.c.b16 %v2969, %v2969
        %v3002 = vpack.c.b16 %v2970, %v2970
        %v3003 = vpack.c.b16 %v2971, %v2971
        %v3004 = vpack.c.b16 %v2972, %v2972
        %v3005 = vpack.c.b16 %v2973, %v2973
        %v3006 = vpack.c.b16 %v2974, %v2974
        %v3007 = vpack.c.b16 %v2975, %v2975
        %v3008 = vpack.c.b16 %v2976, %v2976
        %v3009 = vpack.c.b16 %v2977, %v2977
        %v3010 = vpack.c.b16 %v2978, %v2978
        %v3011 = vpack.c.b16 %v2979, %v2979
        %v3012 = vpack.c.b16 %v2980, %v2980
        %v3013 = vpack.c.b16 %v2981, %v2981
        %v3014 = vpack.c.b16 %v2982, %v2982
        %v3015 = vpack.c.b16 %v2983, %v2983
        %v3016 = vpack.c.b16 %v2984, %v2984
        %v3017 = vpack.c.b16 %v2985, %v2985
        %v3018 = vpack.c.b16 %v2986, %v2986
        %v3019 = vpack.c.b16 %v2987, %v2987
        %v3020 = vpack.c.b16 %v2988, %v2988
        %v3021 = vpack.c.b16 %v2989, %v2989
        %v3022 = vpack.c.b16 %v2990, %v2990
        %v3023 = vpack.c.b16 %v2991, %v2991
        %v3024 = vpack.c.b16 %v2992, %v2992
        %v3025 = vpack.c.b16 %v2993, %v2993
        %v3026 = vpack.c.b16 %v2994, %v2994
        %v3027 = vpack.c.b16 %v2995, %v2995
        %v3028 = vpack.c.b16 %v2996, %v2996
        %vm3061 = vcmask 60416
        %3062 = vst.msk [vmem:[%s216] sm:$0xf] %vm3061, %v2997
        %3063 = vst.msk [vmem:[%s216 + $0x4] sm:$0xf] %vm3061, %v2998
        %3064 = vst.msk [vmem:[%s216 + $0x8] sm:$0xf] %vm3061, %v2999
        %3065 = vst.msk [vmem:[%s216 + $0xc] sm:$0xf] %vm3061, %v3000
        %3066 = vst.msk [vmem:[%s216 + $0x10] sm:$0xf] %vm3061, %v3001
        %3067 = vst.msk [vmem:[%s216 + $0x14] sm:$0xf] %vm3061, %v3002
        %3068 = vst.msk [vmem:[%s216 + $0x18] sm:$0xf] %vm3061, %v3003
        %3069 = vst.msk [vmem:[%s216 + $0x1c] sm:$0xf] %vm3061, %v3004
        %3070 = vst.msk [vmem:[%s216 + $0x20] sm:$0xf] %vm3061, %v3005
        %3071 = vst.msk [vmem:[%s216 + $0x24] sm:$0xf] %vm3061, %v3006
        %3072 = vst.msk [vmem:[%s216 + $0x28] sm:$0xf] %vm3061, %v3007
        %3073 = vst.msk [vmem:[%s216 + $0x2c] sm:$0xf] %vm3061, %v3008
        %3074 = vst.msk [vmem:[%s216 + $0x30] sm:$0xf] %vm3061, %v3009
        %3075 = vst.msk [vmem:[%s216 + $0x34] sm:$0xf] %vm3061, %v3010
        %3076 = vst.msk [vmem:[%s216 + $0x38] sm:$0xf] %vm3061, %v3011
        %3077 = vst.msk [vmem:[%s216 + $0x3c] sm:$0xf] %vm3061, %v3012
        %3078 = vst.msk [vmem:[%s216 + $0x40] sm:$0xf] %vm3061, %v3013
        %3079 = vst.msk [vmem:[%s216 + $0x44] sm:$0xf] %vm3061, %v3014
        %3080 = vst.msk [vmem:[%s216 + $0x48] sm:$0xf] %vm3061, %v3015
        %3081 = vst.msk [vmem:[%s216 + $0x4c] sm:$0xf] %vm3061, %v3016
        %3082 = vst.msk [vmem:[%s216 + $0x50] sm:$0xf] %vm3061, %v3017
        %3083 = vst.msk [vmem:[%s216 + $0x54] sm:$0xf] %vm3061, %v3018
        %3084 = vst.msk [vmem:[%s216 + $0x58] sm:$0xf] %vm3061, %v3019
        %3085 = vst.msk [vmem:[%s216 + $0x5c] sm:$0xf] %vm3061, %v3020
        %3086 = vst.msk [vmem:[%s216 + $0x60] sm:$0xf] %vm3061, %v3021
        %3087 = vst.msk [vmem:[%s216 + $0x64] sm:$0xf] %vm3061, %v3022
        %3088 = vst.msk [vmem:[%s216 + $0x68] sm:$0xf] %vm3061, %v3023
        %3089 = vst.msk [vmem:[%s216 + $0x6c] sm:$0xf] %vm3061, %v3024
        %3090 = vst.msk [vmem:[%s216 + $0x70] sm:$0xf] %vm3061, %v3025
        %3091 = vst.msk [vmem:[%s216 + $0x74] sm:$0xf] %vm3061, %v3026
        %3092 = vst.msk [vmem:[%s216 + $0x78] sm:$0xf] %vm3061, %v3027
        %3093 = vst.msk [vmem:[%s216 + $0x7c] sm:$0xf] %vm3061, %v3028
        %v3094 = vsel %vm710, %v2901, 0.0
        %v3095 = vsel %vm710, %v2902, 0.0
        %v3096 = vadd.f32 %v3094, %v3095
        %v3097 = vsel %vm710, %v2903, 0.0
        %v3098 = vadd.f32 %v3096, %v3097
        %v3099 = vsel %vm710, %v2904, 0.0
        %v3100 = vadd.f32 %v3098, %v3099
        %v3101 = vsel %vm710, %v2905, 0.0
        %v3102 = vadd.f32 %v3100, %v3101
        %v3103 = vsel %vm710, %v2906, 0.0
        %v3104 = vadd.f32 %v3102, %v3103
        %v3105 = vsel %vm710, %v2907, 0.0
        %v3106 = vadd.f32 %v3104, %v3105
        %v3107 = vsel %vm710, %v2908, 0.0
        %v3108 = vadd.f32 %v3106, %v3107
        %v3109 = vsel %vm710, %v2909, 0.0
        %v3110 = vadd.f32 %v3108, %v3109
        %v3111 = vsel %vm710, %v2910, 0.0
        %v3112 = vadd.f32 %v3110, %v3111
        %v3113 = vsel %vm710, %v2911, 0.0
        %v3114 = vadd.f32 %v3112, %v3113
        %v3115 = vsel %vm710, %v2912, 0.0
        %v3116 = vadd.f32 %v3114, %v3115
        %v3117 = vsel %vm710, %v2913, 0.0
        %v3118 = vadd.f32 %v3116, %v3117
        %v3119 = vsel %vm710, %v2914, 0.0
        %v3120 = vadd.f32 %v3118, %v3119
        %v3121 = vsel %vm710, %v2915, 0.0
        %v3122 = vadd.f32 %v3120, %v3121
        %v3123 = vsel %vm710, %v2916, 0.0
        %v3124 = vadd.f32 %v3122, %v3123
        %v3125 = vsel %vm710, %v2917, 0.0
        %v3126 = vadd.f32 %v3124, %v3125
        %v3127 = vsel %vm710, %v2918, 0.0
        %v3128 = vadd.f32 %v3126, %v3127
        %v3129 = vsel %vm710, %v2919, 0.0
        %v3130 = vadd.f32 %v3128, %v3129
        %v3131 = vsel %vm710, %v2920, 0.0
        %v3132 = vadd.f32 %v3130, %v3131
        %v3133 = vsel %vm710, %v2921, 0.0
        %v3134 = vadd.f32 %v3132, %v3133
        %v3135 = vsel %vm710, %v2922, 0.0
        %v3136 = vadd.f32 %v3134, %v3135
        %v3137 = vsel %vm710, %v2923, 0.0
        %v3138 = vadd.f32 %v3136, %v3137
        %v3139 = vsel %vm710, %v2924, 0.0
        %v3140 = vadd.f32 %v3138, %v3139
        %v3141 = vsel %vm710, %v2925, 0.0
        %v3142 = vadd.f32 %v3140, %v3141
        %v3143 = vsel %vm710, %v2926, 0.0
        %v3144 = vadd.f32 %v3142, %v3143
        %v3145 = vsel %vm710, %v2927, 0.0
        %v3146 = vadd.f32 %v3144, %v3145
        %v3147 = vsel %vm710, %v2928, 0.0
        %v3148 = vadd.f32 %v3146, %v3147
        %v3149 = vsel %vm710, %v2929, 0.0
        %v3150 = vadd.f32 %v3148, %v3149
        %v3151 = vsel %vm710, %v2930, 0.0
        %v3152 = vadd.f32 %v3150, %v3151
        %v3153 = vsel %vm710, %v2931, 0.0
        %v3154 = vadd.f32 %v3152, %v3153
        %v3155 = vsel %vm710, %v2932, 0.0
        %v3156 = vadd.f32 %v3154, %v3155
        %v3157 = vrot.slane %v3156, 4
        %v3158 = vadd.f32 %v3156, %v3157
        %v3159 = vrot.slane %v3158, 2
        %v3160 = vadd.f32 %v3158, %v3159
        %v3161 = vrot.slane %v3160, 1
        %v3162 = vadd.f32 %v3160, %v3161
        %vm3163 = vcmask 57344
        %3164 = vst.msk [vmem:[%s200] sm:$0x1] %vm3163, %v3162
        %v3165 = vmul.f32 %v2901, %v2901
        %v3166 = vmul.f32 %v2902, %v2902
        %v3167 = vmul.f32 %v2903, %v2903
        %v3168 = vmul.f32 %v2904, %v2904
        %v3169 = vmul.f32 %v2905, %v2905
        %v3170 = vmul.f32 %v2906, %v2906
        %v3171 = vmul.f32 %v2907, %v2907
        %v3172 = vmul.f32 %v2908, %v2908
        %v3173 = vmul.f32 %v2909, %v2909
        %v3174 = vmul.f32 %v2910, %v2910
        %v3175 = vmul.f32 %v2911, %v2911
        %v3176 = vmul.f32 %v2912, %v2912
        %v3177 = vmul.f32 %v2913, %v2913
        %v3178 = vmul.f32 %v2914, %v2914
        %v3179 = vmul.f32 %v2915, %v2915
        %v3180 = vmul.f32 %v2916, %v2916
        %v3181 = vmul.f32 %v2917, %v2917
        %v3182 = vmul.f32 %v2918, %v2918
        %v3183 = vmul.f32 %v2919, %v2919
        %v3184 = vmul.f32 %v2920, %v2920
        %v3185 = vmul.f32 %v2921, %v2921
        %v3186 = vmul.f32 %v2922, %v2922
        %v3187 = vmul.f32 %v2923, %v2923
        %v3188 = vmul.f32 %v2924, %v2924
        %v3189 = vmul.f32 %v2925, %v2925
        %v3190 = vmul.f32 %v2926, %v2926
        %v3191 = vmul.f32 %v2927, %v2927
        %v3192 = vmul.f32 %v2928, %v2928
        %v3193 = vmul.f32 %v2929, %v2929
        %v3194 = vmul.f32 %v2930, %v2930
        %v3195 = vmul.f32 %v2931, %v2931
        %v3196 = vmul.f32 %v2932, %v2932
        %v3197 = vsel %vm710, %v3165, 0.0
        %v3198 = vsel %vm710, %v3166, 0.0
        %v3199 = vadd.f32 %v3197, %v3198
        %v3200 = vsel %vm710, %v3167, 0.0
        %v3201 = vadd.f32 %v3199, %v3200
        %v3202 = vsel %vm710, %v3168, 0.0
        %v3203 = vadd.f32 %v3201, %v3202
        %v3204 = vsel %vm710, %v3169, 0.0
        %v3205 = vadd.f32 %v3203, %v3204
        %v3206 = vsel %vm710, %v3170, 0.0
        %v3207 = vadd.f32 %v3205, %v3206
        %v3208 = vsel %vm710, %v3171, 0.0
        %v3209 = vadd.f32 %v3207, %v3208
        %v3210 = vsel %vm710, %v3172, 0.0
        %v3211 = vadd.f32 %v3209, %v3210
        %v3212 = vsel %vm710, %v3173, 0.0
        %v3213 = vadd.f32 %v3211, %v3212
        %v3214 = vsel %vm710, %v3174, 0.0
        %v3215 = vadd.f32 %v3213, %v3214
        %v3216 = vsel %vm710, %v3175, 0.0
        %v3217 = vadd.f32 %v3215, %v3216
        %v3218 = vsel %vm710, %v3176, 0.0
        %v3219 = vadd.f32 %v3217, %v3218
        %v3220 = vsel %vm710, %v3177, 0.0
        %v3221 = vadd.f32 %v3219, %v3220
        %v3222 = vsel %vm710, %v3178, 0.0
        %v3223 = vadd.f32 %v3221, %v3222
        %v3224 = vsel %vm710, %v3179, 0.0
        %v3225 = vadd.f32 %v3223, %v3224
        %v3226 = vsel %vm710, %v3180, 0.0
        %v3227 = vadd.f32 %v3225, %v3226
        %v3228 = vsel %vm710, %v3181, 0.0
        %v3229 = vadd.f32 %v3227, %v3228
        %v3230 = vsel %vm710, %v3182, 0.0
        %v3231 = vadd.f32 %v3229, %v3230
        %v3232 = vsel %vm710, %v3183, 0.0
        %v3233 = vadd.f32 %v3231, %v3232
        %v3234 = vsel %vm710, %v3184, 0.0
        %v3235 = vadd.f32 %v3233, %v3234
        %v3236 = vsel %vm710, %v3185, 0.0
        %v3237 = vadd.f32 %v3235, %v3236
        %v3238 = vsel %vm710, %v3186, 0.0
        %v3239 = vadd.f32 %v3237, %v3238
        %v3240 = vsel %vm710, %v3187, 0.0
        %v3241 = vadd.f32 %v3239, %v3240
        %v3242 = vsel %vm710, %v3188, 0.0
        %v3243 = vadd.f32 %v3241, %v3242
        %v3244 = vsel %vm710, %v3189, 0.0
        %v3245 = vadd.f32 %v3243, %v3244
        %v3246 = vsel %vm710, %v3190, 0.0
        %v3247 = vadd.f32 %v3245, %v3246
        %v3248 = vsel %vm710, %v3191, 0.0
        %v3249 = vadd.f32 %v3247, %v3248
        %v3250 = vsel %vm710, %v3192, 0.0
        %v3251 = vadd.f32 %v3249, %v3250
        %v3252 = vsel %vm710, %v3193, 0.0
        %v3253 = vadd.f32 %v3251, %v3252
        %v3254 = vsel %vm710, %v3194, 0.0
        %v3255 = vadd.f32 %v3253, %v3254
        %v3256 = vsel %vm710, %v3195, 0.0
        %v3257 = vadd.f32 %v3255, %v3256
        %v3258 = vsel %vm710, %v3196, 0.0
        %v3259 = vadd.f32 %v3257, %v3258
        %v3260 = vrot.slane %v3259, 4
        %v3261 = vadd.f32 %v3259, %v3260
        %v3262 = vrot.slane %v3261, 2
        %v3263 = vadd.f32 %v3261, %v3262
        %v3264 = vrot.slane %v3263, 1
        %v3265 = vadd.f32 %v3263, %v3264
        %3266 = vst.msk [vmem:[%s206] sm:$0x1] %vm3163, %v3265
        %p3267 = scmp.lt.s32.totalorder %s22, 1
        %s3268 = scalar_select %p3267, %s22, 1
        %s3269 = smul.addr %s3268, 32
        %s3270 = smul.addr %s3269, 4
        %s3271 = scalar_lea.vmem %s2, %s3270
        %s3272 = sand.u32 %s103, 1
        %s3273 = scalar_lea.sflag [#allocation3], %s3272
        %s3274 = sand.u32 %s103, 1
        %s3275 = scalar_lea.vmem [#allocation2], %s3274
        %s3276 = sand.u32 %s129, 1
        %s3277 = scalar_lea.sflag [#allocation5], %s3276
        %s3278 = sand.u32 %s129, 1
        %s3279 = scalar_lea.vmem [#allocation4], %s3278
        // Predicated region
        $region29: #{tpu_custom_call.1} parent=27 // pred_check
          %p3280 = pneg %p87
        $region30: #{tpu_custom_call.1} parent=27 // pred_check_branch
          %3282 = sbr.rel (%p3280) target = $region32
        $region31: #{tpu_custom_call.1} parent=27 // pred_region
          _
        $region32: #{tpu_custom_call.1} parent=27 // pred_fallthru
          _
        // Predicated region
        $region33: #{tpu_custom_call.1} parent=27 // pred_check
          %p3283 = pneg %p113
        $region34: #{tpu_custom_call.1} parent=27 // pred_check_branch
          %3285 = sbr.rel (%p3283) target = $region36
        $region35: #{tpu_custom_call.1} parent=27 // pred_region
          %s3287 = ssub.s32 16, 16
          %3288 = vsyncadd %s3273, %s3287
          %s3289 = smul.addr %s22, 16
          %s3290 = scalar_lea.hbm %s3, %s3289
          %s3292 = sshll.u32 %s3275, 4
          %s3293 = int_to_ptr.vmem [resolvable:$true] %s3292
          %3295 = dma.vmem_to_hbm [thread:$0]  %s3293, 16, %s3290, %s3273
        $region36: #{tpu_custom_call.1} parent=27 // pred_fallthru
          _
        // Predicated region
        $region37: #{tpu_custom_call.1} parent=27 // pred_check
          %p3296 = pneg %p139
        $region38: #{tpu_custom_call.1} parent=27 // pred_check_branch
          %3298 = sbr.rel (%p3296) target = $region40
        $region39: #{tpu_custom_call.1} parent=27 // pred_region
          %s3300 = ssub.s32 16, 16
          %3301 = vsyncadd %s3277, %s3300
          %s3302 = smul.addr %s22, 16
          %s3303 = scalar_lea.hbm %s4, %s3302
          %s3305 = sshll.u32 %s3279, 4
          %s3306 = int_to_ptr.vmem [resolvable:$true] %s3305
          %3308 = dma.vmem_to_hbm [thread:$0]  %s3306, 16, %s3303, %s3277
        $region40: #{tpu_custom_call.1} parent=27 // pred_fallthru
          _
      $region28: #{tpu_custom_call.1} parent=5 // pred_fallthru
        _
      %p3309 = scmp.le.s32.totalorder 2, %s17
      // Predicated region
      $region41: #{tpu_custom_call.1} parent=5 // pred_check
        %p3310 = pneg %p3309
      $region42: #{tpu_custom_call.1} parent=5 // pred_check_branch
        %3312 = sbr.rel (%p3310) target = $region44
      $region43: #{tpu_custom_call.1} parent=5 // pred_region
        %s3313 = ssub.s32 %s17, 2
        // Predicated region
        $region45: #{tpu_custom_call.1} parent=43 // pred_check
          %p3314 = pneg %p93
        $region46: #{tpu_custom_call.1} parent=43 // pred_check_branch
          %3316 = sbr.rel (%p3314) target = $region48
        $region47: #{tpu_custom_call.1} parent=43 // pred_region
          %p3317 = scmp.lt.s32.totalorder %s23, 1
          %s3318 = scalar_select %p3317, %s23, 1
          %s3319 = smul.addr %s3318, 32
          %s3320 = smul.addr %s3319, 4
          %s3321 = scalar_lea.vmem %s2, %s3320
        $region48: #{tpu_custom_call.1} parent=43 // pred_fallthru
          _
        // Predicated region
        $region49: #{tpu_custom_call.1} parent=43 // pred_check
          %p3322 = pneg %p119
        $region50: #{tpu_custom_call.1} parent=43 // pred_check_branch
          %3324 = sbr.rel (%p3322) target = $region52
        $region51: #{tpu_custom_call.1} parent=43 // pred_region
          %s3325 = sand.u32 %s104, 1
          %s3326 = scalar_lea.sflag [#allocation3], %s3325
          %s3327 = sand.u32 %s104, 1
          %s3328 = scalar_lea.vmem [#allocation2], %s3327
          %3329 = dma.done %s3326, 16
        $region52: #{tpu_custom_call.1} parent=43 // pred_fallthru
          _
        // Predicated region
        $region53: #{tpu_custom_call.1} parent=43 // pred_check
          %p3330 = pneg %p145
        $region54: #{tpu_custom_call.1} parent=43 // pred_check_branch
          %3332 = sbr.rel (%p3330) target = $region56
        $region55: #{tpu_custom_call.1} parent=43 // pred_region
          %s3333 = sand.u32 %s130, 1
          %s3334 = scalar_lea.sflag [#allocation5], %s3333
          %s3335 = sand.u32 %s130, 1
          %s3336 = scalar_lea.vmem [#allocation4], %s3335
          %3337 = dma.done %s3334, 16
        $region56: #{tpu_custom_call.1} parent=43 // pred_fallthru
          _
      $region44: #{tpu_custom_call.1} parent=5 // pred_fallthru
        _
    $region6: #{tpu_custom_call.1} parent=1 // loop_footer
      %s21 = sadd.s32 1, %s17
    $region7: #{tpu_custom_call.1} parent=1 // loop_footer_branch
      %16 = sbr.rel target = $region3
    $region8: #{tpu_custom_call.1} parent=1 // loop_exit
      _
    %3338 = vsyncpa [#allocation3], 1
    %s3339 = scalar_lea.sflag [#allocation3], 1
    %3340 = vsyncpa %s3339, 1
    %3341 = vsyncpa [#allocation5], 1
    %s3342 = scalar_lea.sflag [#allocation5], 1
    %3343 = vsyncpa %s3342, 1

</llo_original>
